<compile_context>
chip_gen: v7x
topology: tpu7x:2x2x1
jax: 0.10.0
libtpu: 0.0.40
codegen_flags: <defaults>
</compile_context>

<pallas_src>
import functools

import jax
import jax.numpy as jnp
import numpy as np
from jax.experimental import pallas as pl
from jax.experimental.pallas import tpu as pltpu


def _round_up(v, m):
    return (v + m - 1) // m * m


# ---------------------------------------------------------------------------
# Pallas kernel
# ---------------------------------------------------------------------------
def simclr_kernel(x_ref, w1_ref, b1_ref, w2_ref, b2_ref, w3_ref, b3_ref,
                  f1w_ref, f1b_ref, f2w_ref, f2b_ref, f3w_ref, f3b_ref,
                  logits_ref, *, T, lp1, lp2, lp3, lv3):
    f32, bf16 = jnp.float32, jnp.bfloat16
    N = logits_ref.shape[1]          # per-view batch size

    # One conv block = bf16 im2col (K sublane-shifted slices, lane concat)
    # -> single MXU matmul (f32 acc) -> bias + ReLU (f32) -> bf16 cast.
    def conv_relu(h, w_ref, b_ref, lout):
        Bh, _, Ci = h.shape                      # h: (2N, Lin_pad, Ci) bf16
        KCi, Co = w_ref.shape
        K = KCi // Ci
        patches = jnp.concatenate(
            [h[:, k:k + lout, :] for k in range(K)], axis=-1)    # bf16
        acc = jnp.dot(patches.reshape(Bh * lout, KCi), w_ref[...],
                      preferred_element_type=f32)
        acc = jnp.maximum(acc + b_ref[...], 0.0)                 # f32
        return acc.astype(bf16).reshape(Bh, lout, Co)

    # ---- Encoder: three conv blocks (padded lengths are multiples of 8) ----
    h = conv_relu(x_ref[...], w1_ref, b1_ref, lp1)   # (2N, lp1, 32)
    # TODO(synk): F.dropout(p=0.1, training default True) after each conv is
    #             stochastic; implemented as identity (eval-mode semantics).
    h = conv_relu(h, w2_ref, b2_ref, lp2)            # (2N, lp2, 64)
    h = conv_relu(h, w3_ref, b3_ref, lp3)            # (2N, lp3, z_dim)

    # ---- AdaptiveMaxPool1d(1): max over the VALID rows only (padded rows of
    #      the last conv are partial-window garbage and must not be seen). ----
    z = jnp.max(h[:, :lv3, :].astype(f32), axis=1)   # (2N, z_dim) f32

    # ---- Classifier MLP: Linear-ReLU-Linear-ReLU-Linear ----
    zb = z.astype(bf16)
    for i, (wr, br) in enumerate(((f1w_ref, f1b_ref),
                                  (f2w_ref, f2b_ref),
                                  (f3w_ref, f3b_ref))):
        a = jnp.dot(zb, wr[...], preferred_element_type=f32) + br[...]
        if i < 2:
            zb = jnp.maximum(a, 0.0).astype(bf16)
        else:
            zf = a                                   # final FC output, f32

    # ---- F.normalize(dim=1), eps = 1e-12 -> x * rsqrt(max(ss, eps^2)) ----
    ss = jnp.sum(zf * zf, axis=1, keepdims=True)
    zf = zf * jax.lax.rsqrt(jnp.maximum(ss, 1e-24))

    # ---- Fused similarity S = Z @ Z.T, Z = [z ; aug_z], kept in f32 so the
    #      1/T amplification does not magnify bf16 quantization. ----
    S = jax.lax.dot_general(zf, zf, (((1,), (1,)), ((), ())),
                            preferred_element_type=f32)          # (2N, 2N)

    row = jax.lax.broadcasted_iota(jnp.int32, (N, N), 0)
    col = jax.lax.broadcasted_iota(jnp.int32, (N, N), 1)
    self_mask = jnp.where(row == col, 1.0e9, 0.0).astype(f32)
    inv_T = 1.0 / T

    # Write the three N x N blocks directly (no in-kernel concatenate).
    logits_ref[0] = S[:N, N:] * inv_T                 # logits_ab
    logits_ref[1] = (S[:N, :N] - self_mask) * inv_T   # logits_aa
    logits_ref[2] = (S[N:, N:] - self_mask) * inv_T   # logits_bb


# ---------------------------------------------------------------------------
# One-time weight re-layout (hoisted out of the forward pass)
# ---------------------------------------------------------------------------
def prepare_params(params):
    """conv (Cout,Cin,K) -> (K*Cin, Cout) bf16; fc (out,in) -> (in,out) bf16;
    biases -> (1, C) f32.  Call once at parameter-load time."""
    prep = {}
    for i in range(3):
        w = params[f"conv{i + 1}_w"]                 # (Cout, Cin, K)
        Co, Ci, K = w.shape
        prep[f"conv{i + 1}_w"] = (
            jnp.transpose(w, (2, 1, 0)).reshape(K * Ci, Co).astype(jnp.bfloat16))
        prep[f"conv{i + 1}_b"] = (
            params[f"conv{i + 1}_b"].reshape(1, -1).astype(jnp.float32))
    for i in range(3):
        prep[f"fc{i + 1}_w"] = jnp.transpose(params[f"fc{i + 1}_w"]).astype(jnp.bfloat16)
        prep[f"fc{i + 1}_b"] = params[f"fc{i + 1}_b"].reshape(1, -1).astype(jnp.float32)
    return prep


# ---------------------------------------------------------------------------
# Wrapper (layout glue + pallas_call)
# ---------------------------------------------------------------------------
@functools.partial(jax.jit, static_argnames=("T",))
def simclr_forward(feature, aug_feature, prep, T=0.1):
    """feature / aug_feature: (N, C_in, L) float32 (PyTorch NCL layout)."""
    N, Cin, L = feature.shape
    B = 2 * N

    c1 = prep["conv1_b"].shape[-1]
    c2 = prep["conv2_b"].shape[-1]
    c3 = prep["conv3_b"].shape[-1]
    K1 = prep["conv1_w"].shape[0] // Cin
    K2 = prep["conv2_w"].shape[0] // c1
    K3 = prep["conv3_w"].shape[0] // c2

    # Valid conv output lengths and 8-aligned padded lengths (back-to-front so
    # every layer's padded input is long enough for its padded output windows).
    lv1 = L - K1 + 1
    lv2 = lv1 - K2 + 1
    lv3 = lv2 - K3 + 1
    assert lv3 >= 1, "input length too short for the three valid convs"
    lp3 = _round_up(lv3, 8)
    lp2 = _round_up(max(_round_up(lv2, 8), lp3 + K3 - 1), 8)
    lp1 = _round_up(max(_round_up(lv1, 8), lp2 + K2 - 1), 8)
    lp_in = _round_up(lp1 + K1 - 1, 8)

    # Stack the two views -> single encoder/MLP pass; NCL -> NLC; zero-pad the
    # length to lp_in; bf16 (matmul operand dtype).  No im2col / gather here —
    # patch matrices are built in-kernel, so this is the only HBM traffic.
    x = jnp.concatenate([feature, aug_feature], axis=0)          # (2N, Cin, L)
    x = jnp.transpose(x, (0, 2, 1))                              # (2N, L, Cin)
    x = jnp.pad(x, ((0, 0), (0, lp_in - L), (0, 0)))
    x = x.astype(jnp.bfloat16)

    inputs = [x,
              prep["conv1_w"], prep["conv1_b"],
              prep["conv2_w"], prep["conv2_b"],
              prep["conv3_w"], prep["conv3_b"],
              prep["fc1_w"], prep["fc1_b"],
              prep["fc2_w"], prep["fc2_b"],
              prep["fc3_w"], prep["fc3_b"]]
    vmem = pl.BlockSpec(memory_space=pltpu.MemorySpace.VMEM)

    # Advisory cost estimate (helps XLA schedule the surrounding glue).
    zdim, h1 = prep["fc1_w"].shape
    h2 = prep["fc2_w"].shape[1]
    od = prep["fc3_w"].shape[1]
    flops = 2 * B * (lp1 * K1 * Cin * c1 + lp2 * K2 * c1 * c2 + lp3 * K3 * c2 * c3
                     + zdim * h1 + h1 * h2 + h2 * od) + 2 * B * B * od
    in_bytes = sum(int(np.prod(a.shape)) * jnp.dtype(a.dtype).itemsize
                   for a in inputs)
    cost = pl.CostEstimate(flops=int(flops), transcendentals=int(B),
                           bytes_accessed=int(in_bytes + 3 * N * N * 4))

    blocks = pl.pallas_call(
        functools.partial(simclr_kernel, T=T, lp1=lp1, lp2=lp2, lp3=lp3, lv3=lv3),
        out_shape=jax.ShapeDtypeStruct((3, N, N), jnp.float32),
        in_specs=[vmem] * len(inputs),
        out_specs=vmem,
        compiler_params=pltpu.CompilerParams(vmem_limit_bytes=32 * 1024 * 1024),
        cost_estimate=cost,
    )(*inputs)

    # (3, N, N) blocks [ab, aa, bb] -> (N, 3N) == concat([ab, aa, bb], axis=1)
    logits = jnp.transpose(blocks, (1, 0, 2)).reshape(N, 3 * N)
    labels = jnp.arange(N, dtype=jnp.int32)
    return logits, labels


# ---------------------------------------------------------------------------
# Reference 1: pure-JAX with the SAME numerics as the kernel (bf16 matmul
# operands, f32 accumulation, f32 similarity) — tight correctness check.
# ---------------------------------------------------------------------------
def simclr_reference(feature, aug_feature, prep, T=0.1):
    bf16, f32 = jnp.bfloat16, jnp.float32
    x = jnp.concatenate([feature, aug_feature], axis=0)
    h = jnp.transpose(x, (0, 2, 1)).astype(bf16)
    for i in range(3):
        w = prep[f"conv{i + 1}_w"]
        b = prep[f"conv{i + 1}_b"]
        Bh, Lin, Ci = h.shape
        K = w.shape[0] // Ci
        Lout = Lin - K + 1
        patches = jnp.concatenate([h[:, k:k + Lout, :] for k in range(K)], axis=-1)
        acc = jnp.dot(patches.reshape(Bh * Lout, K * Ci), w,
                      preferred_element_type=f32)
        h = jnp.maximum(acc + b, 0.0).astype(bf16).reshape(Bh, Lout, -1)
    z = jnp.max(h.astype(f32), axis=1)
    zb = z.astype(bf16)
    for i in range(3):
        a = jnp.dot(zb, prep[f"fc{i + 1}_w"],
                    preferred_element_type=f32) + prep[f"fc{i + 1}_b"]
        if i < 2:
            zb = jnp.maximum(a, 0.0).astype(bf16)
        else:
            zf = a
    ss = jnp.sum(zf * zf, axis=1, keepdims=True)
    zf = zf * jax.lax.rsqrt(jnp.maximum(ss, 1e-24))

    N = feature.shape[0]
    S = jnp.dot(zf, zf.T, preferred_element_type=f32)
    mask = jnp.eye(N, dtype=f32) * 1.0e9
    ab = S[:N, N:]
    aa = S[:N, :N] - mask
    bb = S[N:, N:] - mask
    return jnp.concatenate([ab, aa, bb], axis=1) / T


# ---------------------------------------------------------------------------
# Reference 2: pure f32 (faithful to the PyTorch model) — loose tolerance.
# ---------------------------------------------------------------------------
def simclr_reference_f32(feature, aug_feature, params, T=0.1):
    def conv_relu(h, w, b):                     # h (B,L,Ci) f32; w (Co,Ci,K)
        Co, Ci, K = w.shape
        L = h.shape[1]
        Lout = L - K + 1
        wm = jnp.transpose(w, (2, 1, 0)).reshape(K * Ci, Co)
        patches = jnp.concatenate([h[:, k:k + Lout, :] for k in range(K)], axis=-1)
        out = patches.reshape(-1, K * Ci) @ wm + b
        return jnp.maximum(out, 0.0).reshape(h.shape[0], Lout, Co)

    x = jnp.concatenate([feature, aug_feature], axis=0)
    h = jnp.transpose(x, (0, 2, 1)).astype(jnp.float32)
    for i in range(3):
        h = conv_relu(h, params[f"conv{i + 1}_w"], params[f"conv{i + 1}_b"])
    z = jnp.max(h, axis=1)
    for i in range(3):
        z = z @ params[f"fc{i + 1}_w"].T + params[f"fc{i + 1}_b"]
        if i < 2:
            z = jnp.maximum(z, 0.0)
    nrm = jnp.sqrt(jnp.sum(z * z, axis=1, keepdims=True))
    z = z / jnp.maximum(nrm, 1e-12)
    N = feature.shape[0]
    za, zb = z[:N], z[N:]
    mask = jnp.eye(N, dtype=jnp.float32) * 1.0e9
    return jnp.concatenate(
        [za @ zb.T, za @ za.T - mask, zb @ zb.T - mask], axis=1) / T


# ---------------------------------------------------------------------------
# Deterministic parameter init (shapes from SimCLRNet.__init__)
# ---------------------------------------------------------------------------
def init_params(key, input_channels=3, z_dim=96, out_dim=50):
    in_dims = [input_channels, 32, 64]
    out_dims = [32, 64, z_dim]
    kernel_sizes = [24, 16, 8]
    params = {}
    keys = jax.random.split(key, 12)
    ki = 0
    for i in range(3):
        fan_in = in_dims[i] * kernel_sizes[i]
        std = np.sqrt(2.0 / fan_in)                    # kaiming_normal_
        params[f"conv{i + 1}_w"] = std * jax.random.normal(
            keys[ki], (out_dims[i], in_dims[i], kernel_sizes[i]), jnp.float32)
        params[f"conv{i + 1}_b"] = jnp.zeros((out_dims[i],), jnp.float32)
        ki += 1
    fc_dims = [(z_dim, 256), (256, 128), (128, out_dim)]
    for i, (din, dout) in enumerate(fc_dims):
        bound = 1.0 / np.sqrt(din)                     # PyTorch Linear default
        params[f"fc{i + 1}_w"] = jax.random.uniform(
            keys[ki], (dout, din), jnp.float32, -bound, bound)
        ki += 1
        params[f"fc{i + 1}_b"] = jax.random.uniform(
            keys[ki], (dout,), jnp.float32, -bound, bound)
        ki += 1
    return params


if __name__ == "__main__":
    key = jax.random.PRNGKey(0)
    k_param, k_x, k_xa = jax.random.split(key, 3)

    N, C_IN, L = 2, 3, 64          # L >= 46 required by the three valid convs
    params = init_params(k_param, input_channels=C_IN, z_dim=96, out_dim=50)
    prep = prepare_params(params)  # one-time weight re-layout

    feature = jax.random.normal(k_x, (N, C_IN, L), jnp.float32)
    aug_feature = jax.random.normal(k_xa, (N, C_IN, L), jnp.float32)

    logits, labels = simclr_forward(feature, aug_feature, prep, T=0.1)
    logits = jax.block_until_ready(logits)
    labels = jax.block_until_ready(labels)

    ref = jax.block_until_ready(simclr_reference(feature, aug_feature, prep, T=0.1))
    ref32 = jax.block_until_ready(
        simclr_reference_f32(feature, aug_feature, params, T=0.1))

    assert logits.shape == (N, 3 * N) and labels.shape == (N,)
    assert np.allclose(np.asarray(logits), np.asarray(ref), rtol=1e-3, atol=1e-2), \
        "Pallas kernel mismatch vs bf16-mirrored JAX reference"
    assert np.allclose(np.asarray(logits), np.asarray(ref32), rtol=5e-2, atol=5e-1), \
        "Pallas kernel mismatch vs pure-f32 JAX reference"

    print("KERNEL_OK")
</pallas_src>

<mosaic_0001>
module attributes {stable_mosaic.version = 11 : i64} {
  func.func @simclr_kernel(%arg0: memref<4x72x3xbf16, #tpu.memory_space<vmem>>, %arg1: memref<72x32xbf16, #tpu.memory_space<vmem>>, %arg2: memref<1x32xf32, #tpu.memory_space<vmem>>, %arg3: memref<512x64xbf16, #tpu.memory_space<vmem>>, %arg4: memref<1x64xf32, #tpu.memory_space<vmem>>, %arg5: memref<512x96xbf16, #tpu.memory_space<vmem>>, %arg6: memref<1x96xf32, #tpu.memory_space<vmem>>, %arg7: memref<96x256xbf16, #tpu.memory_space<vmem>>, %arg8: memref<1x256xf32, #tpu.memory_space<vmem>>, %arg9: memref<256x128xbf16, #tpu.memory_space<vmem>>, %arg10: memref<1x128xf32, #tpu.memory_space<vmem>>, %arg11: memref<128x50xbf16, #tpu.memory_space<vmem>>, %arg12: memref<1x50xf32, #tpu.memory_space<vmem>>, %arg13: memref<3x2x2xf32, #tpu.memory_space<vmem>>) attributes {dimension_semantics = [], scalar_prefetch = 0 : i64, scratch_operands = 0 : i64, tpu.core_type = #tpu.core_type<tc>} {
    %c0 = arith.constant 0 : index
    %c0_0 = arith.constant 0 : index
    %c0_1 = arith.constant 0 : index
    %0 = vector.load %arg0[%c0, %c0_0, %c0_1] : memref<4x72x3xbf16, #tpu.memory_space<vmem>>, vector<4x72x3xbf16>
    %1 = vector.extract_strided_slice %0 {offsets = [0, 0, 0], sizes = [4, 48, 3], strides = [1, 1, 1]} : vector<4x72x3xbf16> to vector<4x48x3xbf16>
    %2 = vector.extract_strided_slice %0 {offsets = [0, 1, 0], sizes = [4, 48, 3], strides = [1, 1, 1]} : vector<4x72x3xbf16> to vector<4x48x3xbf16>
    %3 = vector.extract_strided_slice %0 {offsets = [0, 2, 0], sizes = [4, 48, 3], strides = [1, 1, 1]} : vector<4x72x3xbf16> to vector<4x48x3xbf16>
    %4 = vector.extract_strided_slice %0 {offsets = [0, 3, 0], sizes = [4, 48, 3], strides = [1, 1, 1]} : vector<4x72x3xbf16> to vector<4x48x3xbf16>
    %5 = vector.extract_strided_slice %0 {offsets = [0, 4, 0], sizes = [4, 48, 3], strides = [1, 1, 1]} : vector<4x72x3xbf16> to vector<4x48x3xbf16>
    %6 = vector.extract_strided_slice %0 {offsets = [0, 5, 0], sizes = [4, 48, 3], strides = [1, 1, 1]} : vector<4x72x3xbf16> to vector<4x48x3xbf16>
    %7 = vector.extract_strided_slice %0 {offsets = [0, 6, 0], sizes = [4, 48, 3], strides = [1, 1, 1]} : vector<4x72x3xbf16> to vector<4x48x3xbf16>
    %8 = vector.extract_strided_slice %0 {offsets = [0, 7, 0], sizes = [4, 48, 3], strides = [1, 1, 1]} : vector<4x72x3xbf16> to vector<4x48x3xbf16>
    %9 = vector.extract_strided_slice %0 {offsets = [0, 8, 0], sizes = [4, 48, 3], strides = [1, 1, 1]} : vector<4x72x3xbf16> to vector<4x48x3xbf16>
    %10 = vector.extract_strided_slice %0 {offsets = [0, 9, 0], sizes = [4, 48, 3], strides = [1, 1, 1]} : vector<4x72x3xbf16> to vector<4x48x3xbf16>
    %11 = vector.extract_strided_slice %0 {offsets = [0, 10, 0], sizes = [4, 48, 3], strides = [1, 1, 1]} : vector<4x72x3xbf16> to vector<4x48x3xbf16>
    %12 = vector.extract_strided_slice %0 {offsets = [0, 11, 0], sizes = [4, 48, 3], strides = [1, 1, 1]} : vector<4x72x3xbf16> to vector<4x48x3xbf16>
    %13 = vector.extract_strided_slice %0 {offsets = [0, 12, 0], sizes = [4, 48, 3], strides = [1, 1, 1]} : vector<4x72x3xbf16> to vector<4x48x3xbf16>
    %14 = vector.extract_strided_slice %0 {offsets = [0, 13, 0], sizes = [4, 48, 3], strides = [1, 1, 1]} : vector<4x72x3xbf16> to vector<4x48x3xbf16>
    %15 = vector.extract_strided_slice %0 {offsets = [0, 14, 0], sizes = [4, 48, 3], strides = [1, 1, 1]} : vector<4x72x3xbf16> to vector<4x48x3xbf16>
    %16 = vector.extract_strided_slice %0 {offsets = [0, 15, 0], sizes = [4, 48, 3], strides = [1, 1, 1]} : vector<4x72x3xbf16> to vector<4x48x3xbf16>
    %17 = vector.extract_strided_slice %0 {offsets = [0, 16, 0], sizes = [4, 48, 3], strides = [1, 1, 1]} : vector<4x72x3xbf16> to vector<4x48x3xbf16>
    %18 = vector.extract_strided_slice %0 {offsets = [0, 17, 0], sizes = [4, 48, 3], strides = [1, 1, 1]} : vector<4x72x3xbf16> to vector<4x48x3xbf16>
    %19 = vector.extract_strided_slice %0 {offsets = [0, 18, 0], sizes = [4, 48, 3], strides = [1, 1, 1]} : vector<4x72x3xbf16> to vector<4x48x3xbf16>
    %20 = vector.extract_strided_slice %0 {offsets = [0, 19, 0], sizes = [4, 48, 3], strides = [1, 1, 1]} : vector<4x72x3xbf16> to vector<4x48x3xbf16>
    %21 = vector.extract_strided_slice %0 {offsets = [0, 20, 0], sizes = [4, 48, 3], strides = [1, 1, 1]} : vector<4x72x3xbf16> to vector<4x48x3xbf16>
    %22 = vector.extract_strided_slice %0 {offsets = [0, 21, 0], sizes = [4, 48, 3], strides = [1, 1, 1]} : vector<4x72x3xbf16> to vector<4x48x3xbf16>
    %23 = vector.extract_strided_slice %0 {offsets = [0, 22, 0], sizes = [4, 48, 3], strides = [1, 1, 1]} : vector<4x72x3xbf16> to vector<4x48x3xbf16>
    %24 = vector.extract_strided_slice %0 {offsets = [0, 23, 0], sizes = [4, 48, 3], strides = [1, 1, 1]} : vector<4x72x3xbf16> to vector<4x48x3xbf16>
    %25 = tpu.concatenate %1, %2, %3, %4, %5, %6, %7, %8, %9, %10, %11, %12, %13, %14, %15, %16 in 2 : vector<4x48x3xbf16>, vector<4x48x3xbf16>, vector<4x48x3xbf16>, vector<4x48x3xbf16>, vector<4x48x3xbf16>, vector<4x48x3xbf16>, vector<4x48x3xbf16>, vector<4x48x3xbf16>, vector<4x48x3xbf16>, vector<4x48x3xbf16>, vector<4x48x3xbf16>, vector<4x48x3xbf16>, vector<4x48x3xbf16>, vector<4x48x3xbf16>, vector<4x48x3xbf16>, vector<4x48x3xbf16> -> vector<4x48x48xbf16>
    %26 = tpu.concatenate %17, %18, %19, %20, %21, %22, %23, %24 in 2 : vector<4x48x3xbf16>, vector<4x48x3xbf16>, vector<4x48x3xbf16>, vector<4x48x3xbf16>, vector<4x48x3xbf16>, vector<4x48x3xbf16>, vector<4x48x3xbf16>, vector<4x48x3xbf16> -> vector<4x48x24xbf16>
    %27 = tpu.concatenate %25, %26 in 2 : vector<4x48x48xbf16>, vector<4x48x24xbf16> -> vector<4x48x72xbf16>
    %28 = vector.shape_cast %27 : vector<4x48x72xbf16> to vector<192x72xbf16>
    %c0_2 = arith.constant 0 : index
    %c0_3 = arith.constant 0 : index
    %29 = vector.load %arg1[%c0_2, %c0_3] : memref<72x32xbf16, #tpu.memory_space<vmem>>, vector<72x32xbf16>
    %cst = arith.constant dense<0.000000e+00> : vector<192x32xf32>
    %30 = tpu.matmul %28, %29, %cst {dimension_numbers = #tpu.dot_dimension_numbers<[1], [0], [0], [1], [0, 0, 1, 1], [], []>} : vector<192x72xbf16>, vector<72x32xbf16>, vector<192x32xf32> -> vector<192x32xf32>
    %c0_4 = arith.constant 0 : index
    %c0_5 = arith.constant 0 : index
    %31 = vector.load %arg2[%c0_4, %c0_5] : memref<1x32xf32, #tpu.memory_space<vmem>>, vector<1x32xf32>
    %32 = vector.broadcast %31 : vector<1x32xf32> to vector<192x32xf32>
    %33 = arith.addf %30, %32 : vector<192x32xf32>
    %cst_6 = arith.constant 0.000000e+00 : f32
    %34 = vector.broadcast %cst_6 : f32 to vector<192x32xf32>
    %35 = arith.maximumf %33, %34 : vector<192x32xf32>
    %36 = arith.truncf %35 : vector<192x32xf32> to vector<192x32xbf16>
    %37 = vector.shape_cast %36 : vector<192x32xbf16> to vector<4x48x32xbf16>
    %38 = vector.extract_strided_slice %37 {offsets = [0, 0, 0], sizes = [4, 32, 32], strides = [1, 1, 1]} : vector<4x48x32xbf16> to vector<4x32x32xbf16>
    %39 = vector.extract_strided_slice %37 {offsets = [0, 1, 0], sizes = [4, 32, 32], strides = [1, 1, 1]} : vector<4x48x32xbf16> to vector<4x32x32xbf16>
    %40 = vector.extract_strided_slice %37 {offsets = [0, 2, 0], sizes = [4, 32, 32], strides = [1, 1, 1]} : vector<4x48x32xbf16> to vector<4x32x32xbf16>
    %41 = vector.extract_strided_slice %37 {offsets = [0, 3, 0], sizes = [4, 32, 32], strides = [1, 1, 1]} : vector<4x48x32xbf16> to vector<4x32x32xbf16>
    %42 = vector.extract_strided_slice %37 {offsets = [0, 4, 0], sizes = [4, 32, 32], strides = [1, 1, 1]} : vector<4x48x32xbf16> to vector<4x32x32xbf16>
    %43 = vector.extract_strided_slice %37 {offsets = [0, 5, 0], sizes = [4, 32, 32], strides = [1, 1, 1]} : vector<4x48x32xbf16> to vector<4x32x32xbf16>
    %44 = vector.extract_strided_slice %37 {offsets = [0, 6, 0], sizes = [4, 32, 32], strides = [1, 1, 1]} : vector<4x48x32xbf16> to vector<4x32x32xbf16>
    %45 = vector.extract_strided_slice %37 {offsets = [0, 7, 0], sizes = [4, 32, 32], strides = [1, 1, 1]} : vector<4x48x32xbf16> to vector<4x32x32xbf16>
    %46 = vector.extract_strided_slice %37 {offsets = [0, 8, 0], sizes = [4, 32, 32], strides = [1, 1, 1]} : vector<4x48x32xbf16> to vector<4x32x32xbf16>
    %47 = vector.extract_strided_slice %37 {offsets = [0, 9, 0], sizes = [4, 32, 32], strides = [1, 1, 1]} : vector<4x48x32xbf16> to vector<4x32x32xbf16>
    %48 = vector.extract_strided_slice %37 {offsets = [0, 10, 0], sizes = [4, 32, 32], strides = [1, 1, 1]} : vector<4x48x32xbf16> to vector<4x32x32xbf16>
    %49 = vector.extract_strided_slice %37 {offsets = [0, 11, 0], sizes = [4, 32, 32], strides = [1, 1, 1]} : vector<4x48x32xbf16> to vector<4x32x32xbf16>
    %50 = vector.extract_strided_slice %37 {offsets = [0, 12, 0], sizes = [4, 32, 32], strides = [1, 1, 1]} : vector<4x48x32xbf16> to vector<4x32x32xbf16>
    %51 = vector.extract_strided_slice %37 {offsets = [0, 13, 0], sizes = [4, 32, 32], strides = [1, 1, 1]} : vector<4x48x32xbf16> to vector<4x32x32xbf16>
    %52 = vector.extract_strided_slice %37 {offsets = [0, 14, 0], sizes = [4, 32, 32], strides = [1, 1, 1]} : vector<4x48x32xbf16> to vector<4x32x32xbf16>
    %53 = vector.extract_strided_slice %37 {offsets = [0, 15, 0], sizes = [4, 32, 32], strides = [1, 1, 1]} : vector<4x48x32xbf16> to vector<4x32x32xbf16>
    %54 = tpu.concatenate %38, %39, %40, %41, %42, %43, %44, %45, %46, %47, %48, %49, %50, %51, %52, %53 in 2 : vector<4x32x32xbf16>, vector<4x32x32xbf16>, vector<4x32x32xbf16>, vector<4x32x32xbf16>, vector<4x32x32xbf16>, vector<4x32x32xbf16>, vector<4x32x32xbf16>, vector<4x32x32xbf16>, vector<4x32x32xbf16>, vector<4x32x32xbf16>, vector<4x32x32xbf16>, vector<4x32x32xbf16>, vector<4x32x32xbf16>, vector<4x32x32xbf16>, vector<4x32x32xbf16>, vector<4x32x32xbf16> -> vector<4x32x512xbf16>
    %55 = vector.shape_cast %54 : vector<4x32x512xbf16> to vector<128x512xbf16>
    %c0_7 = arith.constant 0 : index
    %c0_8 = arith.constant 0 : index
    %56 = vector.load %arg3[%c0_7, %c0_8] : memref<512x64xbf16, #tpu.memory_space<vmem>>, vector<512x64xbf16>
    %cst_9 = arith.constant dense<0.000000e+00> : vector<128x64xf32>
    %57 = tpu.matmul %55, %56, %cst_9 {dimension_numbers = #tpu.dot_dimension_numbers<[1], [0], [0], [1], [0, 0, 1, 1], [], []>} : vector<128x512xbf16>, vector<512x64xbf16>, vector<128x64xf32> -> vector<128x64xf32>
    %c0_10 = arith.constant 0 : index
    %c0_11 = arith.constant 0 : index
    %58 = vector.load %arg4[%c0_10, %c0_11] : memref<1x64xf32, #tpu.memory_space<vmem>>, vector<1x64xf32>
    %59 = vector.broadcast %58 : vector<1x64xf32> to vector<128x64xf32>
    %60 = arith.addf %57, %59 : vector<128x64xf32>
    %cst_12 = arith.constant 0.000000e+00 : f32
    %61 = vector.broadcast %cst_12 : f32 to vector<128x64xf32>
    %62 = arith.maximumf %60, %61 : vector<128x64xf32>
    %63 = arith.truncf %62 : vector<128x64xf32> to vector<128x64xbf16>
    %64 = vector.shape_cast %63 : vector<128x64xbf16> to vector<4x32x64xbf16>
    %65 = vector.extract_strided_slice %64 {offsets = [0, 0, 0], sizes = [4, 24, 64], strides = [1, 1, 1]} : vector<4x32x64xbf16> to vector<4x24x64xbf16>
    %66 = vector.extract_strided_slice %64 {offsets = [0, 1, 0], sizes = [4, 24, 64], strides = [1, 1, 1]} : vector<4x32x64xbf16> to vector<4x24x64xbf16>
    %67 = vector.extract_strided_slice %64 {offsets = [0, 2, 0], sizes = [4, 24, 64], strides = [1, 1, 1]} : vector<4x32x64xbf16> to vector<4x24x64xbf16>
    %68 = vector.extract_strided_slice %64 {offsets = [0, 3, 0], sizes = [4, 24, 64], strides = [1, 1, 1]} : vector<4x32x64xbf16> to vector<4x24x64xbf16>
    %69 = vector.extract_strided_slice %64 {offsets = [0, 4, 0], sizes = [4, 24, 64], strides = [1, 1, 1]} : vector<4x32x64xbf16> to vector<4x24x64xbf16>
    %70 = vector.extract_strided_slice %64 {offsets = [0, 5, 0], sizes = [4, 24, 64], strides = [1, 1, 1]} : vector<4x32x64xbf16> to vector<4x24x64xbf16>
    %71 = vector.extract_strided_slice %64 {offsets = [0, 6, 0], sizes = [4, 24, 64], strides = [1, 1, 1]} : vector<4x32x64xbf16> to vector<4x24x64xbf16>
    %72 = vector.extract_strided_slice %64 {offsets = [0, 7, 0], sizes = [4, 24, 64], strides = [1, 1, 1]} : vector<4x32x64xbf16> to vector<4x24x64xbf16>
    %73 = tpu.concatenate %65, %66, %67, %68, %69, %70, %71, %72 in 2 : vector<4x24x64xbf16>, vector<4x24x64xbf16>, vector<4x24x64xbf16>, vector<4x24x64xbf16>, vector<4x24x64xbf16>, vector<4x24x64xbf16>, vector<4x24x64xbf16>, vector<4x24x64xbf16> -> vector<4x24x512xbf16>
    %74 = vector.shape_cast %73 : vector<4x24x512xbf16> to vector<96x512xbf16>
    %c0_13 = arith.constant 0 : index
    %c0_14 = arith.constant 0 : index
    %75 = vector.load %arg5[%c0_13, %c0_14] : memref<512x96xbf16, #tpu.memory_space<vmem>>, vector<512x96xbf16>
    %cst_15 = arith.constant dense<0.000000e+00> : vector<96x96xf32>
    %76 = tpu.matmul %74, %75, %cst_15 {dimension_numbers = #tpu.dot_dimension_numbers<[1], [0], [0], [1], [0, 0, 1, 1], [], []>} : vector<96x512xbf16>, vector<512x96xbf16>, vector<96x96xf32> -> vector<96x96xf32>
    %c0_16 = arith.constant 0 : index
    %c0_17 = arith.constant 0 : index
    %77 = vector.load %arg6[%c0_16, %c0_17] : memref<1x96xf32, #tpu.memory_space<vmem>>, vector<1x96xf32>
    %78 = vector.broadcast %77 : vector<1x96xf32> to vector<96x96xf32>
    %79 = arith.addf %76, %78 : vector<96x96xf32>
    %cst_18 = arith.constant 0.000000e+00 : f32
    %80 = vector.broadcast %cst_18 : f32 to vector<96x96xf32>
    %81 = arith.maximumf %79, %80 : vector<96x96xf32>
    %82 = arith.truncf %81 : vector<96x96xf32> to vector<96x96xbf16>
    %83 = vector.shape_cast %82 : vector<96x96xbf16> to vector<4x24x96xbf16>
    %84 = vector.extract_strided_slice %83 {offsets = [0, 0, 0], sizes = [4, 19, 96], strides = [1, 1, 1]} : vector<4x24x96xbf16> to vector<4x19x96xbf16>
    %85 = arith.extf %84 : vector<4x19x96xbf16> to vector<4x19x96xf32>
    %cst_19 = arith.constant dense<0xFF800000> : vector<4x96xf32>
    %86 = vector.multi_reduction <maximumf>, %85, %cst_19 [1] : vector<4x19x96xf32> to vector<4x96xf32>
    %87 = arith.truncf %86 : vector<4x96xf32> to vector<4x96xbf16>
    %c0_20 = arith.constant 0 : index
    %c0_21 = arith.constant 0 : index
    %88 = vector.load %arg7[%c0_20, %c0_21] : memref<96x256xbf16, #tpu.memory_space<vmem>>, vector<96x256xbf16>
    %cst_22 = arith.constant dense<0.000000e+00> : vector<4x256xf32>
    %89 = tpu.matmul %87, %88, %cst_22 {dimension_numbers = #tpu.dot_dimension_numbers<[1], [0], [0], [1], [0, 0, 1, 1], [], []>} : vector<4x96xbf16>, vector<96x256xbf16>, vector<4x256xf32> -> vector<4x256xf32>
    %c0_23 = arith.constant 0 : index
    %c0_24 = arith.constant 0 : index
    %90 = vector.load %arg8[%c0_23, %c0_24] : memref<1x256xf32, #tpu.memory_space<vmem>>, vector<1x256xf32>
    %91 = vector.broadcast %90 : vector<1x256xf32> to vector<4x256xf32>
    %92 = arith.addf %89, %91 : vector<4x256xf32>
    %cst_25 = arith.constant 0.000000e+00 : f32
    %93 = vector.broadcast %cst_25 : f32 to vector<4x256xf32>
    %94 = arith.maximumf %92, %93 : vector<4x256xf32>
    %95 = arith.truncf %94 : vector<4x256xf32> to vector<4x256xbf16>
    %c0_26 = arith.constant 0 : index
    %c0_27 = arith.constant 0 : index
    %96 = vector.load %arg9[%c0_26, %c0_27] : memref<256x128xbf16, #tpu.memory_space<vmem>>, vector<256x128xbf16>
    %cst_28 = arith.constant dense<0.000000e+00> : vector<4x128xf32>
    %97 = tpu.matmul %95, %96, %cst_28 {dimension_numbers = #tpu.dot_dimension_numbers<[1], [0], [0], [1], [0, 0, 1, 1], [], []>} : vector<4x256xbf16>, vector<256x128xbf16>, vector<4x128xf32> -> vector<4x128xf32>
    %c0_29 = arith.constant 0 : index
    %c0_30 = arith.constant 0 : index
    %98 = vector.load %arg10[%c0_29, %c0_30] : memref<1x128xf32, #tpu.memory_space<vmem>>, vector<1x128xf32>
    %99 = vector.broadcast %98 : vector<1x128xf32> to vector<4x128xf32>
    %100 = arith.addf %97, %99 : vector<4x128xf32>
    %cst_31 = arith.constant 0.000000e+00 : f32
    %101 = vector.broadcast %cst_31 : f32 to vector<4x128xf32>
    %102 = arith.maximumf %100, %101 : vector<4x128xf32>
    %103 = arith.truncf %102 : vector<4x128xf32> to vector<4x128xbf16>
    %c0_32 = arith.constant 0 : index
    %c0_33 = arith.constant 0 : index
    %104 = vector.load %arg11[%c0_32, %c0_33] : memref<128x50xbf16, #tpu.memory_space<vmem>>, vector<128x50xbf16>
    %cst_34 = arith.constant dense<0.000000e+00> : vector<4x50xf32>
    %105 = tpu.matmul %103, %104, %cst_34 {dimension_numbers = #tpu.dot_dimension_numbers<[1], [0], [0], [1], [0, 0, 1, 1], [], []>} : vector<4x128xbf16>, vector<128x50xbf16>, vector<4x50xf32> -> vector<4x50xf32>
    %c0_35 = arith.constant 0 : index
    %c0_36 = arith.constant 0 : index
    %106 = vector.load %arg12[%c0_35, %c0_36] : memref<1x50xf32, #tpu.memory_space<vmem>>, vector<1x50xf32>
    %107 = vector.broadcast %106 : vector<1x50xf32> to vector<4x50xf32>
    %108 = arith.addf %105, %107 : vector<4x50xf32>
    %109 = arith.mulf %108, %108 : vector<4x50xf32>
    %cst_37 = arith.constant dense<0.000000e+00> : vector<4xf32>
    %110 = vector.multi_reduction <add>, %109, %cst_37 [1] : vector<4x50xf32> to vector<4xf32>
    %111 = vector.shape_cast %110 : vector<4xf32> to vector<4x1xf32>
    %cst_38 = arith.constant 1.000000e-24 : f32
    %112 = vector.broadcast %cst_38 : f32 to vector<4x1xf32>
    %113 = arith.maximumf %111, %112 : vector<4x1xf32>
    %114 = math.rsqrt %113 : vector<4x1xf32>
    %115 = vector.broadcast %114 : vector<4x1xf32> to vector<4x50xf32>
    %116 = arith.mulf %108, %115 : vector<4x50xf32>
    %cst_39 = arith.constant dense<0.000000e+00> : vector<4x4xf32>
    %117 = tpu.matmul %116, %116, %cst_39 {dimension_numbers = #tpu.dot_dimension_numbers<[1], [1], [0], [0], [0, 0, 1, 0], [], []>} : vector<4x50xf32>, vector<4x50xf32>, vector<4x4xf32> -> vector<4x4xf32>
    %118 = tpu.iota {dimensions = array<i32: 0>} : vector<2x2xi32>
    %119 = tpu.iota {dimensions = array<i32: 1>} : vector<2x2xi32>
    %120 = arith.cmpi eq, %118, %119 : vector<2x2xi32>
    %cst_40 = arith.constant 1.000000e+09 : f32
    %cst_41 = arith.constant 0.000000e+00 : f32
    %121 = vector.broadcast %cst_40 : f32 to vector<2x2xf32>
    %122 = vector.broadcast %cst_41 : f32 to vector<2x2xf32>
    %123 = arith.select %120, %121, %122 : vector<2x2xi1>, vector<2x2xf32>
    %124 = vector.extract_strided_slice %117 {offsets = [0, 2], sizes = [2, 2], strides = [1, 1]} : vector<4x4xf32> to vector<2x2xf32>
    %cst_42 = arith.constant 1.000000e+01 : f32
    %125 = vector.broadcast %cst_42 : f32 to vector<2x2xf32>
    %126 = arith.mulf %124, %125 : vector<2x2xf32>
    %c0_43 = arith.constant 0 : index
    %c0_44 = arith.constant 0 : index
    %c0_45 = arith.constant 0 : index
    %127 = vector.load %arg13[%c0_43, %c0_44, %c0_45] : memref<3x2x2xf32, #tpu.memory_space<vmem>>, vector<1x2x2xf32>
    %128 = vector.shape_cast %127 : vector<1x2x2xf32> to vector<2x2xf32>
    %129 = vector.shape_cast %126 : vector<2x2xf32> to vector<1x2x2xf32>
    tpu.vector_store %arg13[%c0_43, %c0_44, %c0_45], %129 {strides = array<i32>} : memref<3x2x2xf32, #tpu.memory_space<vmem>>, vector<1x2x2xf32>,
    %130 = vector.extract_strided_slice %117 {offsets = [0, 0], sizes = [2, 2], strides = [1, 1]} : vector<4x4xf32> to vector<2x2xf32>
    %131 = arith.subf %130, %123 : vector<2x2xf32>
    %cst_46 = arith.constant 1.000000e+01 : f32
    %132 = vector.broadcast %cst_46 : f32 to vector<2x2xf32>
    %133 = arith.mulf %131, %132 : vector<2x2xf32>
    %c1 = arith.constant 1 : index
    %c0_47 = arith.constant 0 : index
    %c0_48 = arith.constant 0 : index
    %134 = vector.load %arg13[%c1, %c0_47, %c0_48] : memref<3x2x2xf32, #tpu.memory_space<vmem>>, vector<1x2x2xf32>
    %135 = vector.shape_cast %134 : vector<1x2x2xf32> to vector<2x2xf32>
    %136 = vector.shape_cast %133 : vector<2x2xf32> to vector<1x2x2xf32>
    tpu.vector_store %arg13[%c1, %c0_47, %c0_48], %136 {strides = array<i32>} : memref<3x2x2xf32, #tpu.memory_space<vmem>>, vector<1x2x2xf32>,
    %137 = vector.extract_strided_slice %117 {offsets = [2, 2], sizes = [2, 2], strides = [1, 1]} : vector<4x4xf32> to vector<2x2xf32>
    %138 = arith.subf %137, %123 : vector<2x2xf32>
    %cst_49 = arith.constant 1.000000e+01 : f32
    %139 = vector.broadcast %cst_49 : f32 to vector<2x2xf32>
    %140 = arith.mulf %138, %139 : vector<2x2xf32>
    %c2 = arith.constant 2 : index
    %c0_50 = arith.constant 0 : index
    %c0_51 = arith.constant 0 : index
    %141 = vector.load %arg13[%c2, %c0_50, %c0_51] : memref<3x2x2xf32, #tpu.memory_space<vmem>>, vector<1x2x2xf32>
    %142 = vector.shape_cast %141 : vector<1x2x2xf32> to vector<2x2xf32>
    %143 = vector.shape_cast %140 : vector<2x2xf32> to vector<1x2x2xf32>
    tpu.vector_store %arg13[%c2, %c0_50, %c0_51], %143 {strides = array<i32>} : memref<3x2x2xf32, #tpu.memory_space<vmem>>, vector<1x2x2xf32>,
    return
  }
}

</mosaic_0001>

<llo_original>
// kernel: simclr_forward.1
$region0: #{simclr_forward.1}
  #allocation0 [shape = 'u32[]', space=smem, size = 0x4, offset = 0x4, fixed_abs, tag = 'smem constant byte address 0x4 - core index']
  #allocation1 [shape = 'u32[144,128]{1,0:T(1,128)}', space=vmem, size = 0x12000, scoped, tag = 'internal scratch']
  %s0 = inlined_call_operand.vmem [shape: bf16[4,72,3], index: 0, kind: input, shape index: {}]
  %s1 = inlined_call_operand.vmem [shape: bf16[72,32], index: 1, kind: input, shape index: {}]
  %s2 = inlined_call_operand.vmem [shape: f32[1,32], index: 2, kind: input, shape index: {}]
  %s3 = inlined_call_operand.vmem [shape: bf16[512,64], index: 3, kind: input, shape index: {}]
  %s4 = inlined_call_operand.vmem [shape: f32[1,64], index: 4, kind: input, shape index: {}]
  %s5 = inlined_call_operand.vmem [shape: bf16[512,96], index: 5, kind: input, shape index: {}]
  %s6 = inlined_call_operand.vmem [shape: f32[1,96], index: 6, kind: input, shape index: {}]
  %s7 = inlined_call_operand.vmem [shape: bf16[96,256], index: 7, kind: input, shape index: {}]
  %s8 = inlined_call_operand.vmem [shape: f32[1,256], index: 8, kind: input, shape index: {}]
  %s9 = inlined_call_operand.vmem [shape: bf16[256,128], index: 9, kind: input, shape index: {}]
  %s10 = inlined_call_operand.vmem [shape: f32[1,128], index: 10, kind: input, shape index: {}]
  %s11 = inlined_call_operand.vmem [shape: bf16[128,50], index: 11, kind: input, shape index: {}]
  %s12 = inlined_call_operand.vmem [shape: f32[1,50], index: 12, kind: input, shape index: {}]
  %s13 = inlined_call_operand.vmem [shape: f32[3,2,2], index: 13, kind: output, shape index: {}]
  %s14 = sld [smem:[#allocation0]]
  $region62: #{simclr_forward.1} parent=0
    _
  %s16 = ssub.s32 1, %s14
  %s17 = scalar_select 0, %s16, %s14
  // Predicated region
  $region2: #{simclr_forward.1} parent=0 // pred_check
    _
  $region3: #{simclr_forward.1} parent=0 // pred_check_branch
    %19 = sbr.rel (0) target = $region5
  $region4: #{simclr_forward.1} parent=0 // pred_region
    _
  $region5: #{simclr_forward.1} parent=0 // pred_fallthru
    _
  // Predicated region
  $region6: #{simclr_forward.1} parent=0 // pred_check
    _
  $region7: #{simclr_forward.1} parent=0 // pred_check_branch
    %21 = sbr.rel (0) target = $region9
  $region8: #{simclr_forward.1} parent=0 // pred_region
    _
  $region9: #{simclr_forward.1} parent=0 // pred_fallthru
    _
  // Predicated region
  $region10: #{simclr_forward.1} parent=0 // pred_check
    _
  $region11: #{simclr_forward.1} parent=0 // pred_check_branch
    %23 = sbr.rel (0) target = $region13
  $region12: #{simclr_forward.1} parent=0 // pred_region
    _
  $region13: #{simclr_forward.1} parent=0 // pred_fallthru
    _
  // Predicated region
  $region14: #{simclr_forward.1} parent=0 // pred_check
    _
  $region15: #{simclr_forward.1} parent=0 // pred_check_branch
    %25 = sbr.rel (0) target = $region17
  $region16: #{simclr_forward.1} parent=0 // pred_region
    _
  $region17: #{simclr_forward.1} parent=0 // pred_fallthru
    _
  // Predicated region
  $region18: #{simclr_forward.1} parent=0 // pred_check
    _
  $region19: #{simclr_forward.1} parent=0 // pred_check_branch
    %27 = sbr.rel (0) target = $region21
  $region20: #{simclr_forward.1} parent=0 // pred_region
    _
  $region21: #{simclr_forward.1} parent=0 // pred_fallthru
    _
  // Predicated region
  $region22: #{simclr_forward.1} parent=0 // pred_check
    _
  $region23: #{simclr_forward.1} parent=0 // pred_check_branch
    %29 = sbr.rel (0) target = $region25
  $region24: #{simclr_forward.1} parent=0 // pred_region
    _
  $region25: #{simclr_forward.1} parent=0 // pred_fallthru
    _
  // Predicated region
  $region26: #{simclr_forward.1} parent=0 // pred_check
    _
  $region27: #{simclr_forward.1} parent=0 // pred_check_branch
    %31 = sbr.rel (0) target = $region29
  $region28: #{simclr_forward.1} parent=0 // pred_region
    _
  $region29: #{simclr_forward.1} parent=0 // pred_fallthru
    _
  // Predicated region
  $region30: #{simclr_forward.1} parent=0 // pred_check
    _
  $region31: #{simclr_forward.1} parent=0 // pred_check_branch
    %33 = sbr.rel (0) target = $region33
  $region32: #{simclr_forward.1} parent=0 // pred_region
    _
  $region33: #{simclr_forward.1} parent=0 // pred_fallthru
    _
  // Predicated region
  $region34: #{simclr_forward.1} parent=0 // pred_check
    _
  $region35: #{simclr_forward.1} parent=0 // pred_check_branch
    %35 = sbr.rel (0) target = $region37
  $region36: #{simclr_forward.1} parent=0 // pred_region
    _
  $region37: #{simclr_forward.1} parent=0 // pred_fallthru
    _
  // Predicated region
  $region38: #{simclr_forward.1} parent=0 // pred_check
    _
  $region39: #{simclr_forward.1} parent=0 // pred_check_branch
    %37 = sbr.rel (0) target = $region41
  $region40: #{simclr_forward.1} parent=0 // pred_region
    _
  $region41: #{simclr_forward.1} parent=0 // pred_fallthru
    _
  // Predicated region
  $region42: #{simclr_forward.1} parent=0 // pred_check
    _
  $region43: #{simclr_forward.1} parent=0 // pred_check_branch
    %39 = sbr.rel (0) target = $region45
  $region44: #{simclr_forward.1} parent=0 // pred_region
    _
  $region45: #{simclr_forward.1} parent=0 // pred_fallthru
    _
  // Predicated region
  $region46: #{simclr_forward.1} parent=0 // pred_check
    _
  $region47: #{simclr_forward.1} parent=0 // pred_check_branch
    %41 = sbr.rel (0) target = $region49
  $region48: #{simclr_forward.1} parent=0 // pred_region
    _
  $region49: #{simclr_forward.1} parent=0 // pred_fallthru
    _
  // Predicated region
  $region50: #{simclr_forward.1} parent=0 // pred_check
    _
  $region51: #{simclr_forward.1} parent=0 // pred_check_branch
    %43 = sbr.rel (0) target = $region53
  $region52: #{simclr_forward.1} parent=0 // pred_region
    _
  $region53: #{simclr_forward.1} parent=0 // pred_fallthru
    _
  %v45 = vld [vmem:[%s0] sm:$0xf]
  %v46 = vld [vmem:[%s0 + $0x4] sm:$0xf]
  %v47 = vld [vmem:[%s0 + $0x8] sm:$0xf]
  %v48 = vld [vmem:[%s0 + $0xc] sm:$0xf]
  %v49 = vld [vmem:[%s0 + $0x10] sm:$0xf]
  %v50 = vld [vmem:[%s0 + $0x14] sm:$0xf]
  %v51 = vld [vmem:[%s0 + $0x18] sm:$0xf]
  %v52 = vld [vmem:[%s0 + $0x1c] sm:$0xf]
  %v53 = vld [vmem:[%s0 + $0x20] sm:$0xf]
  %v54 = vld [vmem:[%s0 + $0x24] sm:$0xf]
  %v55 = vld [vmem:[%s0 + $0x28] sm:$0xf]
  %v56 = vld [vmem:[%s0 + $0x2c] sm:$0xf]
  %v57 = vld [vmem:[%s0 + $0x30] sm:$0xf]
  %v58 = vld [vmem:[%s0 + $0x34] sm:$0xf]
  %v59 = vld [vmem:[%s0 + $0x38] sm:$0xf]
  %v60 = vld [vmem:[%s0 + $0x3c] sm:$0xf]
  %v61 = vld [vmem:[%s0 + $0x40] sm:$0xf]
  %v62 = vld [vmem:[%s0 + $0x44] sm:$0xf]
  %v63 = vld [vmem:[%s0 + $0x48] sm:$0xf]
  %v64 = vld [vmem:[%s0 + $0x4c] sm:$0xf]
  %v65 = vld [vmem:[%s0 + $0x50] sm:$0xf]
  %v66 = vld [vmem:[%s0 + $0x54] sm:$0xf]
  %v67 = vld [vmem:[%s0 + $0x58] sm:$0xf]
  %v68 = vld [vmem:[%s0 + $0x5c] sm:$0xf]
  %v69 = vld [vmem:[%s0 + $0x60] sm:$0xf]
  %v70 = vld [vmem:[%s0 + $0x64] sm:$0xf]
  %v71 = vld [vmem:[%s0 + $0x68] sm:$0xf]
  %v72 = vld [vmem:[%s0 + $0x6c] sm:$0xf]
  %v73 = vld [vmem:[%s0 + $0x70] sm:$0xf]
  %v74 = vld [vmem:[%s0 + $0x74] sm:$0xf]
  %v75 = vld [vmem:[%s0 + $0x78] sm:$0xf]
  %v76 = vld [vmem:[%s0 + $0x7c] sm:$0xf]
  %v77 = vld [vmem:[%s0 + $0x80] sm:$0xf]
  %v78 = vld [vmem:[%s0 + $0x84] sm:$0xf]
  %v79 = vld [vmem:[%s0 + $0x88] sm:$0xf]
  %v80 = vld [vmem:[%s0 + $0x8c] sm:$0xf]
  %v105 = vunpack.c.l.b16 %v45
  %v106 = vunpack.c.l.b16 %v46
  %v107 = vunpack.c.l.b16 %v47
  %v108 = vunpack.c.l.b16 %v48
  %v109 = vunpack.c.l.b16 %v49
  %v110 = vunpack.c.l.b16 %v50
  %v111 = vunpack.c.l.b16 %v54
  %v112 = vunpack.c.l.b16 %v55
  %v113 = vunpack.c.l.b16 %v56
  %v114 = vunpack.c.l.b16 %v57
  %v115 = vunpack.c.l.b16 %v58
  %v116 = vunpack.c.l.b16 %v59
  %v117 = vunpack.c.l.b16 %v63
  %v118 = vunpack.c.l.b16 %v64
  %v119 = vunpack.c.l.b16 %v65
  %v120 = vunpack.c.l.b16 %v66
  %v121 = vunpack.c.l.b16 %v67
  %v122 = vunpack.c.l.b16 %v68
  %v123 = vunpack.c.l.b16 %v72
  %v124 = vunpack.c.l.b16 %v73
  %v125 = vunpack.c.l.b16 %v74
  %v126 = vunpack.c.l.b16 %v75
  %v127 = vunpack.c.l.b16 %v76
  %v128 = vunpack.c.l.b16 %v77
  %v129 = vpack.c.b16 %v106, %v105
  %v130 = vpack.c.b16 %v108, %v107
  %v131 = vpack.c.b16 %v110, %v109
  %v132 = vpack.c.b16 %v112, %v111
  %v133 = vpack.c.b16 %v114, %v113
  %v134 = vpack.c.b16 %v116, %v115
  %v135 = vpack.c.b16 %v118, %v117
  %v136 = vpack.c.b16 %v120, %v119
  %v137 = vpack.c.b16 %v122, %v121
  %v138 = vpack.c.b16 %v124, %v123
  %v139 = vpack.c.b16 %v126, %v125
  %v140 = vpack.c.b16 %v128, %v127
  %v145 = vunpack.c.l.b16 %v51
  %v146 = vunpack.c.l.b16 %v60
  %v147 = vunpack.c.l.b16 %v69
  %v148 = vunpack.c.l.b16 %v78
  %v149 = vpack.c.b16 %v145, %v145
  %v150 = vpack.c.b16 %v146, %v146
  %v151 = vpack.c.b16 %v147, %v147
  %v152 = vpack.c.b16 %v148, %v148
  %vm153 = vsmask.f32 7424
  %v155 = vshrl.u32 %v129, 16
  %v157 = vshll.u32 %v129, 16
  %v159 = vrot.slane %v157, 1
  %v160 = vor.u32 %v155, %v159
  %v162 = vshll.u32 %v130, 16
  %v164 = vrot.slane %v162, 1
  %v165 = vsel %vm153, %v160, %v164
  %v166 = vshrl.u32 %v130, 16
  %v168 = vor.u32 %v166, %v164
  %v170 = vshll.u32 %v131, 16
  %v172 = vrot.slane %v170, 1
  %v173 = vsel %vm153, %v168, %v172
  %v174 = vshrl.u32 %v131, 16
  %v176 = vor.u32 %v174, %v172
  %v178 = vshll.u32 %v149, 16
  %v180 = vrot.slane %v178, 1
  %v181 = vsel %vm153, %v176, %v180
  %v183 = vshrl.u32 %v132, 16
  %v185 = vshll.u32 %v132, 16
  %v187 = vrot.slane %v185, 1
  %v188 = vor.u32 %v183, %v187
  %v190 = vshll.u32 %v133, 16
  %v192 = vrot.slane %v190, 1
  %v193 = vsel %vm153, %v188, %v192
  %v194 = vshrl.u32 %v133, 16
  %v196 = vor.u32 %v194, %v192
  %v198 = vshll.u32 %v134, 16
  %v200 = vrot.slane %v198, 1
  %v201 = vsel %vm153, %v196, %v200
  %v202 = vshrl.u32 %v134, 16
  %v204 = vor.u32 %v202, %v200
  %v206 = vshll.u32 %v150, 16
  %v208 = vrot.slane %v206, 1
  %v209 = vsel %vm153, %v204, %v208
  %v211 = vshrl.u32 %v135, 16
  %v213 = vshll.u32 %v135, 16
  %v215 = vrot.slane %v213, 1
  %v216 = vor.u32 %v211, %v215
  %v218 = vshll.u32 %v136, 16
  %v220 = vrot.slane %v218, 1
  %v221 = vsel %vm153, %v216, %v220
  %v222 = vshrl.u32 %v136, 16
  %v224 = vor.u32 %v222, %v220
  %v226 = vshll.u32 %v137, 16
  %v228 = vrot.slane %v226, 1
  %v229 = vsel %vm153, %v224, %v228
  %v230 = vshrl.u32 %v137, 16
  %v232 = vor.u32 %v230, %v228
  %v234 = vshll.u32 %v151, 16
  %v236 = vrot.slane %v234, 1
  %v237 = vsel %vm153, %v232, %v236
  %v239 = vshrl.u32 %v138, 16
  %v241 = vshll.u32 %v138, 16
  %v243 = vrot.slane %v241, 1
  %v244 = vor.u32 %v239, %v243
  %v246 = vshll.u32 %v139, 16
  %v248 = vrot.slane %v246, 1
  %v249 = vsel %vm153, %v244, %v248
  %v250 = vshrl.u32 %v139, 16
  %v252 = vor.u32 %v250, %v248
  %v254 = vshll.u32 %v140, 16
  %v256 = vrot.slane %v254, 1
  %v257 = vsel %vm153, %v252, %v256
  %v258 = vshrl.u32 %v140, 16
  %v260 = vor.u32 %v258, %v256
  %v262 = vshll.u32 %v152, 16
  %v264 = vrot.slane %v262, 1
  %v265 = vsel %vm153, %v260, %v264
  %266 = vrot.lane.b32.xlu0 %v165, 3
  %v267 = vpop.permute.xlu0 %266
  %268 = vrot.lane.b32.xlu0 %v173, 3
  %v269 = vpop.permute.xlu0 %268
  %270 = vrot.lane.b32.xlu0 %v181, 3
  %v271 = vpop.permute.xlu0 %270
  %272 = vrot.lane.b32.xlu0 %v193, 3
  %v273 = vpop.permute.xlu0 %272
  %274 = vrot.lane.b32.xlu0 %v201, 3
  %v275 = vpop.permute.xlu0 %274
  %276 = vrot.lane.b32.xlu0 %v209, 3
  %v277 = vpop.permute.xlu0 %276
  %278 = vrot.lane.b32.xlu0 %v221, 3
  %v279 = vpop.permute.xlu0 %278
  %280 = vrot.lane.b32.xlu0 %v229, 3
  %v281 = vpop.permute.xlu0 %280
  %282 = vrot.lane.b32.xlu0 %v237, 3
  %v283 = vpop.permute.xlu0 %282
  %284 = vrot.lane.b32.xlu0 %v249, 3
  %v285 = vpop.permute.xlu0 %284
  %286 = vrot.lane.b32.xlu0 %v257, 3
  %v287 = vpop.permute.xlu0 %286
  %288 = vrot.lane.b32.xlu0 %v265, 3
  %v289 = vpop.permute.xlu0 %288
  %vm290 = vcmask 1046528
  %v291 = vrot.slane %v129, 1
  %v292 = vrot.slane %v130, 1
  %v293 = vsel %vm290, %v291, %v292
  %v294 = vrot.slane %v131, 1
  %v295 = vsel %vm290, %v292, %v294
  %v296 = vrot.slane %v149, 1
  %v297 = vsel %vm290, %v294, %v296
  %v298 = vrot.slane %v132, 1
  %v299 = vrot.slane %v133, 1
  %v300 = vsel %vm290, %v298, %v299
  %v301 = vrot.slane %v134, 1
  %v302 = vsel %vm290, %v299, %v301
  %v303 = vrot.slane %v150, 1
  %v304 = vsel %vm290, %v301, %v303
  %v305 = vrot.slane %v135, 1
  %v306 = vrot.slane %v136, 1
  %v307 = vsel %vm290, %v305, %v306
  %v308 = vrot.slane %v137, 1
  %v309 = vsel %vm290, %v306, %v308
  %v310 = vrot.slane %v151, 1
  %v311 = vsel %vm290, %v308, %v310
  %v312 = vrot.slane %v138, 1
  %v313 = vrot.slane %v139, 1
  %v314 = vsel %vm290, %v312, %v313
  %v315 = vrot.slane %v140, 1
  %v316 = vsel %vm290, %v313, %v315
  %v317 = vrot.slane %v152, 1
  %v318 = vsel %vm290, %v315, %v317
  %319 = vrot.lane.b32.xlu0 %v293, 6
  %v320 = vpop.permute.xlu0 %319
  %321 = vrot.lane.b32.xlu0 %v295, 6
  %v322 = vpop.permute.xlu0 %321
  %323 = vrot.lane.b32.xlu0 %v297, 6
  %v324 = vpop.permute.xlu0 %323
  %325 = vrot.lane.b32.xlu0 %v300, 6
  %v326 = vpop.permute.xlu0 %325
  %327 = vrot.lane.b32.xlu0 %v302, 6
  %v328 = vpop.permute.xlu0 %327
  %329 = vrot.lane.b32.xlu0 %v304, 6
  %v330 = vpop.permute.xlu0 %329
  %331 = vrot.lane.b32.xlu0 %v307, 6
  %v332 = vpop.permute.xlu0 %331
  %333 = vrot.lane.b32.xlu0 %v309, 6
  %v334 = vpop.permute.xlu0 %333
  %335 = vrot.lane.b32.xlu0 %v311, 6
  %v336 = vpop.permute.xlu0 %335
  %337 = vrot.lane.b32.xlu0 %v314, 6
  %v338 = vpop.permute.xlu0 %337
  %339 = vrot.lane.b32.xlu0 %v316, 6
  %v340 = vpop.permute.xlu0 %339
  %341 = vrot.lane.b32.xlu0 %v318, 6
  %v342 = vpop.permute.xlu0 %341
  %vm343 = vsmask.f32 6400
  %v344 = vrot.slane %v155, 1
  %v345 = vrot.slane %v157, 2
  %v346 = vor.u32 %v344, %v345
  %v347 = vrot.slane %v166, 1
  %v348 = vrot.slane %v162, 2
  %v349 = vor.u32 %v347, %v348
  %v350 = vsel %vm343, %v346, %v349
  %v351 = vrot.slane %v174, 1
  %v352 = vrot.slane %v170, 2
  %v353 = vor.u32 %v351, %v352
  %v354 = vsel %vm343, %v349, %v353
  %v355 = vshrl.u32 %v149, 16
  %v357 = vrot.slane %v355, 1
  %v358 = vrot.slane %v178, 2
  %v359 = vor.u32 %v357, %v358
  %v360 = vsel %vm343, %v353, %v359
  %v361 = vrot.slane %v183, 1
  %v362 = vrot.slane %v185, 2
  %v363 = vor.u32 %v361, %v362
  %v364 = vrot.slane %v194, 1
  %v365 = vrot.slane %v190, 2
  %v366 = vor.u32 %v364, %v365
  %v367 = vsel %vm343, %v363, %v366
  %v368 = vrot.slane %v202, 1
  %v369 = vrot.slane %v198, 2
  %v370 = vor.u32 %v368, %v369
  %v371 = vsel %vm343, %v366, %v370
  %v372 = vshrl.u32 %v150, 16
  %v374 = vrot.slane %v372, 1
  %v375 = vrot.slane %v206, 2
  %v376 = vor.u32 %v374, %v375
  %v377 = vsel %vm343, %v370, %v376
  %v378 = vrot.slane %v211, 1
  %v379 = vrot.slane %v213, 2
  %v380 = vor.u32 %v378, %v379
  %v381 = vrot.slane %v222, 1
  %v382 = vrot.slane %v218, 2
  %v383 = vor.u32 %v381, %v382
  %v384 = vsel %vm343, %v380, %v383
  %v385 = vrot.slane %v230, 1
  %v386 = vrot.slane %v226, 2
  %v387 = vor.u32 %v385, %v386
  %v388 = vsel %vm343, %v383, %v387
  %v389 = vshrl.u32 %v151, 16
  %v391 = vrot.slane %v389, 1
  %v392 = vrot.slane %v234, 2
  %v393 = vor.u32 %v391, %v392
  %v394 = vsel %vm343, %v387, %v393
  %v395 = vrot.slane %v239, 1
  %v396 = vrot.slane %v241, 2
  %v397 = vor.u32 %v395, %v396
  %v398 = vrot.slane %v250, 1
  %v399 = vrot.slane %v246, 2
  %v400 = vor.u32 %v398, %v399
  %v401 = vsel %vm343, %v397, %v400
  %v402 = vrot.slane %v258, 1
  %v403 = vrot.slane %v254, 2
  %v404 = vor.u32 %v402, %v403
  %v405 = vsel %vm343, %v400, %v404
  %v406 = vshrl.u32 %v152, 16
  %v408 = vrot.slane %v406, 1
  %v409 = vrot.slane %v262, 2
  %v410 = vor.u32 %v408, %v409
  %v411 = vsel %vm343, %v404, %v410
  %412 = vrot.lane.b32.xlu0 %v350, 9
  %v413 = vpop.permute.xlu0 %412
  %414 = vrot.lane.b32.xlu0 %v354, 9
  %v415 = vpop.permute.xlu0 %414
  %416 = vrot.lane.b32.xlu0 %v360, 9
  %v417 = vpop.permute.xlu0 %416
  %418 = vrot.lane.b32.xlu0 %v367, 9
  %v419 = vpop.permute.xlu0 %418
  %420 = vrot.lane.b32.xlu0 %v371, 9
  %v421 = vpop.permute.xlu0 %420
  %422 = vrot.lane.b32.xlu0 %v377, 9
  %v423 = vpop.permute.xlu0 %422
  %424 = vrot.lane.b32.xlu0 %v384, 9
  %v425 = vpop.permute.xlu0 %424
  %426 = vrot.lane.b32.xlu0 %v388, 9
  %v427 = vpop.permute.xlu0 %426
  %428 = vrot.lane.b32.xlu0 %v394, 9
  %v429 = vpop.permute.xlu0 %428
  %430 = vrot.lane.b32.xlu0 %v401, 9
  %v431 = vpop.permute.xlu0 %430
  %432 = vrot.lane.b32.xlu0 %v405, 9
  %v433 = vpop.permute.xlu0 %432
  %434 = vrot.lane.b32.xlu0 %v411, 9
  %v435 = vpop.permute.xlu0 %434
  %vm436 = vcmask 1045504
  %v437 = vrot.slane %v129, 2
  %v438 = vrot.slane %v130, 2
  %v439 = vsel %vm436, %v437, %v438
  %v440 = vrot.slane %v131, 2
  %v441 = vsel %vm436, %v438, %v440
  %v442 = vrot.slane %v149, 2
  %v443 = vsel %vm436, %v440, %v442
  %v444 = vrot.slane %v132, 2
  %v445 = vrot.slane %v133, 2
  %v446 = vsel %vm436, %v444, %v445
  %v447 = vrot.slane %v134, 2
  %v448 = vsel %vm436, %v445, %v447
  %v449 = vrot.slane %v150, 2
  %v450 = vsel %vm436, %v447, %v449
  %v451 = vrot.slane %v135, 2
  %v452 = vrot.slane %v136, 2
  %v453 = vsel %vm436, %v451, %v452
  %v454 = vrot.slane %v137, 2
  %v455 = vsel %vm436, %v452, %v454
  %v456 = vrot.slane %v151, 2
  %v457 = vsel %vm436, %v454, %v456
  %v458 = vrot.slane %v138, 2
  %v459 = vrot.slane %v139, 2
  %v460 = vsel %vm436, %v458, %v459
  %v461 = vrot.slane %v140, 2
  %v462 = vsel %vm436, %v459, %v461
  %v463 = vrot.slane %v152, 2
  %v464 = vsel %vm436, %v461, %v463
  %465 = vrot.lane.b32.xlu0 %v439, 12
  %v466 = vpop.permute.xlu0 %465
  %467 = vrot.lane.b32.xlu0 %v441, 12
  %v468 = vpop.permute.xlu0 %467
  %469 = vrot.lane.b32.xlu0 %v443, 12
  %v470 = vpop.permute.xlu0 %469
  %471 = vrot.lane.b32.xlu0 %v446, 12
  %v472 = vpop.permute.xlu0 %471
  %473 = vrot.lane.b32.xlu0 %v448, 12
  %v474 = vpop.permute.xlu0 %473
  %475 = vrot.lane.b32.xlu0 %v450, 12
  %v476 = vpop.permute.xlu0 %475
  %477 = vrot.lane.b32.xlu0 %v453, 12
  %v478 = vpop.permute.xlu0 %477
  %479 = vrot.lane.b32.xlu0 %v455, 12
  %v480 = vpop.permute.xlu0 %479
  %481 = vrot.lane.b32.xlu0 %v457, 12
  %v482 = vpop.permute.xlu0 %481
  %483 = vrot.lane.b32.xlu0 %v460, 12
  %v484 = vpop.permute.xlu0 %483
  %485 = vrot.lane.b32.xlu0 %v462, 12
  %v486 = vpop.permute.xlu0 %485
  %487 = vrot.lane.b32.xlu0 %v464, 12
  %v488 = vpop.permute.xlu0 %487
  %vm489 = vsmask.f32 5376
  %v490 = vrot.slane %v155, 2
  %v491 = vrot.slane %v157, 3
  %v492 = vor.u32 %v490, %v491
  %v493 = vrot.slane %v166, 2
  %v494 = vrot.slane %v162, 3
  %v495 = vor.u32 %v493, %v494
  %v496 = vsel %vm489, %v492, %v495
  %v497 = vrot.slane %v174, 2
  %v498 = vrot.slane %v170, 3
  %v499 = vor.u32 %v497, %v498
  %v500 = vsel %vm489, %v495, %v499
  %v501 = vrot.slane %v355, 2
  %v502 = vrot.slane %v178, 3
  %v503 = vor.u32 %v501, %v502
  %v504 = vsel %vm489, %v499, %v503
  %v505 = vrot.slane %v183, 2
  %v506 = vrot.slane %v185, 3
  %v507 = vor.u32 %v505, %v506
  %v508 = vrot.slane %v194, 2
  %v509 = vrot.slane %v190, 3
  %v510 = vor.u32 %v508, %v509
  %v511 = vsel %vm489, %v507, %v510
  %v512 = vrot.slane %v202, 2
  %v513 = vrot.slane %v198, 3
  %v514 = vor.u32 %v512, %v513
  %v515 = vsel %vm489, %v510, %v514
  %v516 = vrot.slane %v372, 2
  %v517 = vrot.slane %v206, 3
  %v518 = vor.u32 %v516, %v517
  %v519 = vsel %vm489, %v514, %v518
  %v520 = vrot.slane %v211, 2
  %v521 = vrot.slane %v213, 3
  %v522 = vor.u32 %v520, %v521
  %v523 = vrot.slane %v222, 2
  %v524 = vrot.slane %v218, 3
  %v525 = vor.u32 %v523, %v524
  %v526 = vsel %vm489, %v522, %v525
  %v527 = vrot.slane %v230, 2
  %v528 = vrot.slane %v226, 3
  %v529 = vor.u32 %v527, %v528
  %v530 = vsel %vm489, %v525, %v529
  %v531 = vrot.slane %v389, 2
  %v532 = vrot.slane %v234, 3
  %v533 = vor.u32 %v531, %v532
  %v534 = vsel %vm489, %v529, %v533
  %v535 = vrot.slane %v239, 2
  %v536 = vrot.slane %v241, 3
  %v537 = vor.u32 %v535, %v536
  %v538 = vrot.slane %v250, 2
  %v539 = vrot.slane %v246, 3
  %v540 = vor.u32 %v538, %v539
  %v541 = vsel %vm489, %v537, %v540
  %v542 = vrot.slane %v258, 2
  %v543 = vrot.slane %v254, 3
  %v544 = vor.u32 %v542, %v543
  %v545 = vsel %vm489, %v540, %v544
  %v546 = vrot.slane %v406, 2
  %v547 = vrot.slane %v262, 3
  %v548 = vor.u32 %v546, %v547
  %v549 = vsel %vm489, %v544, %v548
  %550 = vrot.lane.b32.xlu0 %v496, 15
  %v551 = vpop.permute.xlu0 %550
  %552 = vrot.lane.b32.xlu0 %v500, 15
  %v553 = vpop.permute.xlu0 %552
  %554 = vrot.lane.b32.xlu0 %v504, 15
  %v555 = vpop.permute.xlu0 %554
  %556 = vrot.lane.b32.xlu0 %v511, 15
  %v557 = vpop.permute.xlu0 %556
  %558 = vrot.lane.b32.xlu0 %v515, 15
  %v559 = vpop.permute.xlu0 %558
  %560 = vrot.lane.b32.xlu0 %v519, 15
  %v561 = vpop.permute.xlu0 %560
  %562 = vrot.lane.b32.xlu0 %v526, 15
  %v563 = vpop.permute.xlu0 %562
  %564 = vrot.lane.b32.xlu0 %v530, 15
  %v565 = vpop.permute.xlu0 %564
  %566 = vrot.lane.b32.xlu0 %v534, 15
  %v567 = vpop.permute.xlu0 %566
  %568 = vrot.lane.b32.xlu0 %v541, 15
  %v569 = vpop.permute.xlu0 %568
  %570 = vrot.lane.b32.xlu0 %v545, 15
  %v571 = vpop.permute.xlu0 %570
  %572 = vrot.lane.b32.xlu0 %v549, 15
  %v573 = vpop.permute.xlu0 %572
  %vm574 = vcmask 1044480
  %v575 = vrot.slane %v129, 3
  %v576 = vrot.slane %v130, 3
  %v577 = vsel %vm574, %v575, %v576
  %v578 = vrot.slane %v131, 3
  %v579 = vsel %vm574, %v576, %v578
  %v580 = vrot.slane %v149, 3
  %v581 = vsel %vm574, %v578, %v580
  %v582 = vrot.slane %v132, 3
  %v583 = vrot.slane %v133, 3
  %v584 = vsel %vm574, %v582, %v583
  %v585 = vrot.slane %v134, 3
  %v586 = vsel %vm574, %v583, %v585
  %v587 = vrot.slane %v150, 3
  %v588 = vsel %vm574, %v585, %v587
  %v589 = vrot.slane %v135, 3
  %v590 = vrot.slane %v136, 3
  %v591 = vsel %vm574, %v589, %v590
  %v592 = vrot.slane %v137, 3
  %v593 = vsel %vm574, %v590, %v592
  %v594 = vrot.slane %v151, 3
  %v595 = vsel %vm574, %v592, %v594
  %v596 = vrot.slane %v138, 3
  %v597 = vrot.slane %v139, 3
  %v598 = vsel %vm574, %v596, %v597
  %v599 = vrot.slane %v140, 3
  %v600 = vsel %vm574, %v597, %v599
  %v601 = vrot.slane %v152, 3
  %v602 = vsel %vm574, %v599, %v601
  %603 = vrot.lane.b32.xlu0 %v577, 18
  %v604 = vpop.permute.xlu0 %603
  %605 = vrot.lane.b32.xlu0 %v579, 18
  %v606 = vpop.permute.xlu0 %605
  %607 = vrot.lane.b32.xlu0 %v581, 18
  %v608 = vpop.permute.xlu0 %607
  %609 = vrot.lane.b32.xlu0 %v584, 18
  %v610 = vpop.permute.xlu0 %609
  %611 = vrot.lane.b32.xlu0 %v586, 18
  %v612 = vpop.permute.xlu0 %611
  %613 = vrot.lane.b32.xlu0 %v588, 18
  %v614 = vpop.permute.xlu0 %613
  %615 = vrot.lane.b32.xlu0 %v591, 18
  %v616 = vpop.permute.xlu0 %615
  %617 = vrot.lane.b32.xlu0 %v593, 18
  %v618 = vpop.permute.xlu0 %617
  %619 = vrot.lane.b32.xlu0 %v595, 18
  %v620 = vpop.permute.xlu0 %619
  %621 = vrot.lane.b32.xlu0 %v598, 18
  %v622 = vpop.permute.xlu0 %621
  %623 = vrot.lane.b32.xlu0 %v600, 18
  %v624 = vpop.permute.xlu0 %623
  %625 = vrot.lane.b32.xlu0 %v602, 18
  %v626 = vpop.permute.xlu0 %625
  %vm627 = vsmask.f32 4352
  %v628 = vrot.slane %v155, 3
  %v629 = vrot.slane %v157, 4
  %v630 = vor.u32 %v628, %v629
  %v631 = vrot.slane %v166, 3
  %v632 = vrot.slane %v162, 4
  %v633 = vor.u32 %v631, %v632
  %v634 = vsel %vm627, %v630, %v633
  %v635 = vrot.slane %v174, 3
  %v636 = vrot.slane %v170, 4
  %v637 = vor.u32 %v635, %v636
  %v638 = vsel %vm627, %v633, %v637
  %v639 = vrot.slane %v355, 3
  %v640 = vrot.slane %v178, 4
  %v641 = vor.u32 %v639, %v640
  %v642 = vsel %vm627, %v637, %v641
  %v643 = vrot.slane %v183, 3
  %v644 = vrot.slane %v185, 4
  %v645 = vor.u32 %v643, %v644
  %v646 = vrot.slane %v194, 3
  %v647 = vrot.slane %v190, 4
  %v648 = vor.u32 %v646, %v647
  %v649 = vsel %vm627, %v645, %v648
  %v650 = vrot.slane %v202, 3
  %v651 = vrot.slane %v198, 4
  %v652 = vor.u32 %v650, %v651
  %v653 = vsel %vm627, %v648, %v652
  %v654 = vrot.slane %v372, 3
  %v655 = vrot.slane %v206, 4
  %v656 = vor.u32 %v654, %v655
  %v657 = vsel %vm627, %v652, %v656
  %v658 = vrot.slane %v211, 3
  %v659 = vrot.slane %v213, 4
  %v660 = vor.u32 %v658, %v659
  %v661 = vrot.slane %v222, 3
  %v662 = vrot.slane %v218, 4
  %v663 = vor.u32 %v661, %v662
  %v664 = vsel %vm627, %v660, %v663
  %v665 = vrot.slane %v230, 3
  %v666 = vrot.slane %v226, 4
  %v667 = vor.u32 %v665, %v666
  %v668 = vsel %vm627, %v663, %v667
  %v669 = vrot.slane %v389, 3
  %v670 = vrot.slane %v234, 4
  %v671 = vor.u32 %v669, %v670
  %v672 = vsel %vm627, %v667, %v671
  %v673 = vrot.slane %v239, 3
  %v674 = vrot.slane %v241, 4
  %v675 = vor.u32 %v673, %v674
  %v676 = vrot.slane %v250, 3
  %v677 = vrot.slane %v246, 4
  %v678 = vor.u32 %v676, %v677
  %v679 = vsel %vm627, %v675, %v678
  %v680 = vrot.slane %v258, 3
  %v681 = vrot.slane %v254, 4
  %v682 = vor.u32 %v680, %v681
  %v683 = vsel %vm627, %v678, %v682
  %v684 = vrot.slane %v406, 3
  %v685 = vrot.slane %v262, 4
  %v686 = vor.u32 %v684, %v685
  %v687 = vsel %vm627, %v682, %v686
  %688 = vrot.lane.b32.xlu0 %v634, 21
  %v689 = vpop.permute.xlu0 %688
  %690 = vrot.lane.b32.xlu0 %v638, 21
  %v691 = vpop.permute.xlu0 %690
  %692 = vrot.lane.b32.xlu0 %v642, 21
  %v693 = vpop.permute.xlu0 %692
  %694 = vrot.lane.b32.xlu0 %v649, 21
  %v695 = vpop.permute.xlu0 %694
  %696 = vrot.lane.b32.xlu0 %v653, 21
  %v697 = vpop.permute.xlu0 %696
  %698 = vrot.lane.b32.xlu0 %v657, 21
  %v699 = vpop.permute.xlu0 %698
  %700 = vrot.lane.b32.xlu0 %v664, 21
  %v701 = vpop.permute.xlu0 %700
  %702 = vrot.lane.b32.xlu0 %v668, 21
  %v703 = vpop.permute.xlu0 %702
  %704 = vrot.lane.b32.xlu0 %v672, 21
  %v705 = vpop.permute.xlu0 %704
  %706 = vrot.lane.b32.xlu0 %v679, 21
  %v707 = vpop.permute.xlu0 %706
  %708 = vrot.lane.b32.xlu0 %v683, 21
  %v709 = vpop.permute.xlu0 %708
  %710 = vrot.lane.b32.xlu0 %v687, 21
  %v711 = vpop.permute.xlu0 %710
  %v712 = vpack.c.b16 %v107, %v106
  %v713 = vpack.c.b16 %v109, %v108
  %v714 = vpack.c.b16 %v145, %v110
  %v715 = vpack.c.b16 %v113, %v112
  %v716 = vpack.c.b16 %v115, %v114
  %v717 = vpack.c.b16 %v146, %v116
  %v718 = vpack.c.b16 %v119, %v118
  %v719 = vpack.c.b16 %v121, %v120
  %v720 = vpack.c.b16 %v147, %v122
  %v721 = vpack.c.b16 %v125, %v124
  %v722 = vpack.c.b16 %v127, %v126
  %v723 = vpack.c.b16 %v148, %v128
  %724 = vrot.lane.b32.xlu0 %v712, 24
  %v725 = vpop.permute.xlu0 %724
  %726 = vrot.lane.b32.xlu0 %v713, 24
  %v727 = vpop.permute.xlu0 %726
  %728 = vrot.lane.b32.xlu0 %v714, 24
  %v729 = vpop.permute.xlu0 %728
  %730 = vrot.lane.b32.xlu0 %v715, 24
  %v731 = vpop.permute.xlu0 %730
  %732 = vrot.lane.b32.xlu0 %v716, 24
  %v733 = vpop.permute.xlu0 %732
  %734 = vrot.lane.b32.xlu0 %v717, 24
  %v735 = vpop.permute.xlu0 %734
  %736 = vrot.lane.b32.xlu0 %v718, 24
  %v737 = vpop.permute.xlu0 %736
  %738 = vrot.lane.b32.xlu0 %v719, 24
  %v739 = vpop.permute.xlu0 %738
  %740 = vrot.lane.b32.xlu0 %v720, 24
  %v741 = vpop.permute.xlu0 %740
  %742 = vrot.lane.b32.xlu0 %v721, 24
  %v743 = vpop.permute.xlu0 %742
  %744 = vrot.lane.b32.xlu0 %v722, 24
  %v745 = vpop.permute.xlu0 %744
  %746 = vrot.lane.b32.xlu0 %v723, 24
  %v747 = vpop.permute.xlu0 %746
  %v752 = vunpack.c.l.b16 %v52
  %v753 = vunpack.c.l.b16 %v61
  %v754 = vunpack.c.l.b16 %v70
  %v755 = vunpack.c.l.b16 %v79
  %v756 = vpack.c.b16 %v752, %v752
  %v757 = vpack.c.b16 %v753, %v753
  %v758 = vpack.c.b16 %v754, %v754
  %v759 = vpack.c.b16 %v755, %v755
  %v761 = vshrl.u32 %v712, 16
  %v763 = vshll.u32 %v712, 16
  %v765 = vrot.slane %v763, 1
  %v766 = vor.u32 %v761, %v765
  %v768 = vshll.u32 %v713, 16
  %v770 = vrot.slane %v768, 1
  %v771 = vsel %vm153, %v766, %v770
  %v772 = vshrl.u32 %v713, 16
  %v774 = vor.u32 %v772, %v770
  %v776 = vshll.u32 %v714, 16
  %v778 = vrot.slane %v776, 1
  %v779 = vsel %vm153, %v774, %v778
  %v780 = vshrl.u32 %v714, 16
  %v782 = vor.u32 %v780, %v778
  %v784 = vshll.u32 %v756, 16
  %v786 = vrot.slane %v784, 1
  %v787 = vsel %vm153, %v782, %v786
  %v789 = vshrl.u32 %v715, 16
  %v791 = vshll.u32 %v715, 16
  %v793 = vrot.slane %v791, 1
  %v794 = vor.u32 %v789, %v793
  %v796 = vshll.u32 %v716, 16
  %v798 = vrot.slane %v796, 1
  %v799 = vsel %vm153, %v794, %v798
  %v800 = vshrl.u32 %v716, 16
  %v802 = vor.u32 %v800, %v798
  %v804 = vshll.u32 %v717, 16
  %v806 = vrot.slane %v804, 1
  %v807 = vsel %vm153, %v802, %v806
  %v808 = vshrl.u32 %v717, 16
  %v810 = vor.u32 %v808, %v806
  %v812 = vshll.u32 %v757, 16
  %v814 = vrot.slane %v812, 1
  %v815 = vsel %vm153, %v810, %v814
  %v817 = vshrl.u32 %v718, 16
  %v819 = vshll.u32 %v718, 16
  %v821 = vrot.slane %v819, 1
  %v822 = vor.u32 %v817, %v821
  %v824 = vshll.u32 %v719, 16
  %v826 = vrot.slane %v824, 1
  %v827 = vsel %vm153, %v822, %v826
  %v828 = vshrl.u32 %v719, 16
  %v830 = vor.u32 %v828, %v826
  %v832 = vshll.u32 %v720, 16
  %v834 = vrot.slane %v832, 1
  %v835 = vsel %vm153, %v830, %v834
  %v836 = vshrl.u32 %v720, 16
  %v838 = vor.u32 %v836, %v834
  %v840 = vshll.u32 %v758, 16
  %v842 = vrot.slane %v840, 1
  %v843 = vsel %vm153, %v838, %v842
  %v845 = vshrl.u32 %v721, 16
  %v847 = vshll.u32 %v721, 16
  %v849 = vrot.slane %v847, 1
  %v850 = vor.u32 %v845, %v849
  %v852 = vshll.u32 %v722, 16
  %v854 = vrot.slane %v852, 1
  %v855 = vsel %vm153, %v850, %v854
  %v856 = vshrl.u32 %v722, 16
  %v858 = vor.u32 %v856, %v854
  %v860 = vshll.u32 %v723, 16
  %v862 = vrot.slane %v860, 1
  %v863 = vsel %vm153, %v858, %v862
  %v864 = vshrl.u32 %v723, 16
  %v866 = vor.u32 %v864, %v862
  %v868 = vshll.u32 %v759, 16
  %v870 = vrot.slane %v868, 1
  %v871 = vsel %vm153, %v866, %v870
  %872 = vrot.lane.b32.xlu0 %v771, 27
  %v873 = vpop.permute.xlu0 %872
  %874 = vrot.lane.b32.xlu0 %v779, 27
  %v875 = vpop.permute.xlu0 %874
  %876 = vrot.lane.b32.xlu0 %v787, 27
  %v877 = vpop.permute.xlu0 %876
  %878 = vrot.lane.b32.xlu0 %v799, 27
  %v879 = vpop.permute.xlu0 %878
  %880 = vrot.lane.b32.xlu0 %v807, 27
  %v881 = vpop.permute.xlu0 %880
  %882 = vrot.lane.b32.xlu0 %v815, 27
  %v883 = vpop.permute.xlu0 %882
  %884 = vrot.lane.b32.xlu0 %v827, 27
  %v885 = vpop.permute.xlu0 %884
  %886 = vrot.lane.b32.xlu0 %v835, 27
  %v887 = vpop.permute.xlu0 %886
  %888 = vrot.lane.b32.xlu0 %v843, 27
  %v889 = vpop.permute.xlu0 %888
  %890 = vrot.lane.b32.xlu0 %v855, 27
  %v891 = vpop.permute.xlu0 %890
  %892 = vrot.lane.b32.xlu0 %v863, 27
  %v893 = vpop.permute.xlu0 %892
  %894 = vrot.lane.b32.xlu0 %v871, 27
  %v895 = vpop.permute.xlu0 %894
  %v896 = vrot.slane %v712, 1
  %v897 = vrot.slane %v713, 1
  %v898 = vsel %vm290, %v896, %v897
  %v899 = vrot.slane %v714, 1
  %v900 = vsel %vm290, %v897, %v899
  %v901 = vrot.slane %v756, 1
  %v902 = vsel %vm290, %v899, %v901
  %v903 = vrot.slane %v715, 1
  %v904 = vrot.slane %v716, 1
  %v905 = vsel %vm290, %v903, %v904
  %v906 = vrot.slane %v717, 1
  %v907 = vsel %vm290, %v904, %v906
  %v908 = vrot.slane %v757, 1
  %v909 = vsel %vm290, %v906, %v908
  %v910 = vrot.slane %v718, 1
  %v911 = vrot.slane %v719, 1
  %v912 = vsel %vm290, %v910, %v911
  %v913 = vrot.slane %v720, 1
  %v914 = vsel %vm290, %v911, %v913
  %v915 = vrot.slane %v758, 1
  %v916 = vsel %vm290, %v913, %v915
  %v917 = vrot.slane %v721, 1
  %v918 = vrot.slane %v722, 1
  %v919 = vsel %vm290, %v917, %v918
  %v920 = vrot.slane %v723, 1
  %v921 = vsel %vm290, %v918, %v920
  %v922 = vrot.slane %v759, 1
  %v923 = vsel %vm290, %v920, %v922
  %924 = vrot.lane.b32.xlu0 %v898, 30
  %v925 = vpop.permute.xlu0 %924
  %926 = vrot.lane.b32.xlu0 %v900, 30
  %v927 = vpop.permute.xlu0 %926
  %928 = vrot.lane.b32.xlu0 %v902, 30
  %v929 = vpop.permute.xlu0 %928
  %930 = vrot.lane.b32.xlu0 %v905, 30
  %v931 = vpop.permute.xlu0 %930
  %932 = vrot.lane.b32.xlu0 %v907, 30
  %v933 = vpop.permute.xlu0 %932
  %934 = vrot.lane.b32.xlu0 %v909, 30
  %v935 = vpop.permute.xlu0 %934
  %936 = vrot.lane.b32.xlu0 %v912, 30
  %v937 = vpop.permute.xlu0 %936
  %938 = vrot.lane.b32.xlu0 %v914, 30
  %v939 = vpop.permute.xlu0 %938
  %940 = vrot.lane.b32.xlu0 %v916, 30
  %v941 = vpop.permute.xlu0 %940
  %942 = vrot.lane.b32.xlu0 %v919, 30
  %v943 = vpop.permute.xlu0 %942
  %944 = vrot.lane.b32.xlu0 %v921, 30
  %v945 = vpop.permute.xlu0 %944
  %946 = vrot.lane.b32.xlu0 %v923, 30
  %v947 = vpop.permute.xlu0 %946
  %v948 = vrot.slane %v761, 1
  %v949 = vrot.slane %v763, 2
  %v950 = vor.u32 %v948, %v949
  %v951 = vrot.slane %v772, 1
  %v952 = vrot.slane %v768, 2
  %v953 = vor.u32 %v951, %v952
  %v954 = vsel %vm343, %v950, %v953
  %v955 = vrot.slane %v780, 1
  %v956 = vrot.slane %v776, 2
  %v957 = vor.u32 %v955, %v956
  %v958 = vsel %vm343, %v953, %v957
  %v959 = vshrl.u32 %v756, 16
  %v961 = vrot.slane %v959, 1
  %v962 = vrot.slane %v784, 2
  %v963 = vor.u32 %v961, %v962
  %v964 = vsel %vm343, %v957, %v963
  %v965 = vrot.slane %v789, 1
  %v966 = vrot.slane %v791, 2
  %v967 = vor.u32 %v965, %v966
  %v968 = vrot.slane %v800, 1
  %v969 = vrot.slane %v796, 2
  %v970 = vor.u32 %v968, %v969
  %v971 = vsel %vm343, %v967, %v970
  %v972 = vrot.slane %v808, 1
  %v973 = vrot.slane %v804, 2
  %v974 = vor.u32 %v972, %v973
  %v975 = vsel %vm343, %v970, %v974
  %v976 = vshrl.u32 %v757, 16
  %v978 = vrot.slane %v976, 1
  %v979 = vrot.slane %v812, 2
  %v980 = vor.u32 %v978, %v979
  %v981 = vsel %vm343, %v974, %v980
  %v982 = vrot.slane %v817, 1
  %v983 = vrot.slane %v819, 2
  %v984 = vor.u32 %v982, %v983
  %v985 = vrot.slane %v828, 1
  %v986 = vrot.slane %v824, 2
  %v987 = vor.u32 %v985, %v986
  %v988 = vsel %vm343, %v984, %v987
  %v989 = vrot.slane %v836, 1
  %v990 = vrot.slane %v832, 2
  %v991 = vor.u32 %v989, %v990
  %v992 = vsel %vm343, %v987, %v991
  %v993 = vshrl.u32 %v758, 16
  %v995 = vrot.slane %v993, 1
  %v996 = vrot.slane %v840, 2
  %v997 = vor.u32 %v995, %v996
  %v998 = vsel %vm343, %v991, %v997
  %v999 = vrot.slane %v845, 1
  %v1000 = vrot.slane %v847, 2
  %v1001 = vor.u32 %v999, %v1000
  %v1002 = vrot.slane %v856, 1
  %v1003 = vrot.slane %v852, 2
  %v1004 = vor.u32 %v1002, %v1003
  %v1005 = vsel %vm343, %v1001, %v1004
  %v1006 = vrot.slane %v864, 1
  %v1007 = vrot.slane %v860, 2
  %v1008 = vor.u32 %v1006, %v1007
  %v1009 = vsel %vm343, %v1004, %v1008
  %v1010 = vshrl.u32 %v759, 16
  %v1012 = vrot.slane %v1010, 1
  %v1013 = vrot.slane %v868, 2
  %v1014 = vor.u32 %v1012, %v1013
  %v1015 = vsel %vm343, %v1008, %v1014
  %1016 = vrot.lane.b32.xlu0 %v954, 33
  %v1017 = vpop.permute.xlu0 %1016
  %1018 = vrot.lane.b32.xlu0 %v958, 33
  %v1019 = vpop.permute.xlu0 %1018
  %1020 = vrot.lane.b32.xlu0 %v964, 33
  %v1021 = vpop.permute.xlu0 %1020
  %1022 = vrot.lane.b32.xlu0 %v971, 33
  %v1023 = vpop.permute.xlu0 %1022
  %1024 = vrot.lane.b32.xlu0 %v975, 33
  %v1025 = vpop.permute.xlu0 %1024
  %1026 = vrot.lane.b32.xlu0 %v981, 33
  %v1027 = vpop.permute.xlu0 %1026
  %1028 = vrot.lane.b32.xlu0 %v988, 33
  %v1029 = vpop.permute.xlu0 %1028
  %1030 = vrot.lane.b32.xlu0 %v992, 33
  %v1031 = vpop.permute.xlu0 %1030
  %1032 = vrot.lane.b32.xlu0 %v998, 33
  %v1033 = vpop.permute.xlu0 %1032
  %1034 = vrot.lane.b32.xlu0 %v1005, 33
  %v1035 = vpop.permute.xlu0 %1034
  %1036 = vrot.lane.b32.xlu0 %v1009, 33
  %v1037 = vpop.permute.xlu0 %1036
  %1038 = vrot.lane.b32.xlu0 %v1015, 33
  %v1039 = vpop.permute.xlu0 %1038
  %v1040 = vrot.slane %v712, 2
  %v1041 = vrot.slane %v713, 2
  %v1042 = vsel %vm436, %v1040, %v1041
  %v1043 = vrot.slane %v714, 2
  %v1044 = vsel %vm436, %v1041, %v1043
  %v1045 = vrot.slane %v756, 2
  %v1046 = vsel %vm436, %v1043, %v1045
  %v1047 = vrot.slane %v715, 2
  %v1048 = vrot.slane %v716, 2
  %v1049 = vsel %vm436, %v1047, %v1048
  %v1050 = vrot.slane %v717, 2
  %v1051 = vsel %vm436, %v1048, %v1050
  %v1052 = vrot.slane %v757, 2
  %v1053 = vsel %vm436, %v1050, %v1052
  %v1054 = vrot.slane %v718, 2
  %v1055 = vrot.slane %v719, 2
  %v1056 = vsel %vm436, %v1054, %v1055
  %v1057 = vrot.slane %v720, 2
  %v1058 = vsel %vm436, %v1055, %v1057
  %v1059 = vrot.slane %v758, 2
  %v1060 = vsel %vm436, %v1057, %v1059
  %v1061 = vrot.slane %v721, 2
  %v1062 = vrot.slane %v722, 2
  %v1063 = vsel %vm436, %v1061, %v1062
  %v1064 = vrot.slane %v723, 2
  %v1065 = vsel %vm436, %v1062, %v1064
  %v1066 = vrot.slane %v759, 2
  %v1067 = vsel %vm436, %v1064, %v1066
  %1068 = vrot.lane.b32.xlu0 %v1042, 36
  %v1069 = vpop.permute.xlu0 %1068
  %1070 = vrot.lane.b32.xlu0 %v1044, 36
  %v1071 = vpop.permute.xlu0 %1070
  %1072 = vrot.lane.b32.xlu0 %v1046, 36
  %v1073 = vpop.permute.xlu0 %1072
  %1074 = vrot.lane.b32.xlu0 %v1049, 36
  %v1075 = vpop.permute.xlu0 %1074
  %1076 = vrot.lane.b32.xlu0 %v1051, 36
  %v1077 = vpop.permute.xlu0 %1076
  %1078 = vrot.lane.b32.xlu0 %v1053, 36
  %v1079 = vpop.permute.xlu0 %1078
  %1080 = vrot.lane.b32.xlu0 %v1056, 36
  %v1081 = vpop.permute.xlu0 %1080
  %1082 = vrot.lane.b32.xlu0 %v1058, 36
  %v1083 = vpop.permute.xlu0 %1082
  %1084 = vrot.lane.b32.xlu0 %v1060, 36
  %v1085 = vpop.permute.xlu0 %1084
  %1086 = vrot.lane.b32.xlu0 %v1063, 36
  %v1087 = vpop.permute.xlu0 %1086
  %1088 = vrot.lane.b32.xlu0 %v1065, 36
  %v1089 = vpop.permute.xlu0 %1088
  %1090 = vrot.lane.b32.xlu0 %v1067, 36
  %v1091 = vpop.permute.xlu0 %1090
  %v1092 = vrot.slane %v761, 2
  %v1093 = vrot.slane %v763, 3
  %v1094 = vor.u32 %v1092, %v1093
  %v1095 = vrot.slane %v772, 2
  %v1096 = vrot.slane %v768, 3
  %v1097 = vor.u32 %v1095, %v1096
  %v1098 = vsel %vm489, %v1094, %v1097
  %v1099 = vrot.slane %v780, 2
  %v1100 = vrot.slane %v776, 3
  %v1101 = vor.u32 %v1099, %v1100
  %v1102 = vsel %vm489, %v1097, %v1101
  %v1103 = vrot.slane %v959, 2
  %v1104 = vrot.slane %v784, 3
  %v1105 = vor.u32 %v1103, %v1104
  %v1106 = vsel %vm489, %v1101, %v1105
  %v1107 = vrot.slane %v789, 2
  %v1108 = vrot.slane %v791, 3
  %v1109 = vor.u32 %v1107, %v1108
  %v1110 = vrot.slane %v800, 2
  %v1111 = vrot.slane %v796, 3
  %v1112 = vor.u32 %v1110, %v1111
  %v1113 = vsel %vm489, %v1109, %v1112
  %v1114 = vrot.slane %v808, 2
  %v1115 = vrot.slane %v804, 3
  %v1116 = vor.u32 %v1114, %v1115
  %v1117 = vsel %vm489, %v1112, %v1116
  %v1118 = vrot.slane %v976, 2
  %v1119 = vrot.slane %v812, 3
  %v1120 = vor.u32 %v1118, %v1119
  %v1121 = vsel %vm489, %v1116, %v1120
  %v1122 = vrot.slane %v817, 2
  %v1123 = vrot.slane %v819, 3
  %v1124 = vor.u32 %v1122, %v1123
  %v1125 = vrot.slane %v828, 2
  %v1126 = vrot.slane %v824, 3
  %v1127 = vor.u32 %v1125, %v1126
  %v1128 = vsel %vm489, %v1124, %v1127
  %v1129 = vrot.slane %v836, 2
  %v1130 = vrot.slane %v832, 3
  %v1131 = vor.u32 %v1129, %v1130
  %v1132 = vsel %vm489, %v1127, %v1131
  %v1133 = vrot.slane %v993, 2
  %v1134 = vrot.slane %v840, 3
  %v1135 = vor.u32 %v1133, %v1134
  %v1136 = vsel %vm489, %v1131, %v1135
  %v1137 = vrot.slane %v845, 2
  %v1138 = vrot.slane %v847, 3
  %v1139 = vor.u32 %v1137, %v1138
  %v1140 = vrot.slane %v856, 2
  %v1141 = vrot.slane %v852, 3
  %v1142 = vor.u32 %v1140, %v1141
  %v1143 = vsel %vm489, %v1139, %v1142
  %v1144 = vrot.slane %v864, 2
  %v1145 = vrot.slane %v860, 3
  %v1146 = vor.u32 %v1144, %v1145
  %v1147 = vsel %vm489, %v1142, %v1146
  %v1148 = vrot.slane %v1010, 2
  %v1149 = vrot.slane %v868, 3
  %v1150 = vor.u32 %v1148, %v1149
  %v1151 = vsel %vm489, %v1146, %v1150
  %1152 = vrot.lane.b32.xlu0 %v1098, 39
  %v1153 = vpop.permute.xlu0 %1152
  %1154 = vrot.lane.b32.xlu0 %v1102, 39
  %v1155 = vpop.permute.xlu0 %1154
  %1156 = vrot.lane.b32.xlu0 %v1106, 39
  %v1157 = vpop.permute.xlu0 %1156
  %1158 = vrot.lane.b32.xlu0 %v1113, 39
  %v1159 = vpop.permute.xlu0 %1158
  %1160 = vrot.lane.b32.xlu0 %v1117, 39
  %v1161 = vpop.permute.xlu0 %1160
  %1162 = vrot.lane.b32.xlu0 %v1121, 39
  %v1163 = vpop.permute.xlu0 %1162
  %1164 = vrot.lane.b32.xlu0 %v1128, 39
  %v1165 = vpop.permute.xlu0 %1164
  %1166 = vrot.lane.b32.xlu0 %v1132, 39
  %v1167 = vpop.permute.xlu0 %1166
  %1168 = vrot.lane.b32.xlu0 %v1136, 39
  %v1169 = vpop.permute.xlu0 %1168
  %1170 = vrot.lane.b32.xlu0 %v1143, 39
  %v1171 = vpop.permute.xlu0 %1170
  %1172 = vrot.lane.b32.xlu0 %v1147, 39
  %v1173 = vpop.permute.xlu0 %1172
  %1174 = vrot.lane.b32.xlu0 %v1151, 39
  %v1175 = vpop.permute.xlu0 %1174
  %v1176 = vrot.slane %v712, 3
  %v1177 = vrot.slane %v713, 3
  %v1178 = vsel %vm574, %v1176, %v1177
  %v1179 = vrot.slane %v714, 3
  %v1180 = vsel %vm574, %v1177, %v1179
  %v1181 = vrot.slane %v756, 3
  %v1182 = vsel %vm574, %v1179, %v1181
  %v1183 = vrot.slane %v715, 3
  %v1184 = vrot.slane %v716, 3
  %v1185 = vsel %vm574, %v1183, %v1184
  %v1186 = vrot.slane %v717, 3
  %v1187 = vsel %vm574, %v1184, %v1186
  %v1188 = vrot.slane %v757, 3
  %v1189 = vsel %vm574, %v1186, %v1188
  %v1190 = vrot.slane %v718, 3
  %v1191 = vrot.slane %v719, 3
  %v1192 = vsel %vm574, %v1190, %v1191
  %v1193 = vrot.slane %v720, 3
  %v1194 = vsel %vm574, %v1191, %v1193
  %v1195 = vrot.slane %v758, 3
  %v1196 = vsel %vm574, %v1193, %v1195
  %v1197 = vrot.slane %v721, 3
  %v1198 = vrot.slane %v722, 3
  %v1199 = vsel %vm574, %v1197, %v1198
  %v1200 = vrot.slane %v723, 3
  %v1201 = vsel %vm574, %v1198, %v1200
  %v1202 = vrot.slane %v759, 3
  %v1203 = vsel %vm574, %v1200, %v1202
  %1204 = vrot.lane.b32.xlu0 %v1178, 42
  %v1205 = vpop.permute.xlu0 %1204
  %1206 = vrot.lane.b32.xlu0 %v1180, 42
  %v1207 = vpop.permute.xlu0 %1206
  %1208 = vrot.lane.b32.xlu0 %v1182, 42
  %v1209 = vpop.permute.xlu0 %1208
  %1210 = vrot.lane.b32.xlu0 %v1185, 42
  %v1211 = vpop.permute.xlu0 %1210
  %1212 = vrot.lane.b32.xlu0 %v1187, 42
  %v1213 = vpop.permute.xlu0 %1212
  %1214 = vrot.lane.b32.xlu0 %v1189, 42
  %v1215 = vpop.permute.xlu0 %1214
  %1216 = vrot.lane.b32.xlu0 %v1192, 42
  %v1217 = vpop.permute.xlu0 %1216
  %1218 = vrot.lane.b32.xlu0 %v1194, 42
  %v1219 = vpop.permute.xlu0 %1218
  %1220 = vrot.lane.b32.xlu0 %v1196, 42
  %v1221 = vpop.permute.xlu0 %1220
  %1222 = vrot.lane.b32.xlu0 %v1199, 42
  %v1223 = vpop.permute.xlu0 %1222
  %1224 = vrot.lane.b32.xlu0 %v1201, 42
  %v1225 = vpop.permute.xlu0 %1224
  %1226 = vrot.lane.b32.xlu0 %v1203, 42
  %v1227 = vpop.permute.xlu0 %1226
  %v1228 = vrot.slane %v761, 3
  %v1229 = vrot.slane %v763, 4
  %v1230 = vor.u32 %v1228, %v1229
  %v1231 = vrot.slane %v772, 3
  %v1232 = vrot.slane %v768, 4
  %v1233 = vor.u32 %v1231, %v1232
  %v1234 = vsel %vm627, %v1230, %v1233
  %v1235 = vrot.slane %v780, 3
  %v1236 = vrot.slane %v776, 4
  %v1237 = vor.u32 %v1235, %v1236
  %v1238 = vsel %vm627, %v1233, %v1237
  %v1239 = vrot.slane %v959, 3
  %v1240 = vrot.slane %v784, 4
  %v1241 = vor.u32 %v1239, %v1240
  %v1242 = vsel %vm627, %v1237, %v1241
  %v1243 = vrot.slane %v789, 3
  %v1244 = vrot.slane %v791, 4
  %v1245 = vor.u32 %v1243, %v1244
  %v1246 = vrot.slane %v800, 3
  %v1247 = vrot.slane %v796, 4
  %v1248 = vor.u32 %v1246, %v1247
  %v1249 = vsel %vm627, %v1245, %v1248
  %v1250 = vrot.slane %v808, 3
  %v1251 = vrot.slane %v804, 4
  %v1252 = vor.u32 %v1250, %v1251
  %v1253 = vsel %vm627, %v1248, %v1252
  %v1254 = vrot.slane %v976, 3
  %v1255 = vrot.slane %v812, 4
  %v1256 = vor.u32 %v1254, %v1255
  %v1257 = vsel %vm627, %v1252, %v1256
  %v1258 = vrot.slane %v817, 3
  %v1259 = vrot.slane %v819, 4
  %v1260 = vor.u32 %v1258, %v1259
  %v1261 = vrot.slane %v828, 3
  %v1262 = vrot.slane %v824, 4
  %v1263 = vor.u32 %v1261, %v1262
  %v1264 = vsel %vm627, %v1260, %v1263
  %v1265 = vrot.slane %v836, 3
  %v1266 = vrot.slane %v832, 4
  %v1267 = vor.u32 %v1265, %v1266
  %v1268 = vsel %vm627, %v1263, %v1267
  %v1269 = vrot.slane %v993, 3
  %v1270 = vrot.slane %v840, 4
  %v1271 = vor.u32 %v1269, %v1270
  %v1272 = vsel %vm627, %v1267, %v1271
  %v1273 = vrot.slane %v845, 3
  %v1274 = vrot.slane %v847, 4
  %v1275 = vor.u32 %v1273, %v1274
  %v1276 = vrot.slane %v856, 3
  %v1277 = vrot.slane %v852, 4
  %v1278 = vor.u32 %v1276, %v1277
  %v1279 = vsel %vm627, %v1275, %v1278
  %v1280 = vrot.slane %v864, 3
  %v1281 = vrot.slane %v860, 4
  %v1282 = vor.u32 %v1280, %v1281
  %v1283 = vsel %vm627, %v1278, %v1282
  %v1284 = vrot.slane %v1010, 3
  %v1285 = vrot.slane %v868, 4
  %v1286 = vor.u32 %v1284, %v1285
  %v1287 = vsel %vm627, %v1282, %v1286
  %1288 = vrot.lane.b32.xlu0 %v1234, 45
  %v1289 = vpop.permute.xlu0 %1288
  %1290 = vrot.lane.b32.xlu0 %v1238, 45
  %v1291 = vpop.permute.xlu0 %1290
  %1292 = vrot.lane.b32.xlu0 %v1242, 45
  %v1293 = vpop.permute.xlu0 %1292
  %1294 = vrot.lane.b32.xlu0 %v1249, 45
  %v1295 = vpop.permute.xlu0 %1294
  %1296 = vrot.lane.b32.xlu0 %v1253, 45
  %v1297 = vpop.permute.xlu0 %1296
  %1298 = vrot.lane.b32.xlu0 %v1257, 45
  %v1299 = vpop.permute.xlu0 %1298
  %1300 = vrot.lane.b32.xlu0 %v1264, 45
  %v1301 = vpop.permute.xlu0 %1300
  %1302 = vrot.lane.b32.xlu0 %v1268, 45
  %v1303 = vpop.permute.xlu0 %1302
  %1304 = vrot.lane.b32.xlu0 %v1272, 45
  %v1305 = vpop.permute.xlu0 %1304
  %1306 = vrot.lane.b32.xlu0 %v1279, 45
  %v1307 = vpop.permute.xlu0 %1306
  %1308 = vrot.lane.b32.xlu0 %v1283, 45
  %v1309 = vpop.permute.xlu0 %1308
  %1310 = vrot.lane.b32.xlu0 %v1287, 45
  %v1311 = vpop.permute.xlu0 %1310
  %vm1312 = vcmask 23552
  %v1314 = vsel %vm1312, %v129, %v267
  %v1316 = vsel %vm1312, %v130, %v269
  %v1318 = vsel %vm1312, %v131, %v271
  %v1320 = vsel %vm1312, %v132, %v273
  %v1322 = vsel %vm1312, %v133, %v275
  %v1324 = vsel %vm1312, %v134, %v277
  %v1326 = vsel %vm1312, %v135, %v279
  %v1328 = vsel %vm1312, %v136, %v281
  %v1330 = vsel %vm1312, %v137, %v283
  %v1332 = vsel %vm1312, %v138, %v285
  %v1334 = vsel %vm1312, %v139, %v287
  %v1336 = vsel %vm1312, %v140, %v289
  %vm1337 = vcmask 48128
  %v1339 = vsel %vm1337, %v1314, %v320
  %v1341 = vsel %vm1337, %v1316, %v322
  %v1343 = vsel %vm1337, %v1318, %v324
  %v1345 = vsel %vm1337, %v1320, %v326
  %v1347 = vsel %vm1337, %v1322, %v328
  %v1349 = vsel %vm1337, %v1324, %v330
  %v1351 = vsel %vm1337, %v1326, %v332
  %v1353 = vsel %vm1337, %v1328, %v334
  %v1355 = vsel %vm1337, %v1330, %v336
  %v1357 = vsel %vm1337, %v1332, %v338
  %v1359 = vsel %vm1337, %v1334, %v340
  %v1361 = vsel %vm1337, %v1336, %v342
  %vm1362 = vcmask 72704
  %v1364 = vsel %vm1362, %v1339, %v413
  %v1366 = vsel %vm1362, %v1341, %v415
  %v1368 = vsel %vm1362, %v1343, %v417
  %v1370 = vsel %vm1362, %v1345, %v419
  %v1372 = vsel %vm1362, %v1347, %v421
  %v1374 = vsel %vm1362, %v1349, %v423
  %v1376 = vsel %vm1362, %v1351, %v425
  %v1378 = vsel %vm1362, %v1353, %v427
  %v1380 = vsel %vm1362, %v1355, %v429
  %v1382 = vsel %vm1362, %v1357, %v431
  %v1384 = vsel %vm1362, %v1359, %v433
  %v1386 = vsel %vm1362, %v1361, %v435
  %vm1387 = vcmask 97280
  %v1389 = vsel %vm1387, %v1364, %v466
  %v1391 = vsel %vm1387, %v1366, %v468
  %v1393 = vsel %vm1387, %v1368, %v470
  %v1395 = vsel %vm1387, %v1370, %v472
  %v1397 = vsel %vm1387, %v1372, %v474
  %v1399 = vsel %vm1387, %v1374, %v476
  %v1401 = vsel %vm1387, %v1376, %v478
  %v1403 = vsel %vm1387, %v1378, %v480
  %v1405 = vsel %vm1387, %v1380, %v482
  %v1407 = vsel %vm1387, %v1382, %v484
  %v1409 = vsel %vm1387, %v1384, %v486
  %v1411 = vsel %vm1387, %v1386, %v488
  %vm1412 = vcmask 121856
  %v1414 = vsel %vm1412, %v1389, %v551
  %v1416 = vsel %vm1412, %v1391, %v553
  %v1418 = vsel %vm1412, %v1393, %v555
  %v1420 = vsel %vm1412, %v1395, %v557
  %v1422 = vsel %vm1412, %v1397, %v559
  %v1424 = vsel %vm1412, %v1399, %v561
  %v1426 = vsel %vm1412, %v1401, %v563
  %v1428 = vsel %vm1412, %v1403, %v565
  %v1430 = vsel %vm1412, %v1405, %v567
  %v1432 = vsel %vm1412, %v1407, %v569
  %v1434 = vsel %vm1412, %v1409, %v571
  %v1436 = vsel %vm1412, %v1411, %v573
  %vm1437 = vcmask 146432
  %v1439 = vsel %vm1437, %v1414, %v604
  %v1441 = vsel %vm1437, %v1416, %v606
  %v1443 = vsel %vm1437, %v1418, %v608
  %v1445 = vsel %vm1437, %v1420, %v610
  %v1447 = vsel %vm1437, %v1422, %v612
  %v1449 = vsel %vm1437, %v1424, %v614
  %v1451 = vsel %vm1437, %v1426, %v616
  %v1453 = vsel %vm1437, %v1428, %v618
  %v1455 = vsel %vm1437, %v1430, %v620
  %v1457 = vsel %vm1437, %v1432, %v622
  %v1459 = vsel %vm1437, %v1434, %v624
  %v1461 = vsel %vm1437, %v1436, %v626
  %vm1462 = vcmask 171008
  %v1464 = vsel %vm1462, %v1439, %v689
  %v1466 = vsel %vm1462, %v1441, %v691
  %v1468 = vsel %vm1462, %v1443, %v693
  %v1470 = vsel %vm1462, %v1445, %v695
  %v1472 = vsel %vm1462, %v1447, %v697
  %v1474 = vsel %vm1462, %v1449, %v699
  %v1476 = vsel %vm1462, %v1451, %v701
  %v1478 = vsel %vm1462, %v1453, %v703
  %v1480 = vsel %vm1462, %v1455, %v705
  %v1482 = vsel %vm1462, %v1457, %v707
  %v1484 = vsel %vm1462, %v1459, %v709
  %v1486 = vsel %vm1462, %v1461, %v711
  %vm1487 = vcmask 195584
  %v1489 = vsel %vm1487, %v1464, %v725
  %v1491 = vsel %vm1487, %v1466, %v727
  %v1493 = vsel %vm1487, %v1468, %v729
  %v1495 = vsel %vm1487, %v1470, %v731
  %v1497 = vsel %vm1487, %v1472, %v733
  %v1499 = vsel %vm1487, %v1474, %v735
  %v1501 = vsel %vm1487, %v1476, %v737
  %v1503 = vsel %vm1487, %v1478, %v739
  %v1505 = vsel %vm1487, %v1480, %v741
  %v1507 = vsel %vm1487, %v1482, %v743
  %v1509 = vsel %vm1487, %v1484, %v745
  %v1511 = vsel %vm1487, %v1486, %v747
  %vm1512 = vcmask 220160
  %v1514 = vsel %vm1512, %v1489, %v873
  %v1516 = vsel %vm1512, %v1491, %v875
  %v1518 = vsel %vm1512, %v1493, %v877
  %v1520 = vsel %vm1512, %v1495, %v879
  %v1522 = vsel %vm1512, %v1497, %v881
  %v1524 = vsel %vm1512, %v1499, %v883
  %v1526 = vsel %vm1512, %v1501, %v885
  %v1528 = vsel %vm1512, %v1503, %v887
  %v1530 = vsel %vm1512, %v1505, %v889
  %v1532 = vsel %vm1512, %v1507, %v891
  %v1534 = vsel %vm1512, %v1509, %v893
  %v1536 = vsel %vm1512, %v1511, %v895
  %vm1537 = vcmask 244736
  %v1539 = vsel %vm1537, %v1514, %v925
  %v1541 = vsel %vm1537, %v1516, %v927
  %v1543 = vsel %vm1537, %v1518, %v929
  %v1545 = vsel %vm1537, %v1520, %v931
  %v1547 = vsel %vm1537, %v1522, %v933
  %v1549 = vsel %vm1537, %v1524, %v935
  %v1551 = vsel %vm1537, %v1526, %v937
  %v1553 = vsel %vm1537, %v1528, %v939
  %v1555 = vsel %vm1537, %v1530, %v941
  %v1557 = vsel %vm1537, %v1532, %v943
  %v1559 = vsel %vm1537, %v1534, %v945
  %v1561 = vsel %vm1537, %v1536, %v947
  %vm1562 = vcmask 269312
  %v1564 = vsel %vm1562, %v1539, %v1017
  %v1566 = vsel %vm1562, %v1541, %v1019
  %v1568 = vsel %vm1562, %v1543, %v1021
  %v1570 = vsel %vm1562, %v1545, %v1023
  %v1572 = vsel %vm1562, %v1547, %v1025
  %v1574 = vsel %vm1562, %v1549, %v1027
  %v1576 = vsel %vm1562, %v1551, %v1029
  %v1578 = vsel %vm1562, %v1553, %v1031
  %v1580 = vsel %vm1562, %v1555, %v1033
  %v1582 = vsel %vm1562, %v1557, %v1035
  %v1584 = vsel %vm1562, %v1559, %v1037
  %v1586 = vsel %vm1562, %v1561, %v1039
  %vm1587 = vcmask 293888
  %v1589 = vsel %vm1587, %v1564, %v1069
  %v1591 = vsel %vm1587, %v1566, %v1071
  %v1593 = vsel %vm1587, %v1568, %v1073
  %v1595 = vsel %vm1587, %v1570, %v1075
  %v1597 = vsel %vm1587, %v1572, %v1077
  %v1599 = vsel %vm1587, %v1574, %v1079
  %v1601 = vsel %vm1587, %v1576, %v1081
  %v1603 = vsel %vm1587, %v1578, %v1083
  %v1605 = vsel %vm1587, %v1580, %v1085
  %v1607 = vsel %vm1587, %v1582, %v1087
  %v1609 = vsel %vm1587, %v1584, %v1089
  %v1611 = vsel %vm1587, %v1586, %v1091
  %vm1612 = vcmask 318464
  %v1614 = vsel %vm1612, %v1589, %v1153
  %v1616 = vsel %vm1612, %v1591, %v1155
  %v1618 = vsel %vm1612, %v1593, %v1157
  %v1620 = vsel %vm1612, %v1595, %v1159
  %v1622 = vsel %vm1612, %v1597, %v1161
  %v1624 = vsel %vm1612, %v1599, %v1163
  %v1626 = vsel %vm1612, %v1601, %v1165
  %v1628 = vsel %vm1612, %v1603, %v1167
  %v1630 = vsel %vm1612, %v1605, %v1169
  %v1632 = vsel %vm1612, %v1607, %v1171
  %v1634 = vsel %vm1612, %v1609, %v1173
  %v1636 = vsel %vm1612, %v1611, %v1175
  %vm1637 = vcmask 343040
  %v1639 = vsel %vm1637, %v1614, %v1205
  %v1641 = vsel %vm1637, %v1616, %v1207
  %v1643 = vsel %vm1637, %v1618, %v1209
  %v1645 = vsel %vm1637, %v1620, %v1211
  %v1647 = vsel %vm1637, %v1622, %v1213
  %v1649 = vsel %vm1637, %v1624, %v1215
  %v1651 = vsel %vm1637, %v1626, %v1217
  %v1653 = vsel %vm1637, %v1628, %v1219
  %v1655 = vsel %vm1637, %v1630, %v1221
  %v1657 = vsel %vm1637, %v1632, %v1223
  %v1659 = vsel %vm1637, %v1634, %v1225
  %v1661 = vsel %vm1637, %v1636, %v1227
  %vm1662 = vcmask 367616
  %v1664 = vsel %vm1662, %v1639, %v1289
  %v1666 = vsel %vm1662, %v1641, %v1291
  %v1668 = vsel %vm1662, %v1643, %v1293
  %v1670 = vsel %vm1662, %v1645, %v1295
  %v1672 = vsel %vm1662, %v1647, %v1297
  %v1674 = vsel %vm1662, %v1649, %v1299
  %v1676 = vsel %vm1662, %v1651, %v1301
  %v1678 = vsel %vm1662, %v1653, %v1303
  %v1680 = vsel %vm1662, %v1655, %v1305
  %v1682 = vsel %vm1662, %v1657, %v1307
  %v1684 = vsel %vm1662, %v1659, %v1309
  %v1686 = vsel %vm1662, %v1661, %v1311
  %v1687 = vpack.c.b16 %v752, %v145
  %v1688 = vpack.c.b16 %v753, %v146
  %v1689 = vpack.c.b16 %v754, %v147
  %v1690 = vpack.c.b16 %v755, %v148
  %v1695 = vunpack.c.l.b16 %v53
  %v1696 = vunpack.c.l.b16 %v62
  %v1697 = vunpack.c.l.b16 %v71
  %v1698 = vunpack.c.l.b16 %v80
  %v1699 = vpack.c.b16 %v1695, %v1695
  %v1700 = vpack.c.b16 %v1696, %v1696
  %v1701 = vpack.c.b16 %v1697, %v1697
  %v1702 = vpack.c.b16 %v1698, %v1698
  %v1704 = vshll.u32 %v1687, 16
  %v1706 = vrot.slane %v1704, 1
  %v1707 = vsel %vm153, %v176, %v1706
  %v1708 = vshrl.u32 %v1687, 16
  %v1710 = vor.u32 %v1708, %v1706
  %v1712 = vshll.u32 %v1699, 16
  %v1714 = vrot.slane %v1712, 1
  %v1715 = vsel %vm153, %v1710, %v1714
  %v1717 = vshll.u32 %v1688, 16
  %v1719 = vrot.slane %v1717, 1
  %v1720 = vsel %vm153, %v204, %v1719
  %v1721 = vshrl.u32 %v1688, 16
  %v1723 = vor.u32 %v1721, %v1719
  %v1725 = vshll.u32 %v1700, 16
  %v1727 = vrot.slane %v1725, 1
  %v1728 = vsel %vm153, %v1723, %v1727
  %v1730 = vshll.u32 %v1689, 16
  %v1732 = vrot.slane %v1730, 1
  %v1733 = vsel %vm153, %v232, %v1732
  %v1734 = vshrl.u32 %v1689, 16
  %v1736 = vor.u32 %v1734, %v1732
  %v1738 = vshll.u32 %v1701, 16
  %v1740 = vrot.slane %v1738, 1
  %v1741 = vsel %vm153, %v1736, %v1740
  %v1743 = vshll.u32 %v1690, 16
  %v1745 = vrot.slane %v1743, 1
  %v1746 = vsel %vm153, %v260, %v1745
  %v1747 = vshrl.u32 %v1690, 16
  %v1749 = vor.u32 %v1747, %v1745
  %v1751 = vshll.u32 %v1702, 16
  %v1753 = vrot.slane %v1751, 1
  %v1754 = vsel %vm153, %v1749, %v1753
  %1755 = vrot.lane.b32.xlu0 %v1707, 3
  %v1756 = vpop.permute.xlu0 %1755
  %1757 = vrot.lane.b32.xlu0 %v1715, 3
  %v1758 = vpop.permute.xlu0 %1757
  %1759 = vrot.lane.b32.xlu0 %v1720, 3
  %v1760 = vpop.permute.xlu0 %1759
  %1761 = vrot.lane.b32.xlu0 %v1728, 3
  %v1762 = vpop.permute.xlu0 %1761
  %1763 = vrot.lane.b32.xlu0 %v1733, 3
  %v1764 = vpop.permute.xlu0 %1763
  %1765 = vrot.lane.b32.xlu0 %v1741, 3
  %v1766 = vpop.permute.xlu0 %1765
  %1767 = vrot.lane.b32.xlu0 %v1746, 3
  %v1768 = vpop.permute.xlu0 %1767
  %1769 = vrot.lane.b32.xlu0 %v1754, 3
  %v1770 = vpop.permute.xlu0 %1769
  %v1771 = vrot.slane %v1687, 1
  %v1772 = vsel %vm290, %v294, %v1771
  %v1773 = vrot.slane %v1699, 1
  %v1774 = vsel %vm290, %v1771, %v1773
  %v1775 = vrot.slane %v1688, 1
  %v1776 = vsel %vm290, %v301, %v1775
  %v1777 = vrot.slane %v1700, 1
  %v1778 = vsel %vm290, %v1775, %v1777
  %v1779 = vrot.slane %v1689, 1
  %v1780 = vsel %vm290, %v308, %v1779
  %v1781 = vrot.slane %v1701, 1
  %v1782 = vsel %vm290, %v1779, %v1781
  %v1783 = vrot.slane %v1690, 1
  %v1784 = vsel %vm290, %v315, %v1783
  %v1785 = vrot.slane %v1702, 1
  %v1786 = vsel %vm290, %v1783, %v1785
  %1787 = vrot.lane.b32.xlu0 %v1772, 6
  %v1788 = vpop.permute.xlu0 %1787
  %1789 = vrot.lane.b32.xlu0 %v1774, 6
  %v1790 = vpop.permute.xlu0 %1789
  %1791 = vrot.lane.b32.xlu0 %v1776, 6
  %v1792 = vpop.permute.xlu0 %1791
  %1793 = vrot.lane.b32.xlu0 %v1778, 6
  %v1794 = vpop.permute.xlu0 %1793
  %1795 = vrot.lane.b32.xlu0 %v1780, 6
  %v1796 = vpop.permute.xlu0 %1795
  %1797 = vrot.lane.b32.xlu0 %v1782, 6
  %v1798 = vpop.permute.xlu0 %1797
  %1799 = vrot.lane.b32.xlu0 %v1784, 6
  %v1800 = vpop.permute.xlu0 %1799
  %1801 = vrot.lane.b32.xlu0 %v1786, 6
  %v1802 = vpop.permute.xlu0 %1801
  %v1803 = vrot.slane %v1708, 1
  %v1804 = vrot.slane %v1704, 2
  %v1805 = vor.u32 %v1803, %v1804
  %v1806 = vsel %vm343, %v353, %v1805
  %v1807 = vshrl.u32 %v1699, 16
  %v1809 = vrot.slane %v1807, 1
  %v1810 = vrot.slane %v1712, 2
  %v1811 = vor.u32 %v1809, %v1810
  %v1812 = vsel %vm343, %v1805, %v1811
  %v1813 = vrot.slane %v1721, 1
  %v1814 = vrot.slane %v1717, 2
  %v1815 = vor.u32 %v1813, %v1814
  %v1816 = vsel %vm343, %v370, %v1815
  %v1817 = vshrl.u32 %v1700, 16
  %v1819 = vrot.slane %v1817, 1
  %v1820 = vrot.slane %v1725, 2
  %v1821 = vor.u32 %v1819, %v1820
  %v1822 = vsel %vm343, %v1815, %v1821
  %v1823 = vrot.slane %v1734, 1
  %v1824 = vrot.slane %v1730, 2
  %v1825 = vor.u32 %v1823, %v1824
  %v1826 = vsel %vm343, %v387, %v1825
  %v1827 = vshrl.u32 %v1701, 16
  %v1829 = vrot.slane %v1827, 1
  %v1830 = vrot.slane %v1738, 2
  %v1831 = vor.u32 %v1829, %v1830
  %v1832 = vsel %vm343, %v1825, %v1831
  %v1833 = vrot.slane %v1747, 1
  %v1834 = vrot.slane %v1743, 2
  %v1835 = vor.u32 %v1833, %v1834
  %v1836 = vsel %vm343, %v404, %v1835
  %v1837 = vshrl.u32 %v1702, 16
  %v1839 = vrot.slane %v1837, 1
  %v1840 = vrot.slane %v1751, 2
  %v1841 = vor.u32 %v1839, %v1840
  %v1842 = vsel %vm343, %v1835, %v1841
  %1843 = vrot.lane.b32.xlu0 %v1806, 9
  %v1844 = vpop.permute.xlu0 %1843
  %1845 = vrot.lane.b32.xlu0 %v1812, 9
  %v1846 = vpop.permute.xlu0 %1845
  %1847 = vrot.lane.b32.xlu0 %v1816, 9
  %v1848 = vpop.permute.xlu0 %1847
  %1849 = vrot.lane.b32.xlu0 %v1822, 9
  %v1850 = vpop.permute.xlu0 %1849
  %1851 = vrot.lane.b32.xlu0 %v1826, 9
  %v1852 = vpop.permute.xlu0 %1851
  %1853 = vrot.lane.b32.xlu0 %v1832, 9
  %v1854 = vpop.permute.xlu0 %1853
  %1855 = vrot.lane.b32.xlu0 %v1836, 9
  %v1856 = vpop.permute.xlu0 %1855
  %1857 = vrot.lane.b32.xlu0 %v1842, 9
  %v1858 = vpop.permute.xlu0 %1857
  %v1859 = vrot.slane %v1687, 2
  %v1860 = vsel %vm436, %v440, %v1859
  %v1861 = vrot.slane %v1699, 2
  %v1862 = vsel %vm436, %v1859, %v1861
  %v1863 = vrot.slane %v1688, 2
  %v1864 = vsel %vm436, %v447, %v1863
  %v1865 = vrot.slane %v1700, 2
  %v1866 = vsel %vm436, %v1863, %v1865
  %v1867 = vrot.slane %v1689, 2
  %v1868 = vsel %vm436, %v454, %v1867
  %v1869 = vrot.slane %v1701, 2
  %v1870 = vsel %vm436, %v1867, %v1869
  %v1871 = vrot.slane %v1690, 2
  %v1872 = vsel %vm436, %v461, %v1871
  %v1873 = vrot.slane %v1702, 2
  %v1874 = vsel %vm436, %v1871, %v1873
  %1875 = vrot.lane.b32.xlu0 %v1860, 12
  %v1876 = vpop.permute.xlu0 %1875
  %1877 = vrot.lane.b32.xlu0 %v1862, 12
  %v1878 = vpop.permute.xlu0 %1877
  %1879 = vrot.lane.b32.xlu0 %v1864, 12
  %v1880 = vpop.permute.xlu0 %1879
  %1881 = vrot.lane.b32.xlu0 %v1866, 12
  %v1882 = vpop.permute.xlu0 %1881
  %1883 = vrot.lane.b32.xlu0 %v1868, 12
  %v1884 = vpop.permute.xlu0 %1883
  %1885 = vrot.lane.b32.xlu0 %v1870, 12
  %v1886 = vpop.permute.xlu0 %1885
  %1887 = vrot.lane.b32.xlu0 %v1872, 12
  %v1888 = vpop.permute.xlu0 %1887
  %1889 = vrot.lane.b32.xlu0 %v1874, 12
  %v1890 = vpop.permute.xlu0 %1889
  %v1891 = vrot.slane %v1708, 2
  %v1892 = vrot.slane %v1704, 3
  %v1893 = vor.u32 %v1891, %v1892
  %v1894 = vsel %vm489, %v499, %v1893
  %v1895 = vrot.slane %v1807, 2
  %v1896 = vrot.slane %v1712, 3
  %v1897 = vor.u32 %v1895, %v1896
  %v1898 = vsel %vm489, %v1893, %v1897
  %v1899 = vrot.slane %v1721, 2
  %v1900 = vrot.slane %v1717, 3
  %v1901 = vor.u32 %v1899, %v1900
  %v1902 = vsel %vm489, %v514, %v1901
  %v1903 = vrot.slane %v1817, 2
  %v1904 = vrot.slane %v1725, 3
  %v1905 = vor.u32 %v1903, %v1904
  %v1906 = vsel %vm489, %v1901, %v1905
  %v1907 = vrot.slane %v1734, 2
  %v1908 = vrot.slane %v1730, 3
  %v1909 = vor.u32 %v1907, %v1908
  %v1910 = vsel %vm489, %v529, %v1909
  %v1911 = vrot.slane %v1827, 2
  %v1912 = vrot.slane %v1738, 3
  %v1913 = vor.u32 %v1911, %v1912
  %v1914 = vsel %vm489, %v1909, %v1913
  %v1915 = vrot.slane %v1747, 2
  %v1916 = vrot.slane %v1743, 3
  %v1917 = vor.u32 %v1915, %v1916
  %v1918 = vsel %vm489, %v544, %v1917
  %v1919 = vrot.slane %v1837, 2
  %v1920 = vrot.slane %v1751, 3
  %v1921 = vor.u32 %v1919, %v1920
  %v1922 = vsel %vm489, %v1917, %v1921
  %1923 = vrot.lane.b32.xlu0 %v1894, 15
  %v1924 = vpop.permute.xlu0 %1923
  %1925 = vrot.lane.b32.xlu0 %v1898, 15
  %v1926 = vpop.permute.xlu0 %1925
  %1927 = vrot.lane.b32.xlu0 %v1902, 15
  %v1928 = vpop.permute.xlu0 %1927
  %1929 = vrot.lane.b32.xlu0 %v1906, 15
  %v1930 = vpop.permute.xlu0 %1929
  %1931 = vrot.lane.b32.xlu0 %v1910, 15
  %v1932 = vpop.permute.xlu0 %1931
  %1933 = vrot.lane.b32.xlu0 %v1914, 15
  %v1934 = vpop.permute.xlu0 %1933
  %1935 = vrot.lane.b32.xlu0 %v1918, 15
  %v1936 = vpop.permute.xlu0 %1935
  %1937 = vrot.lane.b32.xlu0 %v1922, 15
  %v1938 = vpop.permute.xlu0 %1937
  %v1939 = vrot.slane %v1687, 3
  %v1940 = vsel %vm574, %v578, %v1939
  %v1941 = vrot.slane %v1699, 3
  %v1942 = vsel %vm574, %v1939, %v1941
  %v1943 = vrot.slane %v1688, 3
  %v1944 = vsel %vm574, %v585, %v1943
  %v1945 = vrot.slane %v1700, 3
  %v1946 = vsel %vm574, %v1943, %v1945
  %v1947 = vrot.slane %v1689, 3
  %v1948 = vsel %vm574, %v592, %v1947
  %v1949 = vrot.slane %v1701, 3
  %v1950 = vsel %vm574, %v1947, %v1949
  %v1951 = vrot.slane %v1690, 3
  %v1952 = vsel %vm574, %v599, %v1951
  %v1953 = vrot.slane %v1702, 3
  %v1954 = vsel %vm574, %v1951, %v1953
  %1955 = vrot.lane.b32.xlu0 %v1940, 18
  %v1956 = vpop.permute.xlu0 %1955
  %1957 = vrot.lane.b32.xlu0 %v1942, 18
  %v1958 = vpop.permute.xlu0 %1957
  %1959 = vrot.lane.b32.xlu0 %v1944, 18
  %v1960 = vpop.permute.xlu0 %1959
  %1961 = vrot.lane.b32.xlu0 %v1946, 18
  %v1962 = vpop.permute.xlu0 %1961
  %1963 = vrot.lane.b32.xlu0 %v1948, 18
  %v1964 = vpop.permute.xlu0 %1963
  %1965 = vrot.lane.b32.xlu0 %v1950, 18
  %v1966 = vpop.permute.xlu0 %1965
  %1967 = vrot.lane.b32.xlu0 %v1952, 18
  %v1968 = vpop.permute.xlu0 %1967
  %1969 = vrot.lane.b32.xlu0 %v1954, 18
  %v1970 = vpop.permute.xlu0 %1969
  %v1971 = vrot.slane %v1708, 3
  %v1972 = vrot.slane %v1704, 4
  %v1973 = vor.u32 %v1971, %v1972
  %v1974 = vsel %vm627, %v637, %v1973
  %v1975 = vrot.slane %v1807, 3
  %v1976 = vrot.slane %v1712, 4
  %v1977 = vor.u32 %v1975, %v1976
  %v1978 = vsel %vm627, %v1973, %v1977
  %v1979 = vrot.slane %v1721, 3
  %v1980 = vrot.slane %v1717, 4
  %v1981 = vor.u32 %v1979, %v1980
  %v1982 = vsel %vm627, %v652, %v1981
  %v1983 = vrot.slane %v1817, 3
  %v1984 = vrot.slane %v1725, 4
  %v1985 = vor.u32 %v1983, %v1984
  %v1986 = vsel %vm627, %v1981, %v1985
  %v1987 = vrot.slane %v1734, 3
  %v1988 = vrot.slane %v1730, 4
  %v1989 = vor.u32 %v1987, %v1988
  %v1990 = vsel %vm627, %v667, %v1989
  %v1991 = vrot.slane %v1827, 3
  %v1992 = vrot.slane %v1738, 4
  %v1993 = vor.u32 %v1991, %v1992
  %v1994 = vsel %vm627, %v1989, %v1993
  %v1995 = vrot.slane %v1747, 3
  %v1996 = vrot.slane %v1743, 4
  %v1997 = vor.u32 %v1995, %v1996
  %v1998 = vsel %vm627, %v682, %v1997
  %v1999 = vrot.slane %v1837, 3
  %v2000 = vrot.slane %v1751, 4
  %v2001 = vor.u32 %v1999, %v2000
  %v2002 = vsel %vm627, %v1997, %v2001
  %2003 = vrot.lane.b32.xlu0 %v1974, 21
  %v2004 = vpop.permute.xlu0 %2003
  %2005 = vrot.lane.b32.xlu0 %v1978, 21
  %v2006 = vpop.permute.xlu0 %2005
  %2007 = vrot.lane.b32.xlu0 %v1982, 21
  %v2008 = vpop.permute.xlu0 %2007
  %2009 = vrot.lane.b32.xlu0 %v1986, 21
  %v2010 = vpop.permute.xlu0 %2009
  %2011 = vrot.lane.b32.xlu0 %v1990, 21
  %v2012 = vpop.permute.xlu0 %2011
  %2013 = vrot.lane.b32.xlu0 %v1994, 21
  %v2014 = vpop.permute.xlu0 %2013
  %2015 = vrot.lane.b32.xlu0 %v1998, 21
  %v2016 = vpop.permute.xlu0 %2015
  %2017 = vrot.lane.b32.xlu0 %v2002, 21
  %v2018 = vpop.permute.xlu0 %2017
  %v2020 = vsel %vm1312, %v131, %v1756
  %v2022 = vsel %vm1312, %v1687, %v1758
  %v2024 = vsel %vm1312, %v134, %v1760
  %v2026 = vsel %vm1312, %v1688, %v1762
  %v2028 = vsel %vm1312, %v137, %v1764
  %v2030 = vsel %vm1312, %v1689, %v1766
  %v2032 = vsel %vm1312, %v140, %v1768
  %v2034 = vsel %vm1312, %v1690, %v1770
  %v2036 = vsel %vm1337, %v2020, %v1788
  %v2038 = vsel %vm1337, %v2022, %v1790
  %v2040 = vsel %vm1337, %v2024, %v1792
  %v2042 = vsel %vm1337, %v2026, %v1794
  %v2044 = vsel %vm1337, %v2028, %v1796
  %v2046 = vsel %vm1337, %v2030, %v1798
  %v2048 = vsel %vm1337, %v2032, %v1800
  %v2050 = vsel %vm1337, %v2034, %v1802
  %v2052 = vsel %vm1362, %v2036, %v1844
  %v2054 = vsel %vm1362, %v2038, %v1846
  %v2056 = vsel %vm1362, %v2040, %v1848
  %v2058 = vsel %vm1362, %v2042, %v1850
  %v2060 = vsel %vm1362, %v2044, %v1852
  %v2062 = vsel %vm1362, %v2046, %v1854
  %v2064 = vsel %vm1362, %v2048, %v1856
  %v2066 = vsel %vm1362, %v2050, %v1858
  %v2068 = vsel %vm1387, %v2052, %v1876
  %v2070 = vsel %vm1387, %v2054, %v1878
  %v2072 = vsel %vm1387, %v2056, %v1880
  %v2074 = vsel %vm1387, %v2058, %v1882
  %v2076 = vsel %vm1387, %v2060, %v1884
  %v2078 = vsel %vm1387, %v2062, %v1886
  %v2080 = vsel %vm1387, %v2064, %v1888
  %v2082 = vsel %vm1387, %v2066, %v1890
  %v2084 = vsel %vm1412, %v2068, %v1924
  %v2086 = vsel %vm1412, %v2070, %v1926
  %v2088 = vsel %vm1412, %v2072, %v1928
  %v2090 = vsel %vm1412, %v2074, %v1930
  %v2092 = vsel %vm1412, %v2076, %v1932
  %v2094 = vsel %vm1412, %v2078, %v1934
  %v2096 = vsel %vm1412, %v2080, %v1936
  %v2098 = vsel %vm1412, %v2082, %v1938
  %v2100 = vsel %vm1437, %v2084, %v1956
  %v2102 = vsel %vm1437, %v2086, %v1958
  %v2104 = vsel %vm1437, %v2088, %v1960
  %v2106 = vsel %vm1437, %v2090, %v1962
  %v2108 = vsel %vm1437, %v2092, %v1964
  %v2110 = vsel %vm1437, %v2094, %v1966
  %v2112 = vsel %vm1437, %v2096, %v1968
  %v2114 = vsel %vm1437, %v2098, %v1970
  %v2116 = vsel %vm1462, %v2100, %v2004
  %v2118 = vsel %vm1462, %v2102, %v2006
  %v2120 = vsel %vm1462, %v2104, %v2008
  %v2122 = vsel %vm1462, %v2106, %v2010
  %v2124 = vsel %vm1462, %v2108, %v2012
  %v2126 = vsel %vm1462, %v2110, %v2014
  %v2128 = vsel %vm1462, %v2112, %v2016
  %v2130 = vsel %vm1462, %v2114, %v2018
  %2143 = vrot.lane.b32.xlu0 %v1466, 48
  %v2144 = vpop.permute.xlu0 %2143
  %2145 = vrot.lane.b32.xlu0 %v2116, 48
  %v2146 = vpop.permute.xlu0 %2145
  %2147 = vrot.lane.b32.xlu0 %v2118, 48
  %v2148 = vpop.permute.xlu0 %2147
  %2149 = vrot.lane.b32.xlu0 %v1472, 48
  %v2150 = vpop.permute.xlu0 %2149
  %2151 = vrot.lane.b32.xlu0 %v2120, 48
  %v2152 = vpop.permute.xlu0 %2151
  %2153 = vrot.lane.b32.xlu0 %v2122, 48
  %v2154 = vpop.permute.xlu0 %2153
  %2155 = vrot.lane.b32.xlu0 %v1478, 48
  %v2156 = vpop.permute.xlu0 %2155
  %2157 = vrot.lane.b32.xlu0 %v2124, 48
  %v2158 = vpop.permute.xlu0 %2157
  %2159 = vrot.lane.b32.xlu0 %v2126, 48
  %v2160 = vpop.permute.xlu0 %2159
  %2161 = vrot.lane.b32.xlu0 %v1484, 48
  %v2162 = vpop.permute.xlu0 %2161
  %2163 = vrot.lane.b32.xlu0 %v2128, 48
  %v2164 = vpop.permute.xlu0 %2163
  %2165 = vrot.lane.b32.xlu0 %v2130, 48
  %v2166 = vpop.permute.xlu0 %2165
  %vm2167 = vcmask 392192
  %v2169 = vsel %vm2167, %v1664, %v2144
  %v2171 = vsel %vm2167, %v1666, %v2146
  %v2173 = vsel %vm2167, %v1668, %v2148
  %v2175 = vsel %vm2167, %v1670, %v2150
  %v2177 = vsel %vm2167, %v1672, %v2152
  %v2179 = vsel %vm2167, %v1674, %v2154
  %v2181 = vsel %vm2167, %v1676, %v2156
  %v2183 = vsel %vm2167, %v1678, %v2158
  %v2185 = vsel %vm2167, %v1680, %v2160
  %v2187 = vsel %vm2167, %v1682, %v2162
  %v2189 = vsel %vm2167, %v1684, %v2164
  %v2191 = vsel %vm2167, %v1686, %v2166
  %v2192 = vld [vmem:[%s1] sm:$0xf]
  %v2193 = vld [vmem:[%s1 + $0x4] sm:$0xf]
  %v2194 = vld [vmem:[%s1 + $0x8] sm:$0xf]
  %v2195 = vld [vmem:[%s1 + $0xc] sm:$0xf]
  %v2196 = vld [vmem:[%s1 + $0x10] sm:$0xf]
  %v2197 = vld [vmem:[%s1 + $0x14] sm:$0xf]
  %v2198 = vld [vmem:[%s1 + $0x18] sm:$0xf]
  %v2199 = vld [vmem:[%s1 + $0x1c] sm:$0xf]
  %v2200 = vld [vmem:[%s1 + $0x20] sm:$0xf]
  %v2201 = vld [vmem:[%s2] sm:$0x1]
  %v2203 = vlaneseq
  %v2204 = vshrl.u32 %v2203, 7
  %v2205 = vsub.s32 0, %v2204
  %v2206 = vrot.slane %v2201, %v2205
  %v2217 = vunpack.c.l.b16 %v2192
  %v2218 = vunpack.c.l.b16 %v2193
  %v2219 = vunpack.c.l.b16 %v2194
  %v2220 = vunpack.c.l.b16 %v2195
  %v2221 = vunpack.c.l.b16 %v2196
  %v2222 = vunpack.c.l.b16 %v2197
  %v2223 = vunpack.c.l.b16 %v2198
  %v2224 = vunpack.c.l.b16 %v2199
  %v2225 = vunpack.c.l.b16 %v2200
  %v2226 = vpack.c.b16 %v2218, %v2217
  %v2227 = vpack.c.b16 %v2220, %v2219
  %v2228 = vpack.c.b16 %v2222, %v2221
  %v2229 = vpack.c.b16 %v2224, %v2223
  %v2230 = vpack.c.b16 %v2225, %v2225
  %vm2235 = vcmask 588800
  %v2236 = vsel %vm2235, %v2169, 0
  %v2238 = vsel %vm2235, %v2171, 0
  %v2240 = vsel %vm2235, %v2173, 0
  %v2242 = vsel %vm2235, %v2175, 0
  %v2244 = vsel %vm2235, %v2177, 0
  %v2246 = vsel %vm2235, %v2179, 0
  %v2248 = vsel %vm2235, %v2181, 0
  %v2250 = vsel %vm2235, %v2183, 0
  %v2252 = vsel %vm2235, %v2185, 0
  %v2254 = vsel %vm2235, %v2187, 0
  %v2256 = vsel %vm2235, %v2189, 0
  %v2258 = vsel %vm2235, %v2191, 0
  %vm2260 = vcmask 1043456
  %v2262 = vsel %vm2260, %v2230, 0
  %2264 = vmatprep.subr.bf16.mxu0 0
  %2265 = vmatpush1.bf16.msra.mxu0 %v2226
  %2266 = vmatprep.subr.bf16.mxu0 0
  %2267 = vmatpush1.bf16.msra.mxu0 %v2227
  %2268 = vmatprep.subr.bf16.mxu0 0
  %2269 = vmatpush1.bf16.msra.mxu0 %v2228
  %2270 = vmatprep.subr.bf16.mxu0 0
  %2271 = vmatpush1.bf16.msra.mxu0 %v2229
  %2272 = vmatprep.subr.bf16.mxu0 0
  %2273 = vmatpush1.bf16.msra.mxu0 %v2262
  %2274 = vmatprep.subr.bf16.mxu0 0
  %2275 = vmatpush1.bf16.msra.mxu0 0
  %2276 = vmatprep.subr.bf16.mxu0 0
  %2277 = vmatpush1.bf16.msra.mxu0 0
  %2278 = vmatprep.subr.bf16.mxu0 0
  %2279 = vmatpush1.bf16.msra.mxu0 0
  %2280 = vmatprep.subr.bf16.mxu0 0
  %2281 = vmatpush1.bf16.msra.mxu0 0
  %2282 = vmatprep.subr.bf16.mxu0 0
  %2283 = vmatpush1.bf16.msra.mxu0 0
  %2284 = vmatprep.subr.bf16.mxu0 0
  %2285 = vmatpush1.bf16.msra.mxu0 0
  %2286 = vmatprep.subr.bf16.mxu0 0
  %2287 = vmatpush1.bf16.msra.mxu0 0
  %2288 = vmatprep.subr.bf16.mxu0 0
  %2289 = vmatpush1.bf16.msra.mxu0 0
  %2290 = vmatprep.subr.bf16.mxu0 0
  %2291 = vmatpush1.bf16.msra.mxu0 0
  %2292 = vmatprep.subr.bf16.mxu0 0
  %2293 = vmatpush1.bf16.msra.mxu0 0
  %2294 = vmatprep.subr.bf16.mxu0 0
  %2295 = vmatpush1.bf16.msra.mxu0 0
  %2296 = vmatprep.mubr.bf16.mxu0 0
  %2297 = vmatmul.mubr.bf16.gmra.mrb[0].mxu0 %v2236
  %v2298 = vpop.f32.mrb[0].mxu0
  %v2299 = vadd.f32 %v2206, %v2298
  %v2300 = vpop.f32.mrb[0].mxu0
  %v2301 = vpop.f32.mrb[0].mxu0
  %v2302 = vadd.f32 %v2206, %v2301
  %v2303 = vpop.f32.mrb[0].mxu0
  %2304 = vmatprep.mubr.bf16.mxu0 0
  %2305 = vmatmul.mubr.bf16.gmra.mrb[0].mxu0 %v2238
  %v2306 = vpop.f32.mrb[0].mxu0
  %v2307 = vadd.f32 %v2206, %v2306
  %v2308 = vpop.f32.mrb[0].mxu0
  %v2309 = vpop.f32.mrb[0].mxu0
  %v2310 = vadd.f32 %v2206, %v2309
  %v2311 = vpop.f32.mrb[0].mxu0
  %2312 = vmatprep.mubr.bf16.mxu0 0
  %2313 = vmatmul.mubr.bf16.gmra.mrb[0].mxu0 %v2240
  %v2314 = vpop.f32.mrb[0].mxu0
  %v2315 = vadd.f32 %v2206, %v2314
  %v2316 = vpop.f32.mrb[0].mxu0
  %v2317 = vpop.f32.mrb[0].mxu0
  %v2318 = vadd.f32 %v2206, %v2317
  %v2319 = vpop.f32.mrb[0].mxu0
  %2320 = vmatprep.mubr.bf16.mxu0 0
  %2321 = vmatmul.mubr.bf16.gmra.mrb[0].mxu0 %v2242
  %v2322 = vpop.f32.mrb[0].mxu0
  %v2323 = vadd.f32 %v2206, %v2322
  %v2324 = vpop.f32.mrb[0].mxu0
  %v2325 = vpop.f32.mrb[0].mxu0
  %v2326 = vadd.f32 %v2206, %v2325
  %v2327 = vpop.f32.mrb[0].mxu0
  %2328 = vmatprep.mubr.bf16.mxu0 0
  %2329 = vmatmul.mubr.bf16.gmra.mrb[0].mxu0 %v2244
  %v2330 = vpop.f32.mrb[0].mxu0
  %v2331 = vadd.f32 %v2206, %v2330
  %v2332 = vpop.f32.mrb[0].mxu0
  %v2333 = vpop.f32.mrb[0].mxu0
  %v2334 = vadd.f32 %v2206, %v2333
  %v2335 = vpop.f32.mrb[0].mxu0
  %2336 = vmatprep.mubr.bf16.mxu0 0
  %2337 = vmatmul.mubr.bf16.gmra.mrb[0].mxu0 %v2246
  %v2338 = vpop.f32.mrb[0].mxu0
  %v2339 = vadd.f32 %v2206, %v2338
  %v2340 = vpop.f32.mrb[0].mxu0
  %v2341 = vpop.f32.mrb[0].mxu0
  %v2342 = vadd.f32 %v2206, %v2341
  %v2343 = vpop.f32.mrb[0].mxu0
  %2344 = vmatprep.mubr.bf16.mxu0 0
  %2345 = vmatmul.mubr.bf16.gmra.mrb[0].mxu0 %v2248
  %v2346 = vpop.f32.mrb[0].mxu0
  %v2347 = vadd.f32 %v2206, %v2346
  %v2348 = vpop.f32.mrb[0].mxu0
  %v2349 = vpop.f32.mrb[0].mxu0
  %v2350 = vadd.f32 %v2206, %v2349
  %v2351 = vpop.f32.mrb[0].mxu0
  %2352 = vmatprep.mubr.bf16.mxu0 0
  %2353 = vmatmul.mubr.bf16.gmra.mrb[0].mxu0 %v2250
  %v2354 = vpop.f32.mrb[0].mxu0
  %v2355 = vadd.f32 %v2206, %v2354
  %v2356 = vpop.f32.mrb[0].mxu0
  %v2357 = vpop.f32.mrb[0].mxu0
  %v2358 = vadd.f32 %v2206, %v2357
  %v2359 = vpop.f32.mrb[0].mxu0
  %2360 = vmatprep.mubr.bf16.mxu0 0
  %2361 = vmatmul.mubr.bf16.gmra.mrb[0].mxu0 %v2252
  %v2362 = vpop.f32.mrb[0].mxu0
  %v2363 = vadd.f32 %v2206, %v2362
  %v2364 = vpop.f32.mrb[0].mxu0
  %v2365 = vpop.f32.mrb[0].mxu0
  %v2366 = vadd.f32 %v2206, %v2365
  %v2367 = vpop.f32.mrb[0].mxu0
  %2368 = vmatprep.mubr.bf16.mxu0 0
  %2369 = vmatmul.mubr.bf16.gmra.mrb[0].mxu0 %v2254
  %v2370 = vpop.f32.mrb[0].mxu0
  %v2371 = vadd.f32 %v2206, %v2370
  %v2372 = vpop.f32.mrb[0].mxu0
  %v2373 = vpop.f32.mrb[0].mxu0
  %v2374 = vadd.f32 %v2206, %v2373
  %v2375 = vpop.f32.mrb[0].mxu0
  %2376 = vmatprep.mubr.bf16.mxu0 0
  %2377 = vmatmul.mubr.bf16.gmra.mrb[0].mxu0 %v2256
  %v2378 = vpop.f32.mrb[0].mxu0
  %v2379 = vadd.f32 %v2206, %v2378
  %v2380 = vpop.f32.mrb[0].mxu0
  %v2381 = vpop.f32.mrb[0].mxu0
  %v2382 = vadd.f32 %v2206, %v2381
  %v2383 = vpop.f32.mrb[0].mxu0
  %2384 = vmatprep.mubr.bf16.mxu0 0
  %2385 = vmatmul.mubr.bf16.gmra.mrb[0].mxu0 %v2258
  %v2386 = vpop.f32.mrb[0].mxu0
  %v2387 = vadd.f32 %v2206, %v2386
  %v2388 = vpop.f32.mrb[0].mxu0
  %v2389 = vpop.f32.mrb[0].mxu0
  %v2390 = vadd.f32 %v2206, %v2389
  %v2391 = vpop.f32.mrb[0].mxu0
  %2392 = vdwg.mxu0
  %v2393 = vmax.f32 %v2299, 0.0
  %v2394 = vmax.f32 %v2302, 0.0
  %v2395 = vmax.f32 %v2307, 0.0
  %v2396 = vmax.f32 %v2310, 0.0
  %v2397 = vmax.f32 %v2315, 0.0
  %v2398 = vmax.f32 %v2318, 0.0
  %v2399 = vmax.f32 %v2323, 0.0
  %v2400 = vmax.f32 %v2326, 0.0
  %v2401 = vmax.f32 %v2331, 0.0
  %v2402 = vmax.f32 %v2334, 0.0
  %v2403 = vmax.f32 %v2339, 0.0
  %v2404 = vmax.f32 %v2342, 0.0
  %v2405 = vmax.f32 %v2347, 0.0
  %v2406 = vmax.f32 %v2350, 0.0
  %v2407 = vmax.f32 %v2355, 0.0
  %v2408 = vmax.f32 %v2358, 0.0
  %v2409 = vmax.f32 %v2363, 0.0
  %v2410 = vmax.f32 %v2366, 0.0
  %v2411 = vmax.f32 %v2371, 0.0
  %v2412 = vmax.f32 %v2374, 0.0
  %v2413 = vmax.f32 %v2379, 0.0
  %v2414 = vmax.f32 %v2382, 0.0
  %v2415 = vmax.f32 %v2387, 0.0
  %v2416 = vmax.f32 %v2390, 0.0
  %v2417 = vpack.c.bf16 %v2394, %v2393
  %v2418 = vpack.c.bf16 %v2396, %v2395
  %v2419 = vpack.c.bf16 %v2398, %v2397
  %v2420 = vpack.c.bf16 %v2400, %v2399
  %v2421 = vpack.c.bf16 %v2402, %v2401
  %v2422 = vpack.c.bf16 %v2404, %v2403
  %v2423 = vpack.c.bf16 %v2406, %v2405
  %v2424 = vpack.c.bf16 %v2408, %v2407
  %v2425 = vpack.c.bf16 %v2410, %v2409
  %v2426 = vpack.c.bf16 %v2412, %v2411
  %v2427 = vpack.c.bf16 %v2414, %v2413
  %v2428 = vpack.c.bf16 %v2416, %v2415
  %v2430 = vshrl.u32 %v2417, 16
  %v2432 = vshll.u32 %v2417, 16
  %v2434 = vrot.slane %v2432, 1
  %v2435 = vor.u32 %v2430, %v2434
  %v2437 = vshll.u32 %v2418, 16
  %v2439 = vrot.slane %v2437, 1
  %v2440 = vsel %vm153, %v2435, %v2439
  %v2441 = vshrl.u32 %v2418, 16
  %v2443 = vor.u32 %v2441, %v2439
  %v2445 = vshll.u32 %v2419, 16
  %v2447 = vrot.slane %v2445, 1
  %v2448 = vsel %vm153, %v2443, %v2447
  %v2450 = vshrl.u32 %v2420, 16
  %v2452 = vshll.u32 %v2420, 16
  %v2454 = vrot.slane %v2452, 1
  %v2455 = vor.u32 %v2450, %v2454
  %v2457 = vshll.u32 %v2421, 16
  %v2459 = vrot.slane %v2457, 1
  %v2460 = vsel %vm153, %v2455, %v2459
  %v2461 = vshrl.u32 %v2421, 16
  %v2463 = vor.u32 %v2461, %v2459
  %v2465 = vshll.u32 %v2422, 16
  %v2467 = vrot.slane %v2465, 1
  %v2468 = vsel %vm153, %v2463, %v2467
  %v2470 = vshrl.u32 %v2423, 16
  %v2472 = vshll.u32 %v2423, 16
  %v2474 = vrot.slane %v2472, 1
  %v2475 = vor.u32 %v2470, %v2474
  %v2477 = vshll.u32 %v2424, 16
  %v2479 = vrot.slane %v2477, 1
  %v2480 = vsel %vm153, %v2475, %v2479
  %v2481 = vshrl.u32 %v2424, 16
  %v2483 = vor.u32 %v2481, %v2479
  %v2485 = vshll.u32 %v2425, 16
  %v2487 = vrot.slane %v2485, 1
  %v2488 = vsel %vm153, %v2483, %v2487
  %v2490 = vshrl.u32 %v2426, 16
  %v2492 = vshll.u32 %v2426, 16
  %v2494 = vrot.slane %v2492, 1
  %v2495 = vor.u32 %v2490, %v2494
  %v2497 = vshll.u32 %v2427, 16
  %v2499 = vrot.slane %v2497, 1
  %v2500 = vsel %vm153, %v2495, %v2499
  %v2501 = vshrl.u32 %v2427, 16
  %v2503 = vor.u32 %v2501, %v2499
  %v2505 = vshll.u32 %v2428, 16
  %v2507 = vrot.slane %v2505, 1
  %v2508 = vsel %vm153, %v2503, %v2507
  %2509 = vrot.lane.b32.xlu0 %v2440, 32
  %v2510 = vpop.permute.xlu0 %2509
  %2511 = vrot.lane.b32.xlu0 %v2448, 32
  %v2512 = vpop.permute.xlu0 %2511
  %2513 = vrot.lane.b32.xlu0 %v2460, 32
  %v2514 = vpop.permute.xlu0 %2513
  %2515 = vrot.lane.b32.xlu0 %v2468, 32
  %v2516 = vpop.permute.xlu0 %2515
  %2517 = vrot.lane.b32.xlu0 %v2480, 32
  %v2518 = vpop.permute.xlu0 %2517
  %2519 = vrot.lane.b32.xlu0 %v2488, 32
  %v2520 = vpop.permute.xlu0 %2519
  %2521 = vrot.lane.b32.xlu0 %v2500, 32
  %v2522 = vpop.permute.xlu0 %2521
  %2523 = vrot.lane.b32.xlu0 %v2508, 32
  %v2524 = vpop.permute.xlu0 %2523
  %v2537 = vrot.slane %v2417, 1
  %v2538 = vrot.slane %v2418, 1
  %v2539 = vsel %vm290, %v2537, %v2538
  %v2540 = vrot.slane %v2419, 1
  %v2541 = vsel %vm290, %v2538, %v2540
  %v2542 = vrot.slane %v2420, 1
  %v2543 = vrot.slane %v2421, 1
  %v2544 = vsel %vm290, %v2542, %v2543
  %v2545 = vrot.slane %v2422, 1
  %v2546 = vsel %vm290, %v2543, %v2545
  %v2547 = vrot.slane %v2423, 1
  %v2548 = vrot.slane %v2424, 1
  %v2549 = vsel %vm290, %v2547, %v2548
  %v2550 = vrot.slane %v2425, 1
  %v2551 = vsel %vm290, %v2548, %v2550
  %v2552 = vrot.slane %v2426, 1
  %v2553 = vrot.slane %v2427, 1
  %v2554 = vsel %vm290, %v2552, %v2553
  %v2555 = vrot.slane %v2428, 1
  %v2556 = vsel %vm290, %v2553, %v2555
  %2557 = vrot.lane.b32.xlu0 %v2539, 64
  %v2558 = vpop.permute.xlu0 %2557
  %2559 = vrot.lane.b32.xlu0 %v2541, 64
  %v2560 = vpop.permute.xlu0 %2559
  %2561 = vrot.lane.b32.xlu0 %v2544, 64
  %v2562 = vpop.permute.xlu0 %2561
  %2563 = vrot.lane.b32.xlu0 %v2546, 64
  %v2564 = vpop.permute.xlu0 %2563
  %2565 = vrot.lane.b32.xlu0 %v2549, 64
  %v2566 = vpop.permute.xlu0 %2565
  %2567 = vrot.lane.b32.xlu0 %v2551, 64
  %v2568 = vpop.permute.xlu0 %2567
  %2569 = vrot.lane.b32.xlu0 %v2554, 64
  %v2570 = vpop.permute.xlu0 %2569
  %2571 = vrot.lane.b32.xlu0 %v2556, 64
  %v2572 = vpop.permute.xlu0 %2571
  %v2573 = vrot.slane %v2430, 1
  %v2574 = vrot.slane %v2432, 2
  %v2575 = vor.u32 %v2573, %v2574
  %v2576 = vrot.slane %v2441, 1
  %v2577 = vrot.slane %v2437, 2
  %v2578 = vor.u32 %v2576, %v2577
  %v2579 = vsel %vm343, %v2575, %v2578
  %v2580 = vshrl.u32 %v2419, 16
  %v2582 = vrot.slane %v2580, 1
  %v2583 = vrot.slane %v2445, 2
  %v2584 = vor.u32 %v2582, %v2583
  %v2585 = vsel %vm343, %v2578, %v2584
  %v2586 = vrot.slane %v2450, 1
  %v2587 = vrot.slane %v2452, 2
  %v2588 = vor.u32 %v2586, %v2587
  %v2589 = vrot.slane %v2461, 1
  %v2590 = vrot.slane %v2457, 2
  %v2591 = vor.u32 %v2589, %v2590
  %v2592 = vsel %vm343, %v2588, %v2591
  %v2593 = vshrl.u32 %v2422, 16
  %v2595 = vrot.slane %v2593, 1
  %v2596 = vrot.slane %v2465, 2
  %v2597 = vor.u32 %v2595, %v2596
  %v2598 = vsel %vm343, %v2591, %v2597
  %v2599 = vrot.slane %v2470, 1
  %v2600 = vrot.slane %v2472, 2
  %v2601 = vor.u32 %v2599, %v2600
  %v2602 = vrot.slane %v2481, 1
  %v2603 = vrot.slane %v2477, 2
  %v2604 = vor.u32 %v2602, %v2603
  %v2605 = vsel %vm343, %v2601, %v2604
  %v2606 = vshrl.u32 %v2425, 16
  %v2608 = vrot.slane %v2606, 1
  %v2609 = vrot.slane %v2485, 2
  %v2610 = vor.u32 %v2608, %v2609
  %v2611 = vsel %vm343, %v2604, %v2610
  %v2612 = vrot.slane %v2490, 1
  %v2613 = vrot.slane %v2492, 2
  %v2614 = vor.u32 %v2612, %v2613
  %v2615 = vrot.slane %v2501, 1
  %v2616 = vrot.slane %v2497, 2
  %v2617 = vor.u32 %v2615, %v2616
  %v2618 = vsel %vm343, %v2614, %v2617
  %v2619 = vshrl.u32 %v2428, 16
  %v2621 = vrot.slane %v2619, 1
  %v2622 = vrot.slane %v2505, 2
  %v2623 = vor.u32 %v2621, %v2622
  %v2624 = vsel %vm343, %v2617, %v2623
  %2625 = vrot.lane.b32.xlu0 %v2579, 96
  %v2626 = vpop.permute.xlu0 %2625
  %2627 = vrot.lane.b32.xlu0 %v2585, 96
  %v2628 = vpop.permute.xlu0 %2627
  %2629 = vrot.lane.b32.xlu0 %v2592, 96
  %v2630 = vpop.permute.xlu0 %2629
  %2631 = vrot.lane.b32.xlu0 %v2598, 96
  %v2632 = vpop.permute.xlu0 %2631
  %2633 = vrot.lane.b32.xlu0 %v2605, 96
  %v2634 = vpop.permute.xlu0 %2633
  %2635 = vrot.lane.b32.xlu0 %v2611, 96
  %v2636 = vpop.permute.xlu0 %2635
  %2637 = vrot.lane.b32.xlu0 %v2618, 96
  %v2638 = vpop.permute.xlu0 %2637
  %2639 = vrot.lane.b32.xlu0 %v2624, 96
  %v2640 = vpop.permute.xlu0 %2639
  %v2641 = vrot.slane %v2417, 2
  %v2642 = vrot.slane %v2418, 2
  %v2643 = vsel %vm436, %v2641, %v2642
  %v2644 = vrot.slane %v2419, 2
  %v2645 = vsel %vm436, %v2642, %v2644
  %v2646 = vrot.slane %v2420, 2
  %v2647 = vrot.slane %v2421, 2
  %v2648 = vsel %vm436, %v2646, %v2647
  %v2649 = vrot.slane %v2422, 2
  %v2650 = vsel %vm436, %v2647, %v2649
  %v2651 = vrot.slane %v2423, 2
  %v2652 = vrot.slane %v2424, 2
  %v2653 = vsel %vm436, %v2651, %v2652
  %v2654 = vrot.slane %v2425, 2
  %v2655 = vsel %vm436, %v2652, %v2654
  %v2656 = vrot.slane %v2426, 2
  %v2657 = vrot.slane %v2427, 2
  %v2658 = vsel %vm436, %v2656, %v2657
  %v2659 = vrot.slane %v2428, 2
  %v2660 = vsel %vm436, %v2657, %v2659
  %v2661 = vrot.slane %v2430, 2
  %v2662 = vrot.slane %v2432, 3
  %v2663 = vor.u32 %v2661, %v2662
  %v2664 = vrot.slane %v2441, 2
  %v2665 = vrot.slane %v2437, 3
  %v2666 = vor.u32 %v2664, %v2665
  %v2667 = vsel %vm489, %v2663, %v2666
  %v2668 = vrot.slane %v2580, 2
  %v2669 = vrot.slane %v2445, 3
  %v2670 = vor.u32 %v2668, %v2669
  %v2671 = vsel %vm489, %v2666, %v2670
  %v2672 = vrot.slane %v2450, 2
  %v2673 = vrot.slane %v2452, 3
  %v2674 = vor.u32 %v2672, %v2673
  %v2675 = vrot.slane %v2461, 2
  %v2676 = vrot.slane %v2457, 3
  %v2677 = vor.u32 %v2675, %v2676
  %v2678 = vsel %vm489, %v2674, %v2677
  %v2679 = vrot.slane %v2593, 2
  %v2680 = vrot.slane %v2465, 3
  %v2681 = vor.u32 %v2679, %v2680
  %v2682 = vsel %vm489, %v2677, %v2681
  %v2683 = vrot.slane %v2470, 2
  %v2684 = vrot.slane %v2472, 3
  %v2685 = vor.u32 %v2683, %v2684
  %v2686 = vrot.slane %v2481, 2
  %v2687 = vrot.slane %v2477, 3
  %v2688 = vor.u32 %v2686, %v2687
  %v2689 = vsel %vm489, %v2685, %v2688
  %v2690 = vrot.slane %v2606, 2
  %v2691 = vrot.slane %v2485, 3
  %v2692 = vor.u32 %v2690, %v2691
  %v2693 = vsel %vm489, %v2688, %v2692
  %v2694 = vrot.slane %v2490, 2
  %v2695 = vrot.slane %v2492, 3
  %v2696 = vor.u32 %v2694, %v2695
  %v2697 = vrot.slane %v2501, 2
  %v2698 = vrot.slane %v2497, 3
  %v2699 = vor.u32 %v2697, %v2698
  %v2700 = vsel %vm489, %v2696, %v2699
  %v2701 = vrot.slane %v2619, 2
  %v2702 = vrot.slane %v2505, 3
  %v2703 = vor.u32 %v2701, %v2702
  %v2704 = vsel %vm489, %v2699, %v2703
  %2705 = vrot.lane.b32.xlu0 %v2667, 32
  %v2706 = vpop.permute.xlu0 %2705
  %2707 = vrot.lane.b32.xlu0 %v2671, 32
  %v2708 = vpop.permute.xlu0 %2707
  %2709 = vrot.lane.b32.xlu0 %v2678, 32
  %v2710 = vpop.permute.xlu0 %2709
  %2711 = vrot.lane.b32.xlu0 %v2682, 32
  %v2712 = vpop.permute.xlu0 %2711
  %2713 = vrot.lane.b32.xlu0 %v2689, 32
  %v2714 = vpop.permute.xlu0 %2713
  %2715 = vrot.lane.b32.xlu0 %v2693, 32
  %v2716 = vpop.permute.xlu0 %2715
  %2717 = vrot.lane.b32.xlu0 %v2700, 32
  %v2718 = vpop.permute.xlu0 %2717
  %2719 = vrot.lane.b32.xlu0 %v2704, 32
  %v2720 = vpop.permute.xlu0 %2719
  %v2721 = vrot.slane %v2417, 3
  %v2722 = vrot.slane %v2418, 3
  %v2723 = vsel %vm574, %v2721, %v2722
  %v2724 = vrot.slane %v2419, 3
  %v2725 = vsel %vm574, %v2722, %v2724
  %v2726 = vrot.slane %v2420, 3
  %v2727 = vrot.slane %v2421, 3
  %v2728 = vsel %vm574, %v2726, %v2727
  %v2729 = vrot.slane %v2422, 3
  %v2730 = vsel %vm574, %v2727, %v2729
  %v2731 = vrot.slane %v2423, 3
  %v2732 = vrot.slane %v2424, 3
  %v2733 = vsel %vm574, %v2731, %v2732
  %v2734 = vrot.slane %v2425, 3
  %v2735 = vsel %vm574, %v2732, %v2734
  %v2736 = vrot.slane %v2426, 3
  %v2737 = vrot.slane %v2427, 3
  %v2738 = vsel %vm574, %v2736, %v2737
  %v2739 = vrot.slane %v2428, 3
  %v2740 = vsel %vm574, %v2737, %v2739
  %2741 = vrot.lane.b32.xlu0 %v2723, 64
  %v2742 = vpop.permute.xlu0 %2741
  %2743 = vrot.lane.b32.xlu0 %v2725, 64
  %v2744 = vpop.permute.xlu0 %2743
  %2745 = vrot.lane.b32.xlu0 %v2728, 64
  %v2746 = vpop.permute.xlu0 %2745
  %2747 = vrot.lane.b32.xlu0 %v2730, 64
  %v2748 = vpop.permute.xlu0 %2747
  %2749 = vrot.lane.b32.xlu0 %v2733, 64
  %v2750 = vpop.permute.xlu0 %2749
  %2751 = vrot.lane.b32.xlu0 %v2735, 64
  %v2752 = vpop.permute.xlu0 %2751
  %2753 = vrot.lane.b32.xlu0 %v2738, 64
  %v2754 = vpop.permute.xlu0 %2753
  %2755 = vrot.lane.b32.xlu0 %v2740, 64
  %v2756 = vpop.permute.xlu0 %2755
  %v2757 = vrot.slane %v2430, 3
  %v2758 = vrot.slane %v2432, 4
  %v2759 = vor.u32 %v2757, %v2758
  %v2760 = vrot.slane %v2441, 3
  %v2761 = vrot.slane %v2437, 4
  %v2762 = vor.u32 %v2760, %v2761
  %v2763 = vsel %vm627, %v2759, %v2762
  %v2764 = vrot.slane %v2580, 3
  %v2765 = vrot.slane %v2445, 4
  %v2766 = vor.u32 %v2764, %v2765
  %v2767 = vsel %vm627, %v2762, %v2766
  %v2768 = vrot.slane %v2450, 3
  %v2769 = vrot.slane %v2452, 4
  %v2770 = vor.u32 %v2768, %v2769
  %v2771 = vrot.slane %v2461, 3
  %v2772 = vrot.slane %v2457, 4
  %v2773 = vor.u32 %v2771, %v2772
  %v2774 = vsel %vm627, %v2770, %v2773
  %v2775 = vrot.slane %v2593, 3
  %v2776 = vrot.slane %v2465, 4
  %v2777 = vor.u32 %v2775, %v2776
  %v2778 = vsel %vm627, %v2773, %v2777
  %v2779 = vrot.slane %v2470, 3
  %v2780 = vrot.slane %v2472, 4
  %v2781 = vor.u32 %v2779, %v2780
  %v2782 = vrot.slane %v2481, 3
  %v2783 = vrot.slane %v2477, 4
  %v2784 = vor.u32 %v2782, %v2783
  %v2785 = vsel %vm627, %v2781, %v2784
  %v2786 = vrot.slane %v2606, 3
  %v2787 = vrot.slane %v2485, 4
  %v2788 = vor.u32 %v2786, %v2787
  %v2789 = vsel %vm627, %v2784, %v2788
  %v2790 = vrot.slane %v2490, 3
  %v2791 = vrot.slane %v2492, 4
  %v2792 = vor.u32 %v2790, %v2791
  %v2793 = vrot.slane %v2501, 3
  %v2794 = vrot.slane %v2497, 4
  %v2795 = vor.u32 %v2793, %v2794
  %v2796 = vsel %vm627, %v2792, %v2795
  %v2797 = vrot.slane %v2619, 3
  %v2798 = vrot.slane %v2505, 4
  %v2799 = vor.u32 %v2797, %v2798
  %v2800 = vsel %vm627, %v2795, %v2799
  %2801 = vrot.lane.b32.xlu0 %v2763, 96
  %v2802 = vpop.permute.xlu0 %2801
  %2803 = vrot.lane.b32.xlu0 %v2767, 96
  %v2804 = vpop.permute.xlu0 %2803
  %2805 = vrot.lane.b32.xlu0 %v2774, 96
  %v2806 = vpop.permute.xlu0 %2805
  %2807 = vrot.lane.b32.xlu0 %v2778, 96
  %v2808 = vpop.permute.xlu0 %2807
  %2809 = vrot.lane.b32.xlu0 %v2785, 96
  %v2810 = vpop.permute.xlu0 %2809
  %2811 = vrot.lane.b32.xlu0 %v2789, 96
  %v2812 = vpop.permute.xlu0 %2811
  %2813 = vrot.lane.b32.xlu0 %v2796, 96
  %v2814 = vpop.permute.xlu0 %2813
  %2815 = vrot.lane.b32.xlu0 %v2800, 96
  %v2816 = vpop.permute.xlu0 %2815
  %vm2817 = vcmask 1043456
  %v2818 = vrot.slane %v2417, 4
  %v2819 = vrot.slane %v2418, 4
  %v2820 = vsel %vm2817, %v2818, %v2819
  %v2821 = vrot.slane %v2419, 4
  %v2822 = vsel %vm2817, %v2819, %v2821
  %v2823 = vrot.slane %v2420, 4
  %v2824 = vrot.slane %v2421, 4
  %v2825 = vsel %vm2817, %v2823, %v2824
  %v2826 = vrot.slane %v2422, 4
  %v2827 = vsel %vm2817, %v2824, %v2826
  %v2828 = vrot.slane %v2423, 4
  %v2829 = vrot.slane %v2424, 4
  %v2830 = vsel %vm2817, %v2828, %v2829
  %v2831 = vrot.slane %v2425, 4
  %v2832 = vsel %vm2817, %v2829, %v2831
  %v2833 = vrot.slane %v2426, 4
  %v2834 = vrot.slane %v2427, 4
  %v2835 = vsel %vm2817, %v2833, %v2834
  %v2836 = vrot.slane %v2428, 4
  %v2837 = vsel %vm2817, %v2834, %v2836
  %vm2838 = vsmask.f32 3328
  %v2839 = vrot.slane %v2430, 4
  %v2840 = vrot.slane %v2432, 5
  %v2841 = vor.u32 %v2839, %v2840
  %v2842 = vrot.slane %v2441, 4
  %v2843 = vrot.slane %v2437, 5
  %v2844 = vor.u32 %v2842, %v2843
  %v2845 = vsel %vm2838, %v2841, %v2844
  %v2846 = vrot.slane %v2580, 4
  %v2847 = vrot.slane %v2445, 5
  %v2848 = vor.u32 %v2846, %v2847
  %v2849 = vsel %vm2838, %v2844, %v2848
  %v2850 = vrot.slane %v2450, 4
  %v2851 = vrot.slane %v2452, 5
  %v2852 = vor.u32 %v2850, %v2851
  %v2853 = vrot.slane %v2461, 4
  %v2854 = vrot.slane %v2457, 5
  %v2855 = vor.u32 %v2853, %v2854
  %v2856 = vsel %vm2838, %v2852, %v2855
  %v2857 = vrot.slane %v2593, 4
  %v2858 = vrot.slane %v2465, 5
  %v2859 = vor.u32 %v2857, %v2858
  %v2860 = vsel %vm2838, %v2855, %v2859
  %v2861 = vrot.slane %v2470, 4
  %v2862 = vrot.slane %v2472, 5
  %v2863 = vor.u32 %v2861, %v2862
  %v2864 = vrot.slane %v2481, 4
  %v2865 = vrot.slane %v2477, 5
  %v2866 = vor.u32 %v2864, %v2865
  %v2867 = vsel %vm2838, %v2863, %v2866
  %v2868 = vrot.slane %v2606, 4
  %v2869 = vrot.slane %v2485, 5
  %v2870 = vor.u32 %v2868, %v2869
  %v2871 = vsel %vm2838, %v2866, %v2870
  %v2872 = vrot.slane %v2490, 4
  %v2873 = vrot.slane %v2492, 5
  %v2874 = vor.u32 %v2872, %v2873
  %v2875 = vrot.slane %v2501, 4
  %v2876 = vrot.slane %v2497, 5
  %v2877 = vor.u32 %v2875, %v2876
  %v2878 = vsel %vm2838, %v2874, %v2877
  %v2879 = vrot.slane %v2619, 4
  %v2880 = vrot.slane %v2505, 5
  %v2881 = vor.u32 %v2879, %v2880
  %v2882 = vsel %vm2838, %v2877, %v2881
  %2883 = vrot.lane.b32.xlu0 %v2845, 32
  %v2884 = vpop.permute.xlu0 %2883
  %2885 = vrot.lane.b32.xlu0 %v2849, 32
  %v2886 = vpop.permute.xlu0 %2885
  %2887 = vrot.lane.b32.xlu0 %v2856, 32
  %v2888 = vpop.permute.xlu0 %2887
  %2889 = vrot.lane.b32.xlu0 %v2860, 32
  %v2890 = vpop.permute.xlu0 %2889
  %2891 = vrot.lane.b32.xlu0 %v2867, 32
  %v2892 = vpop.permute.xlu0 %2891
  %2893 = vrot.lane.b32.xlu0 %v2871, 32
  %v2894 = vpop.permute.xlu0 %2893
  %2895 = vrot.lane.b32.xlu0 %v2878, 32
  %v2896 = vpop.permute.xlu0 %2895
  %2897 = vrot.lane.b32.xlu0 %v2882, 32
  %v2898 = vpop.permute.xlu0 %2897
  %vm2899 = vcmask 1042432
  %v2900 = vrot.slane %v2417, 5
  %v2901 = vrot.slane %v2418, 5
  %v2902 = vsel %vm2899, %v2900, %v2901
  %v2903 = vrot.slane %v2419, 5
  %v2904 = vsel %vm2899, %v2901, %v2903
  %v2905 = vrot.slane %v2420, 5
  %v2906 = vrot.slane %v2421, 5
  %v2907 = vsel %vm2899, %v2905, %v2906
  %v2908 = vrot.slane %v2422, 5
  %v2909 = vsel %vm2899, %v2906, %v2908
  %v2910 = vrot.slane %v2423, 5
  %v2911 = vrot.slane %v2424, 5
  %v2912 = vsel %vm2899, %v2910, %v2911
  %v2913 = vrot.slane %v2425, 5
  %v2914 = vsel %vm2899, %v2911, %v2913
  %v2915 = vrot.slane %v2426, 5
  %v2916 = vrot.slane %v2427, 5
  %v2917 = vsel %vm2899, %v2915, %v2916
  %v2918 = vrot.slane %v2428, 5
  %v2919 = vsel %vm2899, %v2916, %v2918
  %2920 = vrot.lane.b32.xlu0 %v2902, 64
  %v2921 = vpop.permute.xlu0 %2920
  %2922 = vrot.lane.b32.xlu0 %v2904, 64
  %v2923 = vpop.permute.xlu0 %2922
  %2924 = vrot.lane.b32.xlu0 %v2907, 64
  %v2925 = vpop.permute.xlu0 %2924
  %2926 = vrot.lane.b32.xlu0 %v2909, 64
  %v2927 = vpop.permute.xlu0 %2926
  %2928 = vrot.lane.b32.xlu0 %v2912, 64
  %v2929 = vpop.permute.xlu0 %2928
  %2930 = vrot.lane.b32.xlu0 %v2914, 64
  %v2931 = vpop.permute.xlu0 %2930
  %2932 = vrot.lane.b32.xlu0 %v2917, 64
  %v2933 = vpop.permute.xlu0 %2932
  %2934 = vrot.lane.b32.xlu0 %v2919, 64
  %v2935 = vpop.permute.xlu0 %2934
  %vm2936 = vsmask.f32 2304
  %v2937 = vrot.slane %v2430, 5
  %v2938 = vrot.slane %v2432, 6
  %v2939 = vor.u32 %v2937, %v2938
  %v2940 = vrot.slane %v2441, 5
  %v2941 = vrot.slane %v2437, 6
  %v2942 = vor.u32 %v2940, %v2941
  %v2943 = vsel %vm2936, %v2939, %v2942
  %v2944 = vrot.slane %v2580, 5
  %v2945 = vrot.slane %v2445, 6
  %v2946 = vor.u32 %v2944, %v2945
  %v2947 = vsel %vm2936, %v2942, %v2946
  %v2948 = vrot.slane %v2450, 5
  %v2949 = vrot.slane %v2452, 6
  %v2950 = vor.u32 %v2948, %v2949
  %v2951 = vrot.slane %v2461, 5
  %v2952 = vrot.slane %v2457, 6
  %v2953 = vor.u32 %v2951, %v2952
  %v2954 = vsel %vm2936, %v2950, %v2953
  %v2955 = vrot.slane %v2593, 5
  %v2956 = vrot.slane %v2465, 6
  %v2957 = vor.u32 %v2955, %v2956
  %v2958 = vsel %vm2936, %v2953, %v2957
  %v2959 = vrot.slane %v2470, 5
  %v2960 = vrot.slane %v2472, 6
  %v2961 = vor.u32 %v2959, %v2960
  %v2962 = vrot.slane %v2481, 5
  %v2963 = vrot.slane %v2477, 6
  %v2964 = vor.u32 %v2962, %v2963
  %v2965 = vsel %vm2936, %v2961, %v2964
  %v2966 = vrot.slane %v2606, 5
  %v2967 = vrot.slane %v2485, 6
  %v2968 = vor.u32 %v2966, %v2967
  %v2969 = vsel %vm2936, %v2964, %v2968
  %v2970 = vrot.slane %v2490, 5
  %v2971 = vrot.slane %v2492, 6
  %v2972 = vor.u32 %v2970, %v2971
  %v2973 = vrot.slane %v2501, 5
  %v2974 = vrot.slane %v2497, 6
  %v2975 = vor.u32 %v2973, %v2974
  %v2976 = vsel %vm2936, %v2972, %v2975
  %v2977 = vrot.slane %v2619, 5
  %v2978 = vrot.slane %v2505, 6
  %v2979 = vor.u32 %v2977, %v2978
  %v2980 = vsel %vm2936, %v2975, %v2979
  %2981 = vrot.lane.b32.xlu0 %v2943, 96
  %v2982 = vpop.permute.xlu0 %2981
  %2983 = vrot.lane.b32.xlu0 %v2947, 96
  %v2984 = vpop.permute.xlu0 %2983
  %2985 = vrot.lane.b32.xlu0 %v2954, 96
  %v2986 = vpop.permute.xlu0 %2985
  %2987 = vrot.lane.b32.xlu0 %v2958, 96
  %v2988 = vpop.permute.xlu0 %2987
  %2989 = vrot.lane.b32.xlu0 %v2965, 96
  %v2990 = vpop.permute.xlu0 %2989
  %2991 = vrot.lane.b32.xlu0 %v2969, 96
  %v2992 = vpop.permute.xlu0 %2991
  %2993 = vrot.lane.b32.xlu0 %v2976, 96
  %v2994 = vpop.permute.xlu0 %2993
  %2995 = vrot.lane.b32.xlu0 %v2980, 96
  %v2996 = vpop.permute.xlu0 %2995
  %vm2997 = vcmask 1041408
  %v2998 = vrot.slane %v2417, 6
  %v2999 = vrot.slane %v2418, 6
  %v3000 = vsel %vm2997, %v2998, %v2999
  %v3001 = vrot.slane %v2419, 6
  %v3002 = vsel %vm2997, %v2999, %v3001
  %v3003 = vrot.slane %v2420, 6
  %v3004 = vrot.slane %v2421, 6
  %v3005 = vsel %vm2997, %v3003, %v3004
  %v3006 = vrot.slane %v2422, 6
  %v3007 = vsel %vm2997, %v3004, %v3006
  %v3008 = vrot.slane %v2423, 6
  %v3009 = vrot.slane %v2424, 6
  %v3010 = vsel %vm2997, %v3008, %v3009
  %v3011 = vrot.slane %v2425, 6
  %v3012 = vsel %vm2997, %v3009, %v3011
  %v3013 = vrot.slane %v2426, 6
  %v3014 = vrot.slane %v2427, 6
  %v3015 = vsel %vm2997, %v3013, %v3014
  %v3016 = vrot.slane %v2428, 6
  %v3017 = vsel %vm2997, %v3014, %v3016
  %vm3018 = vsmask.f32 1280
  %v3019 = vrot.slane %v2430, 6
  %v3020 = vrot.slane %v2432, 7
  %v3021 = vor.u32 %v3019, %v3020
  %v3022 = vrot.slane %v2441, 6
  %v3023 = vrot.slane %v2437, 7
  %v3024 = vor.u32 %v3022, %v3023
  %v3025 = vsel %vm3018, %v3021, %v3024
  %v3026 = vrot.slane %v2580, 6
  %v3027 = vrot.slane %v2445, 7
  %v3028 = vor.u32 %v3026, %v3027
  %v3029 = vsel %vm3018, %v3024, %v3028
  %v3030 = vrot.slane %v2450, 6
  %v3031 = vrot.slane %v2452, 7
  %v3032 = vor.u32 %v3030, %v3031
  %v3033 = vrot.slane %v2461, 6
  %v3034 = vrot.slane %v2457, 7
  %v3035 = vor.u32 %v3033, %v3034
  %v3036 = vsel %vm3018, %v3032, %v3035
  %v3037 = vrot.slane %v2593, 6
  %v3038 = vrot.slane %v2465, 7
  %v3039 = vor.u32 %v3037, %v3038
  %v3040 = vsel %vm3018, %v3035, %v3039
  %v3041 = vrot.slane %v2470, 6
  %v3042 = vrot.slane %v2472, 7
  %v3043 = vor.u32 %v3041, %v3042
  %v3044 = vrot.slane %v2481, 6
  %v3045 = vrot.slane %v2477, 7
  %v3046 = vor.u32 %v3044, %v3045
  %v3047 = vsel %vm3018, %v3043, %v3046
  %v3048 = vrot.slane %v2606, 6
  %v3049 = vrot.slane %v2485, 7
  %v3050 = vor.u32 %v3048, %v3049
  %v3051 = vsel %vm3018, %v3046, %v3050
  %v3052 = vrot.slane %v2490, 6
  %v3053 = vrot.slane %v2492, 7
  %v3054 = vor.u32 %v3052, %v3053
  %v3055 = vrot.slane %v2501, 6
  %v3056 = vrot.slane %v2497, 7
  %v3057 = vor.u32 %v3055, %v3056
  %v3058 = vsel %vm3018, %v3054, %v3057
  %v3059 = vrot.slane %v2619, 6
  %v3060 = vrot.slane %v2505, 7
  %v3061 = vor.u32 %v3059, %v3060
  %v3062 = vsel %vm3018, %v3057, %v3061
  %3063 = vrot.lane.b32.xlu0 %v3025, 32
  %v3064 = vpop.permute.xlu0 %3063
  %3065 = vrot.lane.b32.xlu0 %v3029, 32
  %v3066 = vpop.permute.xlu0 %3065
  %3067 = vrot.lane.b32.xlu0 %v3036, 32
  %v3068 = vpop.permute.xlu0 %3067
  %3069 = vrot.lane.b32.xlu0 %v3040, 32
  %v3070 = vpop.permute.xlu0 %3069
  %3071 = vrot.lane.b32.xlu0 %v3047, 32
  %v3072 = vpop.permute.xlu0 %3071
  %3073 = vrot.lane.b32.xlu0 %v3051, 32
  %v3074 = vpop.permute.xlu0 %3073
  %3075 = vrot.lane.b32.xlu0 %v3058, 32
  %v3076 = vpop.permute.xlu0 %3075
  %3077 = vrot.lane.b32.xlu0 %v3062, 32
  %v3078 = vpop.permute.xlu0 %3077
  %vm3079 = vcmask 1040384
  %v3080 = vrot.slane %v2417, 7
  %v3081 = vrot.slane %v2418, 7
  %v3082 = vsel %vm3079, %v3080, %v3081
  %v3083 = vrot.slane %v2419, 7
  %v3084 = vsel %vm3079, %v3081, %v3083
  %v3085 = vrot.slane %v2420, 7
  %v3086 = vrot.slane %v2421, 7
  %v3087 = vsel %vm3079, %v3085, %v3086
  %v3088 = vrot.slane %v2422, 7
  %v3089 = vsel %vm3079, %v3086, %v3088
  %v3090 = vrot.slane %v2423, 7
  %v3091 = vrot.slane %v2424, 7
  %v3092 = vsel %vm3079, %v3090, %v3091
  %v3093 = vrot.slane %v2425, 7
  %v3094 = vsel %vm3079, %v3091, %v3093
  %v3095 = vrot.slane %v2426, 7
  %v3096 = vrot.slane %v2427, 7
  %v3097 = vsel %vm3079, %v3095, %v3096
  %v3098 = vrot.slane %v2428, 7
  %v3099 = vsel %vm3079, %v3096, %v3098
  %3100 = vrot.lane.b32.xlu0 %v3082, 64
  %v3101 = vpop.permute.xlu0 %3100
  %3102 = vrot.lane.b32.xlu0 %v3084, 64
  %v3103 = vpop.permute.xlu0 %3102
  %3104 = vrot.lane.b32.xlu0 %v3087, 64
  %v3105 = vpop.permute.xlu0 %3104
  %3106 = vrot.lane.b32.xlu0 %v3089, 64
  %v3107 = vpop.permute.xlu0 %3106
  %3108 = vrot.lane.b32.xlu0 %v3092, 64
  %v3109 = vpop.permute.xlu0 %3108
  %3110 = vrot.lane.b32.xlu0 %v3094, 64
  %v3111 = vpop.permute.xlu0 %3110
  %3112 = vrot.lane.b32.xlu0 %v3097, 64
  %v3113 = vpop.permute.xlu0 %3112
  %3114 = vrot.lane.b32.xlu0 %v3099, 64
  %v3115 = vpop.permute.xlu0 %3114
  %vm3116 = vsmask.f32 256
  %v3117 = vrot.slane %v2430, 7
  %v3118 = vrot.slane %v2441, 7
  %v3119 = vor.u32 %v3118, %v2437
  %v3120 = vsel %vm3116, %v3117, %v3119
  %v3121 = vrot.slane %v2580, 7
  %v3122 = vor.u32 %v3121, %v2445
  %v3123 = vsel %vm3116, %v3118, %v3122
  %v3124 = vrot.slane %v2450, 7
  %v3125 = vrot.slane %v2461, 7
  %v3126 = vor.u32 %v3125, %v2457
  %v3127 = vsel %vm3116, %v3124, %v3126
  %v3128 = vrot.slane %v2593, 7
  %v3129 = vor.u32 %v3128, %v2465
  %v3130 = vsel %vm3116, %v3125, %v3129
  %v3131 = vrot.slane %v2470, 7
  %v3132 = vrot.slane %v2481, 7
  %v3133 = vor.u32 %v3132, %v2477
  %v3134 = vsel %vm3116, %v3131, %v3133
  %v3135 = vrot.slane %v2606, 7
  %v3136 = vor.u32 %v3135, %v2485
  %v3137 = vsel %vm3116, %v3132, %v3136
  %v3138 = vrot.slane %v2490, 7
  %v3139 = vrot.slane %v2501, 7
  %v3140 = vor.u32 %v3139, %v2497
  %v3141 = vsel %vm3116, %v3138, %v3140
  %v3142 = vrot.slane %v2619, 7
  %v3143 = vor.u32 %v3142, %v2505
  %v3144 = vsel %vm3116, %v3139, %v3143
  %3145 = vrot.lane.b32.xlu0 %v3120, 96
  %v3146 = vpop.permute.xlu0 %3145
  %3147 = vrot.lane.b32.xlu0 %v3123, 96
  %v3148 = vpop.permute.xlu0 %3147
  %3149 = vrot.lane.b32.xlu0 %v3127, 96
  %v3150 = vpop.permute.xlu0 %3149
  %3151 = vrot.lane.b32.xlu0 %v3130, 96
  %v3152 = vpop.permute.xlu0 %3151
  %3153 = vrot.lane.b32.xlu0 %v3134, 96
  %v3154 = vpop.permute.xlu0 %3153
  %3155 = vrot.lane.b32.xlu0 %v3137, 96
  %v3156 = vpop.permute.xlu0 %3155
  %3157 = vrot.lane.b32.xlu0 %v3141, 96
  %v3158 = vpop.permute.xlu0 %3157
  %3159 = vrot.lane.b32.xlu0 %v3144, 96
  %v3160 = vpop.permute.xlu0 %3159
  %vm3161 = vcmask 261120
  %v3163 = vsel %vm3161, %v2417, %v2510
  %v3165 = vsel %vm3161, %v2418, %v2512
  %v3167 = vsel %vm3161, %v2420, %v2514
  %v3169 = vsel %vm3161, %v2421, %v2516
  %v3171 = vsel %vm3161, %v2423, %v2518
  %v3173 = vsel %vm3161, %v2424, %v2520
  %v3175 = vsel %vm3161, %v2426, %v2522
  %v3177 = vsel %vm3161, %v2427, %v2524
  %vm3178 = vcmask 523264
  %v3180 = vsel %vm3178, %v3163, %v2558
  %v3182 = vsel %vm3178, %v3165, %v2560
  %v3184 = vsel %vm3178, %v3167, %v2562
  %v3186 = vsel %vm3178, %v3169, %v2564
  %v3188 = vsel %vm3178, %v3171, %v2566
  %v3190 = vsel %vm3178, %v3173, %v2568
  %v3192 = vsel %vm3178, %v3175, %v2570
  %v3194 = vsel %vm3178, %v3177, %v2572
  %vm3195 = vcmask 785408
  %v3197 = vsel %vm3195, %v3180, %v2626
  %v3200 = vsel %vm3195, %v3182, %v2628
  %v3203 = vsel %vm3195, %v3184, %v2630
  %v3206 = vsel %vm3195, %v3186, %v2632
  %v3209 = vsel %vm3195, %v3188, %v2634
  %v3212 = vsel %vm3195, %v3190, %v2636
  %v3215 = vsel %vm3195, %v3192, %v2638
  %v3218 = vsel %vm3195, %v3194, %v2640
  %v3222 = vsel %vm3161, %v2643, %v2706
  %v3225 = vsel %vm3161, %v2645, %v2708
  %v3228 = vsel %vm3161, %v2648, %v2710
  %v3231 = vsel %vm3161, %v2650, %v2712
  %v3234 = vsel %vm3161, %v2653, %v2714
  %v3237 = vsel %vm3161, %v2655, %v2716
  %v3240 = vsel %vm3161, %v2658, %v2718
  %v3243 = vsel %vm3161, %v2660, %v2720
  %v3245 = vsel %vm3178, %v3222, %v2742
  %v3247 = vsel %vm3178, %v3225, %v2744
  %v3249 = vsel %vm3178, %v3228, %v2746
  %v3251 = vsel %vm3178, %v3231, %v2748
  %v3253 = vsel %vm3178, %v3234, %v2750
  %v3255 = vsel %vm3178, %v3237, %v2752
  %v3257 = vsel %vm3178, %v3240, %v2754
  %v3259 = vsel %vm3178, %v3243, %v2756
  %v3261 = vsel %vm3195, %v3245, %v2802
  %v3264 = vsel %vm3195, %v3247, %v2804
  %v3267 = vsel %vm3195, %v3249, %v2806
  %v3270 = vsel %vm3195, %v3251, %v2808
  %v3273 = vsel %vm3195, %v3253, %v2810
  %v3276 = vsel %vm3195, %v3255, %v2812
  %v3279 = vsel %vm3195, %v3257, %v2814
  %v3282 = vsel %vm3195, %v3259, %v2816
  %v3286 = vsel %vm3161, %v2820, %v2884
  %v3289 = vsel %vm3161, %v2822, %v2886
  %v3292 = vsel %vm3161, %v2825, %v2888
  %v3295 = vsel %vm3161, %v2827, %v2890
  %v3298 = vsel %vm3161, %v2830, %v2892
  %v3301 = vsel %vm3161, %v2832, %v2894
  %v3304 = vsel %vm3161, %v2835, %v2896
  %v3307 = vsel %vm3161, %v2837, %v2898
  %v3309 = vsel %vm3178, %v3286, %v2921
  %v3311 = vsel %vm3178, %v3289, %v2923
  %v3313 = vsel %vm3178, %v3292, %v2925
  %v3315 = vsel %vm3178, %v3295, %v2927
  %v3317 = vsel %vm3178, %v3298, %v2929
  %v3319 = vsel %vm3178, %v3301, %v2931
  %v3321 = vsel %vm3178, %v3304, %v2933
  %v3323 = vsel %vm3178, %v3307, %v2935
  %v3325 = vsel %vm3195, %v3309, %v2982
  %v3328 = vsel %vm3195, %v3311, %v2984
  %v3331 = vsel %vm3195, %v3313, %v2986
  %v3334 = vsel %vm3195, %v3315, %v2988
  %v3337 = vsel %vm3195, %v3317, %v2990
  %v3340 = vsel %vm3195, %v3319, %v2992
  %v3343 = vsel %vm3195, %v3321, %v2994
  %v3346 = vsel %vm3195, %v3323, %v2996
  %v3350 = vsel %vm3161, %v3000, %v3064
  %v3353 = vsel %vm3161, %v3002, %v3066
  %v3356 = vsel %vm3161, %v3005, %v3068
  %v3359 = vsel %vm3161, %v3007, %v3070
  %v3362 = vsel %vm3161, %v3010, %v3072
  %v3365 = vsel %vm3161, %v3012, %v3074
  %v3368 = vsel %vm3161, %v3015, %v3076
  %v3371 = vsel %vm3161, %v3017, %v3078
  %v3373 = vsel %vm3178, %v3350, %v3101
  %v3375 = vsel %vm3178, %v3353, %v3103
  %v3377 = vsel %vm3178, %v3356, %v3105
  %v3379 = vsel %vm3178, %v3359, %v3107
  %v3381 = vsel %vm3178, %v3362, %v3109
  %v3383 = vsel %vm3178, %v3365, %v3111
  %v3385 = vsel %vm3178, %v3368, %v3113
  %v3387 = vsel %vm3178, %v3371, %v3115
  %v3389 = vsel %vm3195, %v3373, %v3146
  %v3392 = vsel %vm3195, %v3375, %v3148
  %v3395 = vsel %vm3195, %v3377, %v3150
  %v3398 = vsel %vm3195, %v3379, %v3152
  %v3401 = vsel %vm3195, %v3381, %v3154
  %v3404 = vsel %vm3195, %v3383, %v3156
  %v3407 = vsel %vm3195, %v3385, %v3158
  %v3410 = vsel %vm3195, %v3387, %v3160
  %v3412 = vld [vmem:[%s3] sm:$0xf]
  %v3413 = vld [vmem:[%s3 + $0x4] sm:$0xf]
  %v3414 = vld [vmem:[%s3 + $0x8] sm:$0xf]
  %v3415 = vld [vmem:[%s3 + $0xc] sm:$0xf]
  %v3416 = vld [vmem:[%s3 + $0x10] sm:$0xf]
  %v3417 = vld [vmem:[%s3 + $0x14] sm:$0xf]
  %v3418 = vld [vmem:[%s3 + $0x18] sm:$0xf]
  %v3419 = vld [vmem:[%s3 + $0x1c] sm:$0xf]
  %v3420 = vld [vmem:[%s3 + $0x20] sm:$0xf]
  %v3421 = vld [vmem:[%s3 + $0x24] sm:$0xf]
  %v3422 = vld [vmem:[%s3 + $0x28] sm:$0xf]
  %v3423 = vld [vmem:[%s3 + $0x2c] sm:$0xf]
  %v3424 = vld [vmem:[%s3 + $0x30] sm:$0xf]
  %v3425 = vld [vmem:[%s3 + $0x34] sm:$0xf]
  %v3426 = vld [vmem:[%s3 + $0x38] sm:$0xf]
  %v3427 = vld [vmem:[%s3 + $0x3c] sm:$0xf]
  %v3428 = vld [vmem:[%s3 + $0x40] sm:$0xf]
  %v3429 = vld [vmem:[%s3 + $0x44] sm:$0xf]
  %v3430 = vld [vmem:[%s3 + $0x48] sm:$0xf]
  %v3431 = vld [vmem:[%s3 + $0x4c] sm:$0xf]
  %v3432 = vld [vmem:[%s3 + $0x50] sm:$0xf]
  %v3433 = vld [vmem:[%s3 + $0x54] sm:$0xf]
  %v3434 = vld [vmem:[%s3 + $0x58] sm:$0xf]
  %v3435 = vld [vmem:[%s3 + $0x5c] sm:$0xf]
  %v3436 = vld [vmem:[%s3 + $0x60] sm:$0xf]
  %v3437 = vld [vmem:[%s3 + $0x64] sm:$0xf]
  %v3438 = vld [vmem:[%s3 + $0x68] sm:$0xf]
  %v3439 = vld [vmem:[%s3 + $0x6c] sm:$0xf]
  %v3440 = vld [vmem:[%s3 + $0x70] sm:$0xf]
  %v3441 = vld [vmem:[%s3 + $0x74] sm:$0xf]
  %v3442 = vld [vmem:[%s3 + $0x78] sm:$0xf]
  %v3443 = vld [vmem:[%s3 + $0x7c] sm:$0xf]
  %v3444 = vld [vmem:[%s3 + $0x80] sm:$0xf]
  %v3445 = vld [vmem:[%s3 + $0x84] sm:$0xf]
  %v3446 = vld [vmem:[%s3 + $0x88] sm:$0xf]
  %v3447 = vld [vmem:[%s3 + $0x8c] sm:$0xf]
  %v3448 = vld [vmem:[%s3 + $0x90] sm:$0xf]
  %v3449 = vld [vmem:[%s3 + $0x94] sm:$0xf]
  %v3450 = vld [vmem:[%s3 + $0x98] sm:$0xf]
  %v3451 = vld [vmem:[%s3 + $0x9c] sm:$0xf]
  %v3452 = vld [vmem:[%s3 + $0xa0] sm:$0xf]
  %v3453 = vld [vmem:[%s3 + $0xa4] sm:$0xf]
  %v3454 = vld [vmem:[%s3 + $0xa8] sm:$0xf]
  %v3455 = vld [vmem:[%s3 + $0xac] sm:$0xf]
  %v3456 = vld [vmem:[%s3 + $0xb0] sm:$0xf]
  %v3457 = vld [vmem:[%s3 + $0xb4] sm:$0xf]
  %v3458 = vld [vmem:[%s3 + $0xb8] sm:$0xf]
  %v3459 = vld [vmem:[%s3 + $0xbc] sm:$0xf]
  %v3460 = vld [vmem:[%s3 + $0xc0] sm:$0xf]
  %v3461 = vld [vmem:[%s3 + $0xc4] sm:$0xf]
  %v3462 = vld [vmem:[%s3 + $0xc8] sm:$0xf]
  %v3463 = vld [vmem:[%s3 + $0xcc] sm:$0xf]
  %v3464 = vld [vmem:[%s3 + $0xd0] sm:$0xf]
  %v3465 = vld [vmem:[%s3 + $0xd4] sm:$0xf]
  %v3466 = vld [vmem:[%s3 + $0xd8] sm:$0xf]
  %v3467 = vld [vmem:[%s3 + $0xdc] sm:$0xf]
  %v3468 = vld [vmem:[%s3 + $0xe0] sm:$0xf]
  %v3469 = vld [vmem:[%s3 + $0xe4] sm:$0xf]
  %v3470 = vld [vmem:[%s3 + $0xe8] sm:$0xf]
  %v3471 = vld [vmem:[%s3 + $0xec] sm:$0xf]
  %v3472 = vld [vmem:[%s3 + $0xf0] sm:$0xf]
  %v3473 = vld [vmem:[%s3 + $0xf4] sm:$0xf]
  %v3474 = vld [vmem:[%s3 + $0xf8] sm:$0xf]
  %v3475 = vld [vmem:[%s3 + $0xfc] sm:$0xf]
  %v3476 = vld [vmem:[%s4] sm:$0x1]
  %v3478 = vlaneseq
  %v3479 = vshrl.u32 %v3478, 7
  %v3480 = vsub.s32 0, %v3479
  %v3481 = vrot.slane %v3476, %v3480
  %v3547 = vunpack.c.l.b16 %v3412
  %v3548 = vunpack.c.l.b16 %v3413
  %v3549 = vunpack.c.l.b16 %v3414
  %v3550 = vunpack.c.l.b16 %v3415
  %v3551 = vunpack.c.l.b16 %v3416
  %v3552 = vunpack.c.l.b16 %v3417
  %v3553 = vunpack.c.l.b16 %v3418
  %v3554 = vunpack.c.l.b16 %v3419
  %v3555 = vunpack.c.l.b16 %v3420
  %v3556 = vunpack.c.l.b16 %v3421
  %v3557 = vunpack.c.l.b16 %v3422
  %v3558 = vunpack.c.l.b16 %v3423
  %v3559 = vunpack.c.l.b16 %v3424
  %v3560 = vunpack.c.l.b16 %v3425
  %v3561 = vunpack.c.l.b16 %v3426
  %v3562 = vunpack.c.l.b16 %v3427
  %v3563 = vunpack.c.l.b16 %v3428
  %v3564 = vunpack.c.l.b16 %v3429
  %v3565 = vunpack.c.l.b16 %v3430
  %v3566 = vunpack.c.l.b16 %v3431
  %v3567 = vunpack.c.l.b16 %v3432
  %v3568 = vunpack.c.l.b16 %v3433
  %v3569 = vunpack.c.l.b16 %v3434
  %v3570 = vunpack.c.l.b16 %v3435
  %v3571 = vunpack.c.l.b16 %v3436
  %v3572 = vunpack.c.l.b16 %v3437
  %v3573 = vunpack.c.l.b16 %v3438
  %v3574 = vunpack.c.l.b16 %v3439
  %v3575 = vunpack.c.l.b16 %v3440
  %v3576 = vunpack.c.l.b16 %v3441
  %v3577 = vunpack.c.l.b16 %v3442
  %v3578 = vunpack.c.l.b16 %v3443
  %v3579 = vunpack.c.l.b16 %v3444
  %v3580 = vunpack.c.l.b16 %v3445
  %v3581 = vunpack.c.l.b16 %v3446
  %v3582 = vunpack.c.l.b16 %v3447
  %v3583 = vunpack.c.l.b16 %v3448
  %v3584 = vunpack.c.l.b16 %v3449
  %v3585 = vunpack.c.l.b16 %v3450
  %v3586 = vunpack.c.l.b16 %v3451
  %v3587 = vunpack.c.l.b16 %v3452
  %v3588 = vunpack.c.l.b16 %v3453
  %v3589 = vunpack.c.l.b16 %v3454
  %v3590 = vunpack.c.l.b16 %v3455
  %v3591 = vunpack.c.l.b16 %v3456
  %v3592 = vunpack.c.l.b16 %v3457
  %v3593 = vunpack.c.l.b16 %v3458
  %v3594 = vunpack.c.l.b16 %v3459
  %v3595 = vunpack.c.l.b16 %v3460
  %v3596 = vunpack.c.l.b16 %v3461
  %v3597 = vunpack.c.l.b16 %v3462
  %v3598 = vunpack.c.l.b16 %v3463
  %v3599 = vunpack.c.l.b16 %v3464
  %v3600 = vunpack.c.l.b16 %v3465
  %v3601 = vunpack.c.l.b16 %v3466
  %v3602 = vunpack.c.l.b16 %v3467
  %v3603 = vunpack.c.l.b16 %v3468
  %v3604 = vunpack.c.l.b16 %v3469
  %v3605 = vunpack.c.l.b16 %v3470
  %v3606 = vunpack.c.l.b16 %v3471
  %v3607 = vunpack.c.l.b16 %v3472
  %v3608 = vunpack.c.l.b16 %v3473
  %v3609 = vunpack.c.l.b16 %v3474
  %v3610 = vunpack.c.l.b16 %v3475
  %v3611 = vpack.c.b16 %v3548, %v3547
  %v3612 = vpack.c.b16 %v3550, %v3549
  %v3613 = vpack.c.b16 %v3552, %v3551
  %v3614 = vpack.c.b16 %v3554, %v3553
  %v3615 = vpack.c.b16 %v3556, %v3555
  %v3616 = vpack.c.b16 %v3558, %v3557
  %v3617 = vpack.c.b16 %v3560, %v3559
  %v3618 = vpack.c.b16 %v3562, %v3561
  %v3619 = vpack.c.b16 %v3564, %v3563
  %v3620 = vpack.c.b16 %v3566, %v3565
  %v3621 = vpack.c.b16 %v3568, %v3567
  %v3622 = vpack.c.b16 %v3570, %v3569
  %v3623 = vpack.c.b16 %v3572, %v3571
  %v3624 = vpack.c.b16 %v3574, %v3573
  %v3625 = vpack.c.b16 %v3576, %v3575
  %v3626 = vpack.c.b16 %v3578, %v3577
  %v3627 = vpack.c.b16 %v3580, %v3579
  %v3628 = vpack.c.b16 %v3582, %v3581
  %v3629 = vpack.c.b16 %v3584, %v3583
  %v3630 = vpack.c.b16 %v3586, %v3585
  %v3631 = vpack.c.b16 %v3588, %v3587
  %v3632 = vpack.c.b16 %v3590, %v3589
  %v3633 = vpack.c.b16 %v3592, %v3591
  %v3634 = vpack.c.b16 %v3594, %v3593
  %v3635 = vpack.c.b16 %v3596, %v3595
  %v3636 = vpack.c.b16 %v3598, %v3597
  %v3637 = vpack.c.b16 %v3600, %v3599
  %v3638 = vpack.c.b16 %v3602, %v3601
  %v3639 = vpack.c.b16 %v3604, %v3603
  %v3640 = vpack.c.b16 %v3606, %v3605
  %v3641 = vpack.c.b16 %v3608, %v3607
  %v3642 = vpack.c.b16 %v3610, %v3609
  %3675 = vmatprep.subr.bf16.mxu0 0
  %3676 = vmatpush1.bf16.msra.mxu0 %v3611
  %3677 = vmatprep.subr.bf16.mxu0 0
  %3678 = vmatpush1.bf16.msra.mxu0 %v3612
  %3679 = vmatprep.subr.bf16.mxu0 0
  %3680 = vmatpush1.bf16.msra.mxu0 %v3613
  %3681 = vmatprep.subr.bf16.mxu0 0
  %3682 = vmatpush1.bf16.msra.mxu0 %v3614
  %3683 = vmatprep.subr.bf16.mxu0 0
  %3684 = vmatpush1.bf16.msra.mxu0 %v3615
  %3685 = vmatprep.subr.bf16.mxu0 0
  %3686 = vmatpush1.bf16.msra.mxu0 %v3616
  %3687 = vmatprep.subr.bf16.mxu0 0
  %3688 = vmatpush1.bf16.msra.mxu0 %v3617
  %3689 = vmatprep.subr.bf16.mxu0 0
  %3690 = vmatpush1.bf16.msra.mxu0 %v3618
  %3691 = vmatprep.subr.bf16.mxu0 0
  %3692 = vmatpush1.bf16.msra.mxu0 %v3619
  %3693 = vmatprep.subr.bf16.mxu0 0
  %3694 = vmatpush1.bf16.msra.mxu0 %v3620
  %3695 = vmatprep.subr.bf16.mxu0 0
  %3696 = vmatpush1.bf16.msra.mxu0 %v3621
  %3697 = vmatprep.subr.bf16.mxu0 0
  %3698 = vmatpush1.bf16.msra.mxu0 %v3622
  %3699 = vmatprep.subr.bf16.mxu0 0
  %3700 = vmatpush1.bf16.msra.mxu0 %v3623
  %3701 = vmatprep.subr.bf16.mxu0 0
  %3702 = vmatpush1.bf16.msra.mxu0 %v3624
  %3703 = vmatprep.subr.bf16.mxu0 0
  %3704 = vmatpush1.bf16.msra.mxu0 %v3625
  %3705 = vmatprep.subr.bf16.mxu0 0
  %3706 = vmatpush1.bf16.msra.mxu0 %v3626
  %3707 = vmatprep.mubr.bf16.mxu0 %v3261
  %3708 = vmatmul.mubr.bf16.gmra.mrb[0].mxu0 %v3197
  %v3709 = vpop.f32.mrb[0].mxu0
  %v3710 = vadd.f32 %v3481, %v3709
  %v3711 = vpop.f32.mrb[0].mxu0
  %v3712 = vpop.f32.mrb[0].mxu0
  %v3713 = vadd.f32 %v3481, %v3712
  %v3714 = vpop.f32.mrb[0].mxu0
  %3715 = vmatprep.mubr.bf16.mxu0 %v3264
  %3716 = vmatmul.mubr.bf16.gmra.mrb[0].mxu0 %v3200
  %v3717 = vpop.f32.mrb[0].mxu0
  %v3718 = vadd.f32 %v3481, %v3717
  %v3719 = vpop.f32.mrb[0].mxu0
  %v3720 = vpop.f32.mrb[0].mxu0
  %v3721 = vadd.f32 %v3481, %v3720
  %v3722 = vpop.f32.mrb[0].mxu0
  %3723 = vmatprep.mubr.bf16.mxu0 %v3267
  %3724 = vmatmul.mubr.bf16.gmra.mrb[0].mxu0 %v3203
  %v3725 = vpop.f32.mrb[0].mxu0
  %v3726 = vadd.f32 %v3481, %v3725
  %v3727 = vpop.f32.mrb[0].mxu0
  %v3728 = vpop.f32.mrb[0].mxu0
  %v3729 = vadd.f32 %v3481, %v3728
  %v3730 = vpop.f32.mrb[0].mxu0
  %3731 = vmatprep.mubr.bf16.mxu0 %v3270
  %3732 = vmatmul.mubr.bf16.gmra.mrb[0].mxu0 %v3206
  %v3733 = vpop.f32.mrb[0].mxu0
  %v3734 = vadd.f32 %v3481, %v3733
  %v3735 = vpop.f32.mrb[0].mxu0
  %v3736 = vpop.f32.mrb[0].mxu0
  %v3737 = vadd.f32 %v3481, %v3736
  %v3738 = vpop.f32.mrb[0].mxu0
  %3739 = vmatprep.mubr.bf16.mxu0 %v3273
  %3740 = vmatmul.mubr.bf16.gmra.mrb[0].mxu0 %v3209
  %v3741 = vpop.f32.mrb[0].mxu0
  %v3742 = vadd.f32 %v3481, %v3741
  %v3743 = vpop.f32.mrb[0].mxu0
  %v3744 = vpop.f32.mrb[0].mxu0
  %v3745 = vadd.f32 %v3481, %v3744
  %v3746 = vpop.f32.mrb[0].mxu0
  %3747 = vmatprep.mubr.bf16.mxu0 %v3276
  %3748 = vmatmul.mubr.bf16.gmra.mrb[0].mxu0 %v3212
  %v3749 = vpop.f32.mrb[0].mxu0
  %v3750 = vadd.f32 %v3481, %v3749
  %v3751 = vpop.f32.mrb[0].mxu0
  %v3752 = vpop.f32.mrb[0].mxu0
  %v3753 = vadd.f32 %v3481, %v3752
  %v3754 = vpop.f32.mrb[0].mxu0
  %3755 = vmatprep.mubr.bf16.mxu0 %v3279
  %3756 = vmatmul.mubr.bf16.gmra.mrb[0].mxu0 %v3215
  %v3757 = vpop.f32.mrb[0].mxu0
  %v3758 = vadd.f32 %v3481, %v3757
  %v3759 = vpop.f32.mrb[0].mxu0
  %v3760 = vpop.f32.mrb[0].mxu0
  %v3761 = vadd.f32 %v3481, %v3760
  %v3762 = vpop.f32.mrb[0].mxu0
  %3763 = vmatprep.mubr.bf16.mxu0 %v3282
  %3764 = vmatmul.mubr.bf16.gmra.mrb[0].mxu0 %v3218
  %v3765 = vpop.f32.mrb[0].mxu0
  %v3766 = vadd.f32 %v3481, %v3765
  %v3767 = vpop.f32.mrb[0].mxu0
  %v3768 = vpop.f32.mrb[0].mxu0
  %v3769 = vadd.f32 %v3481, %v3768
  %v3770 = vpop.f32.mrb[0].mxu0
  %3771 = vdwg.mxu0
  %3772 = vmatprep.subr.bf16.mxu0 0
  %3773 = vmatpush1.bf16.msra.mxu0 %v3627
  %3774 = vmatprep.subr.bf16.mxu0 0
  %3775 = vmatpush1.bf16.msra.mxu0 %v3628
  %3776 = vmatprep.subr.bf16.mxu0 0
  %3777 = vmatpush1.bf16.msra.mxu0 %v3629
  %3778 = vmatprep.subr.bf16.mxu0 0
  %3779 = vmatpush1.bf16.msra.mxu0 %v3630
  %3780 = vmatprep.subr.bf16.mxu0 0
  %3781 = vmatpush1.bf16.msra.mxu0 %v3631
  %3782 = vmatprep.subr.bf16.mxu0 0
  %3783 = vmatpush1.bf16.msra.mxu0 %v3632
  %3784 = vmatprep.subr.bf16.mxu0 0
  %3785 = vmatpush1.bf16.msra.mxu0 %v3633
  %3786 = vmatprep.subr.bf16.mxu0 0
  %3787 = vmatpush1.bf16.msra.mxu0 %v3634
  %3788 = vmatprep.subr.bf16.mxu0 0
  %3789 = vmatpush1.bf16.msra.mxu0 %v3635
  %3790 = vmatprep.subr.bf16.mxu0 0
  %3791 = vmatpush1.bf16.msra.mxu0 %v3636
  %3792 = vmatprep.subr.bf16.mxu0 0
  %3793 = vmatpush1.bf16.msra.mxu0 %v3637
  %3794 = vmatprep.subr.bf16.mxu0 0
  %3795 = vmatpush1.bf16.msra.mxu0 %v3638
  %3796 = vmatprep.subr.bf16.mxu0 0
  %3797 = vmatpush1.bf16.msra.mxu0 %v3639
  %3798 = vmatprep.subr.bf16.mxu0 0
  %3799 = vmatpush1.bf16.msra.mxu0 %v3640
  %3800 = vmatprep.subr.bf16.mxu0 0
  %3801 = vmatpush1.bf16.msra.mxu0 %v3641
  %3802 = vmatprep.subr.bf16.mxu0 0
  %3803 = vmatpush1.bf16.msra.mxu0 %v3642
  %3804 = vmatprep.mubr.bf16.mxu0 %v3389
  %3805 = vmatmul.mubr.bf16.gmra.mrb[0].mxu0 %v3325
  %v3806 = vpop.f32.mrb[0].mxu0
  %v3807 = vadd.f32 %v3710, %v3806
  %v3808 = vpop.f32.mrb[0].mxu0
  %v3809 = vpop.f32.mrb[0].mxu0
  %v3810 = vadd.f32 %v3713, %v3809
  %v3811 = vpop.f32.mrb[0].mxu0
  %3812 = vmatprep.mubr.bf16.mxu0 %v3392
  %3813 = vmatmul.mubr.bf16.gmra.mrb[0].mxu0 %v3328
  %v3814 = vpop.f32.mrb[0].mxu0
  %v3815 = vadd.f32 %v3718, %v3814
  %v3816 = vpop.f32.mrb[0].mxu0
  %v3817 = vpop.f32.mrb[0].mxu0
  %v3818 = vadd.f32 %v3721, %v3817
  %v3819 = vpop.f32.mrb[0].mxu0
  %3820 = vmatprep.mubr.bf16.mxu0 %v3395
  %3821 = vmatmul.mubr.bf16.gmra.mrb[0].mxu0 %v3331
  %v3822 = vpop.f32.mrb[0].mxu0
  %v3823 = vadd.f32 %v3726, %v3822
  %v3824 = vpop.f32.mrb[0].mxu0
  %v3825 = vpop.f32.mrb[0].mxu0
  %v3826 = vadd.f32 %v3729, %v3825
  %v3827 = vpop.f32.mrb[0].mxu0
  %3828 = vmatprep.mubr.bf16.mxu0 %v3398
  %3829 = vmatmul.mubr.bf16.gmra.mrb[0].mxu0 %v3334
  %v3830 = vpop.f32.mrb[0].mxu0
  %v3831 = vadd.f32 %v3734, %v3830
  %v3832 = vpop.f32.mrb[0].mxu0
  %v3833 = vpop.f32.mrb[0].mxu0
  %v3834 = vadd.f32 %v3737, %v3833
  %v3835 = vpop.f32.mrb[0].mxu0
  %3836 = vmatprep.mubr.bf16.mxu0 %v3401
  %3837 = vmatmul.mubr.bf16.gmra.mrb[0].mxu0 %v3337
  %v3838 = vpop.f32.mrb[0].mxu0
  %v3839 = vadd.f32 %v3742, %v3838
  %v3840 = vpop.f32.mrb[0].mxu0
  %v3841 = vpop.f32.mrb[0].mxu0
  %v3842 = vadd.f32 %v3745, %v3841
  %v3843 = vpop.f32.mrb[0].mxu0
  %3844 = vmatprep.mubr.bf16.mxu0 %v3404
  %3845 = vmatmul.mubr.bf16.gmra.mrb[0].mxu0 %v3340
  %v3846 = vpop.f32.mrb[0].mxu0
  %v3847 = vadd.f32 %v3750, %v3846
  %v3848 = vpop.f32.mrb[0].mxu0
  %v3849 = vpop.f32.mrb[0].mxu0
  %v3850 = vadd.f32 %v3753, %v3849
  %v3851 = vpop.f32.mrb[0].mxu0
  %3852 = vmatprep.mubr.bf16.mxu0 %v3407
  %3853 = vmatmul.mubr.bf16.gmra.mrb[0].mxu0 %v3343
  %v3854 = vpop.f32.mrb[0].mxu0
  %v3855 = vadd.f32 %v3758, %v3854
  %v3856 = vpop.f32.mrb[0].mxu0
  %v3857 = vpop.f32.mrb[0].mxu0
  %v3858 = vadd.f32 %v3761, %v3857
  %v3859 = vpop.f32.mrb[0].mxu0
  %3860 = vmatprep.mubr.bf16.mxu0 %v3410
  %3861 = vmatmul.mubr.bf16.gmra.mrb[0].mxu0 %v3346
  %v3862 = vpop.f32.mrb[0].mxu0
  %v3863 = vadd.f32 %v3766, %v3862
  %v3864 = vpop.f32.mrb[0].mxu0
  %v3865 = vpop.f32.mrb[0].mxu0
  %v3866 = vadd.f32 %v3769, %v3865
  %v3867 = vpop.f32.mrb[0].mxu0
  %3868 = vdwg.mxu0
  %v3869 = vmax.f32 %v3807, 0.0
  %v3870 = vmax.f32 %v3810, 0.0
  %v3871 = vmax.f32 %v3815, 0.0
  %v3872 = vmax.f32 %v3818, 0.0
  %v3873 = vmax.f32 %v3823, 0.0
  %v3874 = vmax.f32 %v3826, 0.0
  %v3875 = vmax.f32 %v3831, 0.0
  %v3876 = vmax.f32 %v3834, 0.0
  %v3877 = vmax.f32 %v3839, 0.0
  %v3878 = vmax.f32 %v3842, 0.0
  %v3879 = vmax.f32 %v3847, 0.0
  %v3880 = vmax.f32 %v3850, 0.0
  %v3881 = vmax.f32 %v3855, 0.0
  %v3882 = vmax.f32 %v3858, 0.0
  %v3883 = vmax.f32 %v3863, 0.0
  %v3884 = vmax.f32 %v3866, 0.0
  %v3885 = vpack.c.bf16 %v3870, %v3869
  %v3886 = vpack.c.bf16 %v3872, %v3871
  %v3887 = vpack.c.bf16 %v3874, %v3873
  %v3888 = vpack.c.bf16 %v3876, %v3875
  %v3889 = vpack.c.bf16 %v3878, %v3877
  %v3890 = vpack.c.bf16 %v3880, %v3879
  %v3891 = vpack.c.bf16 %v3882, %v3881
  %v3892 = vpack.c.bf16 %v3884, %v3883
  %v3894 = vshrl.u32 %v3885, 16
  %v3896 = vshll.u32 %v3885, 16
  %v3898 = vrot.slane %v3896, 1
  %v3899 = vor.u32 %v3894, %v3898
  %v3901 = vshll.u32 %v3886, 16
  %v3903 = vrot.slane %v3901, 1
  %v3904 = vsel %vm153, %v3899, %v3903
  %v3905 = vshrl.u32 %v3886, 16
  %v3907 = vor.u32 %v3905, %v3903
  %v3909 = vshrl.u32 %v3887, 16
  %v3911 = vshll.u32 %v3887, 16
  %v3913 = vrot.slane %v3911, 1
  %v3914 = vor.u32 %v3909, %v3913
  %v3916 = vshll.u32 %v3888, 16
  %v3918 = vrot.slane %v3916, 1
  %v3919 = vsel %vm153, %v3914, %v3918
  %v3920 = vshrl.u32 %v3888, 16
  %v3922 = vor.u32 %v3920, %v3918
  %v3924 = vshrl.u32 %v3889, 16
  %v3926 = vshll.u32 %v3889, 16
  %v3928 = vrot.slane %v3926, 1
  %v3929 = vor.u32 %v3924, %v3928
  %v3931 = vshll.u32 %v3890, 16
  %v3933 = vrot.slane %v3931, 1
  %v3934 = vsel %vm153, %v3929, %v3933
  %v3935 = vshrl.u32 %v3890, 16
  %v3937 = vor.u32 %v3935, %v3933
  %v3939 = vshrl.u32 %v3891, 16
  %v3941 = vshll.u32 %v3891, 16
  %v3943 = vrot.slane %v3941, 1
  %v3944 = vor.u32 %v3939, %v3943
  %v3946 = vshll.u32 %v3892, 16
  %v3948 = vrot.slane %v3946, 1
  %v3949 = vsel %vm153, %v3944, %v3948
  %v3950 = vshrl.u32 %v3892, 16
  %v3952 = vor.u32 %v3950, %v3948
  %3953 = vrot.lane.b32.xlu0 %v3904, 64
  %v3954 = vpop.permute.xlu0 %3953
  %3955 = vrot.lane.b32.xlu0 %v3907, 64
  %v3956 = vpop.permute.xlu0 %3955
  %3957 = vrot.lane.b32.xlu0 %v3919, 64
  %v3958 = vpop.permute.xlu0 %3957
  %3959 = vrot.lane.b32.xlu0 %v3922, 64
  %v3960 = vpop.permute.xlu0 %3959
  %3961 = vrot.lane.b32.xlu0 %v3934, 64
  %v3962 = vpop.permute.xlu0 %3961
  %3963 = vrot.lane.b32.xlu0 %v3937, 64
  %v3964 = vpop.permute.xlu0 %3963
  %3965 = vrot.lane.b32.xlu0 %v3949, 64
  %v3966 = vpop.permute.xlu0 %3965
  %3967 = vrot.lane.b32.xlu0 %v3952, 64
  %v3968 = vpop.permute.xlu0 %3967
  %v3977 = vrot.slane %v3885, 1
  %v3978 = vrot.slane %v3886, 1
  %v3979 = vsel %vm290, %v3977, %v3978
  %v3980 = vrot.slane %v3887, 1
  %v3981 = vrot.slane %v3888, 1
  %v3982 = vsel %vm290, %v3980, %v3981
  %v3983 = vrot.slane %v3889, 1
  %v3984 = vrot.slane %v3890, 1
  %v3985 = vsel %vm290, %v3983, %v3984
  %v3986 = vrot.slane %v3891, 1
  %v3987 = vrot.slane %v3892, 1
  %v3988 = vsel %vm290, %v3986, %v3987
  %v3989 = vrot.slane %v3894, 1
  %v3990 = vrot.slane %v3896, 2
  %v3991 = vor.u32 %v3989, %v3990
  %v3992 = vrot.slane %v3905, 1
  %v3993 = vrot.slane %v3901, 2
  %v3994 = vor.u32 %v3992, %v3993
  %v3995 = vsel %vm343, %v3991, %v3994
  %v3996 = vrot.slane %v3909, 1
  %v3997 = vrot.slane %v3911, 2
  %v3998 = vor.u32 %v3996, %v3997
  %v3999 = vrot.slane %v3920, 1
  %v4000 = vrot.slane %v3916, 2
  %v4001 = vor.u32 %v3999, %v4000
  %v4002 = vsel %vm343, %v3998, %v4001
  %v4003 = vrot.slane %v3924, 1
  %v4004 = vrot.slane %v3926, 2
  %v4005 = vor.u32 %v4003, %v4004
  %v4006 = vrot.slane %v3935, 1
  %v4007 = vrot.slane %v3931, 2
  %v4008 = vor.u32 %v4006, %v4007
  %v4009 = vsel %vm343, %v4005, %v4008
  %v4010 = vrot.slane %v3939, 1
  %v4011 = vrot.slane %v3941, 2
  %v4012 = vor.u32 %v4010, %v4011
  %v4013 = vrot.slane %v3950, 1
  %v4014 = vrot.slane %v3946, 2
  %v4015 = vor.u32 %v4013, %v4014
  %v4016 = vsel %vm343, %v4012, %v4015
  %4017 = vrot.lane.b32.xlu0 %v3995, 64
  %v4018 = vpop.permute.xlu0 %4017
  %4019 = vrot.lane.b32.xlu0 %v3994, 64
  %v4020 = vpop.permute.xlu0 %4019
  %4021 = vrot.lane.b32.xlu0 %v4002, 64
  %v4022 = vpop.permute.xlu0 %4021
  %4023 = vrot.lane.b32.xlu0 %v4001, 64
  %v4024 = vpop.permute.xlu0 %4023
  %4025 = vrot.lane.b32.xlu0 %v4009, 64
  %v4026 = vpop.permute.xlu0 %4025
  %4027 = vrot.lane.b32.xlu0 %v4008, 64
  %v4028 = vpop.permute.xlu0 %4027
  %4029 = vrot.lane.b32.xlu0 %v4016, 64
  %v4030 = vpop.permute.xlu0 %4029
  %4031 = vrot.lane.b32.xlu0 %v4015, 64
  %v4032 = vpop.permute.xlu0 %4031
  %v4033 = vrot.slane %v3885, 2
  %v4034 = vrot.slane %v3886, 2
  %v4035 = vsel %vm436, %v4033, %v4034
  %v4036 = vrot.slane %v3887, 2
  %v4037 = vrot.slane %v3888, 2
  %v4038 = vsel %vm436, %v4036, %v4037
  %v4039 = vrot.slane %v3889, 2
  %v4040 = vrot.slane %v3890, 2
  %v4041 = vsel %vm436, %v4039, %v4040
  %v4042 = vrot.slane %v3891, 2
  %v4043 = vrot.slane %v3892, 2
  %v4044 = vsel %vm436, %v4042, %v4043
  %v4045 = vrot.slane %v3894, 2
  %v4046 = vrot.slane %v3896, 3
  %v4047 = vor.u32 %v4045, %v4046
  %v4048 = vrot.slane %v3905, 2
  %v4049 = vrot.slane %v3901, 3
  %v4050 = vor.u32 %v4048, %v4049
  %v4051 = vsel %vm489, %v4047, %v4050
  %v4052 = vrot.slane %v3909, 2
  %v4053 = vrot.slane %v3911, 3
  %v4054 = vor.u32 %v4052, %v4053
  %v4055 = vrot.slane %v3920, 2
  %v4056 = vrot.slane %v3916, 3
  %v4057 = vor.u32 %v4055, %v4056
  %v4058 = vsel %vm489, %v4054, %v4057
  %v4059 = vrot.slane %v3924, 2
  %v4060 = vrot.slane %v3926, 3
  %v4061 = vor.u32 %v4059, %v4060
  %v4062 = vrot.slane %v3935, 2
  %v4063 = vrot.slane %v3931, 3
  %v4064 = vor.u32 %v4062, %v4063
  %v4065 = vsel %vm489, %v4061, %v4064
  %v4066 = vrot.slane %v3939, 2
  %v4067 = vrot.slane %v3941, 3
  %v4068 = vor.u32 %v4066, %v4067
  %v4069 = vrot.slane %v3950, 2
  %v4070 = vrot.slane %v3946, 3
  %v4071 = vor.u32 %v4069, %v4070
  %v4072 = vsel %vm489, %v4068, %v4071
  %4073 = vrot.lane.b32.xlu0 %v4051, 64
  %v4074 = vpop.permute.xlu0 %4073
  %4075 = vrot.lane.b32.xlu0 %v4050, 64
  %v4076 = vpop.permute.xlu0 %4075
  %4077 = vrot.lane.b32.xlu0 %v4058, 64
  %v4078 = vpop.permute.xlu0 %4077
  %4079 = vrot.lane.b32.xlu0 %v4057, 64
  %v4080 = vpop.permute.xlu0 %4079
  %4081 = vrot.lane.b32.xlu0 %v4065, 64
  %v4082 = vpop.permute.xlu0 %4081
  %4083 = vrot.lane.b32.xlu0 %v4064, 64
  %v4084 = vpop.permute.xlu0 %4083
  %4085 = vrot.lane.b32.xlu0 %v4072, 64
  %v4086 = vpop.permute.xlu0 %4085
  %4087 = vrot.lane.b32.xlu0 %v4071, 64
  %v4088 = vpop.permute.xlu0 %4087
  %v4089 = vrot.slane %v3885, 3
  %v4090 = vrot.slane %v3886, 3
  %v4091 = vsel %vm574, %v4089, %v4090
  %v4092 = vrot.slane %v3887, 3
  %v4093 = vrot.slane %v3888, 3
  %v4094 = vsel %vm574, %v4092, %v4093
  %v4095 = vrot.slane %v3889, 3
  %v4096 = vrot.slane %v3890, 3
  %v4097 = vsel %vm574, %v4095, %v4096
  %v4098 = vrot.slane %v3891, 3
  %v4099 = vrot.slane %v3892, 3
  %v4100 = vsel %vm574, %v4098, %v4099
  %v4101 = vrot.slane %v3894, 3
  %v4102 = vrot.slane %v3896, 4
  %v4103 = vor.u32 %v4101, %v4102
  %v4104 = vrot.slane %v3905, 3
  %v4105 = vrot.slane %v3901, 4
  %v4106 = vor.u32 %v4104, %v4105
  %v4107 = vsel %vm627, %v4103, %v4106
  %v4108 = vrot.slane %v3909, 3
  %v4109 = vrot.slane %v3911, 4
  %v4110 = vor.u32 %v4108, %v4109
  %v4111 = vrot.slane %v3920, 3
  %v4112 = vrot.slane %v3916, 4
  %v4113 = vor.u32 %v4111, %v4112
  %v4114 = vsel %vm627, %v4110, %v4113
  %v4115 = vrot.slane %v3924, 3
  %v4116 = vrot.slane %v3926, 4
  %v4117 = vor.u32 %v4115, %v4116
  %v4118 = vrot.slane %v3935, 3
  %v4119 = vrot.slane %v3931, 4
  %v4120 = vor.u32 %v4118, %v4119
  %v4121 = vsel %vm627, %v4117, %v4120
  %v4122 = vrot.slane %v3939, 3
  %v4123 = vrot.slane %v3941, 4
  %v4124 = vor.u32 %v4122, %v4123
  %v4125 = vrot.slane %v3950, 3
  %v4126 = vrot.slane %v3946, 4
  %v4127 = vor.u32 %v4125, %v4126
  %v4128 = vsel %vm627, %v4124, %v4127
  %4129 = vrot.lane.b32.xlu0 %v4107, 64
  %v4130 = vpop.permute.xlu0 %4129
  %4131 = vrot.lane.b32.xlu0 %v4106, 64
  %v4132 = vpop.permute.xlu0 %4131
  %4133 = vrot.lane.b32.xlu0 %v4114, 64
  %v4134 = vpop.permute.xlu0 %4133
  %4135 = vrot.lane.b32.xlu0 %v4113, 64
  %v4136 = vpop.permute.xlu0 %4135
  %4137 = vrot.lane.b32.xlu0 %v4121, 64
  %v4138 = vpop.permute.xlu0 %4137
  %4139 = vrot.lane.b32.xlu0 %v4120, 64
  %v4140 = vpop.permute.xlu0 %4139
  %4141 = vrot.lane.b32.xlu0 %v4128, 64
  %v4142 = vpop.permute.xlu0 %4141
  %4143 = vrot.lane.b32.xlu0 %v4127, 64
  %v4144 = vpop.permute.xlu0 %4143
  %v4146 = vsel %vm3178, %v3885, %v3954
  %v4148 = vsel %vm3178, %v3886, %v3956
  %v4150 = vsel %vm3178, %v3887, %v3958
  %v4152 = vsel %vm3178, %v3888, %v3960
  %v4154 = vsel %vm3178, %v3889, %v3962
  %v4156 = vsel %vm3178, %v3890, %v3964
  %v4158 = vsel %vm3178, %v3891, %v3966
  %v4160 = vsel %vm3178, %v3892, %v3968
  %v4163 = vsel %vm3178, %v3979, %v4018
  %v4166 = vsel %vm3178, %v3978, %v4020
  %v4169 = vsel %vm3178, %v3982, %v4022
  %v4172 = vsel %vm3178, %v3981, %v4024
  %v4175 = vsel %vm3178, %v3985, %v4026
  %v4178 = vsel %vm3178, %v3984, %v4028
  %v4181 = vsel %vm3178, %v3988, %v4030
  %v4184 = vsel %vm3178, %v3987, %v4032
  %v4187 = vsel %vm3178, %v4035, %v4074
  %v4190 = vsel %vm3178, %v4034, %v4076
  %v4193 = vsel %vm3178, %v4038, %v4078
  %v4196 = vsel %vm3178, %v4037, %v4080
  %v4199 = vsel %vm3178, %v4041, %v4082
  %v4202 = vsel %vm3178, %v4040, %v4084
  %v4205 = vsel %vm3178, %v4044, %v4086
  %v4208 = vsel %vm3178, %v4043, %v4088
  %v4211 = vsel %vm3178, %v4091, %v4130
  %v4214 = vsel %vm3178, %v4090, %v4132
  %v4217 = vsel %vm3178, %v4094, %v4134
  %v4220 = vsel %vm3178, %v4093, %v4136
  %v4223 = vsel %vm3178, %v4097, %v4138
  %v4226 = vsel %vm3178, %v4096, %v4140
  %v4229 = vsel %vm3178, %v4100, %v4142
  %v4232 = vsel %vm3178, %v4099, %v4144
  %v4265 = vunpack.c.l.b16 %v4146
  %v4266 = vunpack.c.l.b16 %v4163
  %v4267 = vunpack.c.l.b16 %v4187
  %v4268 = vunpack.c.l.b16 %v4211
  %v4269 = vunpack.c.h.b16 %v4146
  %v4270 = vunpack.c.h.b16 %v4163
  %v4271 = vunpack.c.h.b16 %v4187
  %v4272 = vunpack.c.h.b16 %v4211
  %v4273 = vunpack.c.l.b16 %v4148
  %v4274 = vunpack.c.l.b16 %v4166
  %v4275 = vunpack.c.l.b16 %v4190
  %v4276 = vunpack.c.l.b16 %v4214
  %v4277 = vunpack.c.l.b16 %v4150
  %v4278 = vunpack.c.l.b16 %v4169
  %v4279 = vunpack.c.l.b16 %v4193
  %v4280 = vunpack.c.l.b16 %v4217
  %v4281 = vunpack.c.h.b16 %v4150
  %v4282 = vunpack.c.h.b16 %v4169
  %v4283 = vunpack.c.h.b16 %v4193
  %v4284 = vunpack.c.h.b16 %v4217
  %v4285 = vunpack.c.l.b16 %v4152
  %v4286 = vunpack.c.l.b16 %v4172
  %v4287 = vunpack.c.l.b16 %v4196
  %v4288 = vunpack.c.l.b16 %v4220
  %v4289 = vunpack.c.l.b16 %v4154
  %v4290 = vunpack.c.l.b16 %v4175
  %v4291 = vunpack.c.l.b16 %v4199
  %v4292 = vunpack.c.l.b16 %v4223
  %v4293 = vunpack.c.h.b16 %v4154
  %v4294 = vunpack.c.h.b16 %v4175
  %v4295 = vunpack.c.h.b16 %v4199
  %v4296 = vunpack.c.h.b16 %v4223
  %v4297 = vunpack.c.l.b16 %v4156
  %v4298 = vunpack.c.l.b16 %v4178
  %v4299 = vunpack.c.l.b16 %v4202
  %v4300 = vunpack.c.l.b16 %v4226
  %v4301 = vunpack.c.l.b16 %v4158
  %v4302 = vunpack.c.l.b16 %v4181
  %v4303 = vunpack.c.l.b16 %v4205
  %v4304 = vunpack.c.l.b16 %v4229
  %v4305 = vunpack.c.h.b16 %v4158
  %v4306 = vunpack.c.h.b16 %v4181
  %v4307 = vunpack.c.h.b16 %v4205
  %v4308 = vunpack.c.h.b16 %v4229
  %v4309 = vunpack.c.l.b16 %v4160
  %v4310 = vunpack.c.l.b16 %v4184
  %v4311 = vunpack.c.l.b16 %v4208
  %v4312 = vunpack.c.l.b16 %v4232
  %v4313 = vld [vmem:[%s5] sm:$0xf]
  %v4314 = vld [vmem:[%s5 + $0x4] sm:$0xf]
  %v4315 = vld [vmem:[%s5 + $0x8] sm:$0xf]
  %v4316 = vld [vmem:[%s5 + $0xc] sm:$0xf]
  %v4317 = vld [vmem:[%s5 + $0x10] sm:$0xf]
  %v4318 = vld [vmem:[%s5 + $0x14] sm:$0xf]
  %v4319 = vld [vmem:[%s5 + $0x18] sm:$0xf]
  %v4320 = vld [vmem:[%s5 + $0x1c] sm:$0xf]
  %v4321 = vld [vmem:[%s5 + $0x20] sm:$0xf]
  %v4322 = vld [vmem:[%s5 + $0x24] sm:$0xf]
  %v4323 = vld [vmem:[%s5 + $0x28] sm:$0xf]
  %v4324 = vld [vmem:[%s5 + $0x2c] sm:$0xf]
  %v4325 = vld [vmem:[%s5 + $0x30] sm:$0xf]
  %v4326 = vld [vmem:[%s5 + $0x34] sm:$0xf]
  %v4327 = vld [vmem:[%s5 + $0x38] sm:$0xf]
  %v4328 = vld [vmem:[%s5 + $0x3c] sm:$0xf]
  %v4329 = vld [vmem:[%s5 + $0x40] sm:$0xf]
  %v4330 = vld [vmem:[%s5 + $0x44] sm:$0xf]
  %v4331 = vld [vmem:[%s5 + $0x48] sm:$0xf]
  %v4332 = vld [vmem:[%s5 + $0x4c] sm:$0xf]
  %v4333 = vld [vmem:[%s5 + $0x50] sm:$0xf]
  %v4334 = vld [vmem:[%s5 + $0x54] sm:$0xf]
  %v4335 = vld [vmem:[%s5 + $0x58] sm:$0xf]
  %v4336 = vld [vmem:[%s5 + $0x5c] sm:$0xf]
  %v4337 = vld [vmem:[%s5 + $0x60] sm:$0xf]
  %v4338 = vld [vmem:[%s5 + $0x64] sm:$0xf]
  %v4339 = vld [vmem:[%s5 + $0x68] sm:$0xf]
  %v4340 = vld [vmem:[%s5 + $0x6c] sm:$0xf]
  %v4341 = vld [vmem:[%s5 + $0x70] sm:$0xf]
  %v4342 = vld [vmem:[%s5 + $0x74] sm:$0xf]
  %v4343 = vld [vmem:[%s5 + $0x78] sm:$0xf]
  %v4344 = vld [vmem:[%s5 + $0x7c] sm:$0xf]
  %v4345 = vld [vmem:[%s5 + $0x80] sm:$0xf]
  %v4346 = vld [vmem:[%s5 + $0x84] sm:$0xf]
  %v4347 = vld [vmem:[%s5 + $0x88] sm:$0xf]
  %v4348 = vld [vmem:[%s5 + $0x8c] sm:$0xf]
  %v4349 = vld [vmem:[%s5 + $0x90] sm:$0xf]
  %v4350 = vld [vmem:[%s5 + $0x94] sm:$0xf]
  %v4351 = vld [vmem:[%s5 + $0x98] sm:$0xf]
  %v4352 = vld [vmem:[%s5 + $0x9c] sm:$0xf]
  %v4353 = vld [vmem:[%s5 + $0xa0] sm:$0xf]
  %v4354 = vld [vmem:[%s5 + $0xa4] sm:$0xf]
  %v4355 = vld [vmem:[%s5 + $0xa8] sm:$0xf]
  %v4356 = vld [vmem:[%s5 + $0xac] sm:$0xf]
  %v4357 = vld [vmem:[%s5 + $0xb0] sm:$0xf]
  %v4358 = vld [vmem:[%s5 + $0xb4] sm:$0xf]
  %v4359 = vld [vmem:[%s5 + $0xb8] sm:$0xf]
  %v4360 = vld [vmem:[%s5 + $0xbc] sm:$0xf]
  %v4361 = vld [vmem:[%s5 + $0xc0] sm:$0xf]
  %v4362 = vld [vmem:[%s5 + $0xc4] sm:$0xf]
  %v4363 = vld [vmem:[%s5 + $0xc8] sm:$0xf]
  %v4364 = vld [vmem:[%s5 + $0xcc] sm:$0xf]
  %v4365 = vld [vmem:[%s5 + $0xd0] sm:$0xf]
  %v4366 = vld [vmem:[%s5 + $0xd4] sm:$0xf]
  %v4367 = vld [vmem:[%s5 + $0xd8] sm:$0xf]
  %v4368 = vld [vmem:[%s5 + $0xdc] sm:$0xf]
  %v4369 = vld [vmem:[%s5 + $0xe0] sm:$0xf]
  %v4370 = vld [vmem:[%s5 + $0xe4] sm:$0xf]
  %v4371 = vld [vmem:[%s5 + $0xe8] sm:$0xf]
  %v4372 = vld [vmem:[%s5 + $0xec] sm:$0xf]
  %v4373 = vld [vmem:[%s5 + $0xf0] sm:$0xf]
  %v4374 = vld [vmem:[%s5 + $0xf4] sm:$0xf]
  %v4375 = vld [vmem:[%s5 + $0xf8] sm:$0xf]
  %v4376 = vld [vmem:[%s5 + $0xfc] sm:$0xf]
  %v4377 = vld [vmem:[%s6] sm:$0x1]
  %v4379 = vlaneseq
  %v4380 = vshrl.u32 %v4379, 7
  %v4381 = vsub.s32 0, %v4380
  %v4382 = vrot.slane %v4377, %v4381
  %v4384 = vpack.c.b16 %v4269, %v4265
  %v4385 = vpack.c.b16 %v4270, %v4266
  %v4386 = vpack.c.b16 %v4271, %v4267
  %v4387 = vpack.c.b16 %v4272, %v4268
  %v4388 = vpack.c.b16 %v4277, %v4273
  %v4389 = vpack.c.b16 %v4278, %v4274
  %v4390 = vpack.c.b16 %v4279, %v4275
  %v4391 = vpack.c.b16 %v4280, %v4276
  %v4392 = vpack.c.b16 %v4285, %v4281
  %v4393 = vpack.c.b16 %v4286, %v4282
  %v4394 = vpack.c.b16 %v4287, %v4283
  %v4395 = vpack.c.b16 %v4288, %v4284
  %v4396 = vpack.c.b16 %v4293, %v4289
  %v4397 = vpack.c.b16 %v4294, %v4290
  %v4398 = vpack.c.b16 %v4295, %v4291
  %v4399 = vpack.c.b16 %v4296, %v4292
  %v4400 = vpack.c.b16 %v4301, %v4297
  %v4401 = vpack.c.b16 %v4302, %v4298
  %v4402 = vpack.c.b16 %v4303, %v4299
  %v4403 = vpack.c.b16 %v4304, %v4300
  %v4404 = vpack.c.b16 %v4309, %v4305
  %v4405 = vpack.c.b16 %v4310, %v4306
  %v4406 = vpack.c.b16 %v4311, %v4307
  %v4407 = vpack.c.b16 %v4312, %v4308
  %v4496 = vunpack.c.l.b16 %v4313
  %v4497 = vunpack.c.l.b16 %v4314
  %v4498 = vunpack.c.l.b16 %v4315
  %v4499 = vunpack.c.l.b16 %v4316
  %v4500 = vunpack.c.l.b16 %v4317
  %v4501 = vunpack.c.l.b16 %v4318
  %v4502 = vunpack.c.l.b16 %v4319
  %v4503 = vunpack.c.l.b16 %v4320
  %v4504 = vunpack.c.l.b16 %v4321
  %v4505 = vunpack.c.l.b16 %v4322
  %v4506 = vunpack.c.l.b16 %v4323
  %v4507 = vunpack.c.l.b16 %v4324
  %v4508 = vunpack.c.l.b16 %v4325
  %v4509 = vunpack.c.l.b16 %v4326
  %v4510 = vunpack.c.l.b16 %v4327
  %v4511 = vunpack.c.l.b16 %v4328
  %v4512 = vunpack.c.l.b16 %v4329
  %v4513 = vunpack.c.l.b16 %v4330
  %v4514 = vunpack.c.l.b16 %v4331
  %v4515 = vunpack.c.l.b16 %v4332
  %v4516 = vunpack.c.l.b16 %v4333
  %v4517 = vunpack.c.l.b16 %v4334
  %v4518 = vunpack.c.l.b16 %v4335
  %v4519 = vunpack.c.l.b16 %v4336
  %v4520 = vunpack.c.l.b16 %v4337
  %v4521 = vunpack.c.l.b16 %v4338
  %v4522 = vunpack.c.l.b16 %v4339
  %v4523 = vunpack.c.l.b16 %v4340
  %v4524 = vunpack.c.l.b16 %v4341
  %v4525 = vunpack.c.l.b16 %v4342
  %v4526 = vunpack.c.l.b16 %v4343
  %v4527 = vunpack.c.l.b16 %v4344
  %v4528 = vunpack.c.l.b16 %v4345
  %v4529 = vunpack.c.l.b16 %v4346
  %v4530 = vunpack.c.l.b16 %v4347
  %v4531 = vunpack.c.l.b16 %v4348
  %v4532 = vunpack.c.l.b16 %v4349
  %v4533 = vunpack.c.l.b16 %v4350
  %v4534 = vunpack.c.l.b16 %v4351
  %v4535 = vunpack.c.l.b16 %v4352
  %v4536 = vunpack.c.l.b16 %v4353
  %v4537 = vunpack.c.l.b16 %v4354
  %v4538 = vunpack.c.l.b16 %v4355
  %v4539 = vunpack.c.l.b16 %v4356
  %v4540 = vunpack.c.l.b16 %v4357
  %v4541 = vunpack.c.l.b16 %v4358
  %v4542 = vunpack.c.l.b16 %v4359
  %v4543 = vunpack.c.l.b16 %v4360
  %v4544 = vunpack.c.l.b16 %v4361
  %v4545 = vunpack.c.l.b16 %v4362
  %v4546 = vunpack.c.l.b16 %v4363
  %v4547 = vunpack.c.l.b16 %v4364
  %v4548 = vunpack.c.l.b16 %v4365
  %v4549 = vunpack.c.l.b16 %v4366
  %v4550 = vunpack.c.l.b16 %v4367
  %v4551 = vunpack.c.l.b16 %v4368
  %v4552 = vunpack.c.l.b16 %v4369
  %v4553 = vunpack.c.l.b16 %v4370
  %v4554 = vunpack.c.l.b16 %v4371
  %v4555 = vunpack.c.l.b16 %v4372
  %v4556 = vunpack.c.l.b16 %v4373
  %v4557 = vunpack.c.l.b16 %v4374
  %v4558 = vunpack.c.l.b16 %v4375
  %v4559 = vunpack.c.l.b16 %v4376
  %v4560 = vpack.c.b16 %v4497, %v4496
  %v4561 = vpack.c.b16 %v4499, %v4498
  %v4562 = vpack.c.b16 %v4501, %v4500
  %v4563 = vpack.c.b16 %v4503, %v4502
  %v4564 = vpack.c.b16 %v4505, %v4504
  %v4565 = vpack.c.b16 %v4507, %v4506
  %v4566 = vpack.c.b16 %v4509, %v4508
  %v4567 = vpack.c.b16 %v4511, %v4510
  %v4568 = vpack.c.b16 %v4513, %v4512
  %v4569 = vpack.c.b16 %v4515, %v4514
  %v4570 = vpack.c.b16 %v4517, %v4516
  %v4571 = vpack.c.b16 %v4519, %v4518
  %v4572 = vpack.c.b16 %v4521, %v4520
  %v4573 = vpack.c.b16 %v4523, %v4522
  %v4574 = vpack.c.b16 %v4525, %v4524
  %v4575 = vpack.c.b16 %v4527, %v4526
  %v4576 = vpack.c.b16 %v4529, %v4528
  %v4577 = vpack.c.b16 %v4531, %v4530
  %v4578 = vpack.c.b16 %v4533, %v4532
  %v4579 = vpack.c.b16 %v4535, %v4534
  %v4580 = vpack.c.b16 %v4537, %v4536
  %v4581 = vpack.c.b16 %v4539, %v4538
  %v4582 = vpack.c.b16 %v4541, %v4540
  %v4583 = vpack.c.b16 %v4543, %v4542
  %v4584 = vpack.c.b16 %v4545, %v4544
  %v4585 = vpack.c.b16 %v4547, %v4546
  %v4586 = vpack.c.b16 %v4549, %v4548
  %v4587 = vpack.c.b16 %v4551, %v4550
  %v4588 = vpack.c.b16 %v4553, %v4552
  %v4589 = vpack.c.b16 %v4555, %v4554
  %v4590 = vpack.c.b16 %v4557, %v4556
  %v4591 = vpack.c.b16 %v4559, %v4558
  %4624 = vmatprep.subr.bf16.mxu0 0
  %4625 = vmatpush1.bf16.msra.mxu0 %v4560
  %4626 = vmatprep.subr.bf16.mxu0 0
  %4627 = vmatpush1.bf16.msra.mxu0 %v4561
  %4628 = vmatprep.subr.bf16.mxu0 0
  %4629 = vmatpush1.bf16.msra.mxu0 %v4562
  %4630 = vmatprep.subr.bf16.mxu0 0
  %4631 = vmatpush1.bf16.msra.mxu0 %v4563
  %4632 = vmatprep.subr.bf16.mxu0 0
  %4633 = vmatpush1.bf16.msra.mxu0 %v4564
  %4634 = vmatprep.subr.bf16.mxu0 0
  %4635 = vmatpush1.bf16.msra.mxu0 %v4565
  %4636 = vmatprep.subr.bf16.mxu0 0
  %4637 = vmatpush1.bf16.msra.mxu0 %v4566
  %4638 = vmatprep.subr.bf16.mxu0 0
  %4639 = vmatpush1.bf16.msra.mxu0 %v4567
  %4640 = vmatprep.subr.bf16.mxu0 0
  %4641 = vmatpush1.bf16.msra.mxu0 %v4568
  %4642 = vmatprep.subr.bf16.mxu0 0
  %4643 = vmatpush1.bf16.msra.mxu0 %v4569
  %4644 = vmatprep.subr.bf16.mxu0 0
  %4645 = vmatpush1.bf16.msra.mxu0 %v4570
  %4646 = vmatprep.subr.bf16.mxu0 0
  %4647 = vmatpush1.bf16.msra.mxu0 %v4571
  %4648 = vmatprep.subr.bf16.mxu0 0
  %4649 = vmatpush1.bf16.msra.mxu0 %v4572
  %4650 = vmatprep.subr.bf16.mxu0 0
  %4651 = vmatpush1.bf16.msra.mxu0 %v4573
  %4652 = vmatprep.subr.bf16.mxu0 0
  %4653 = vmatpush1.bf16.msra.mxu0 %v4574
  %4654 = vmatprep.subr.bf16.mxu0 0
  %4655 = vmatpush1.bf16.msra.mxu0 %v4575
  %4656 = vmatprep.mubr.bf16.mxu0 %v4385
  %4657 = vmatmul.mubr.bf16.gmra.mrb[0].mxu0 %v4384
  %v4658 = vpop.f32.mrb[0].mxu0
  %v4659 = vadd.f32 %v4382, %v4658
  %v4660 = vpop.f32.mrb[0].mxu0
  %v4661 = vpop.f32.mrb[0].mxu0
  %v4662 = vadd.f32 %v4382, %v4661
  %v4663 = vpop.f32.mrb[0].mxu0
  %4664 = vmatprep.mubr.bf16.mxu0 %v4389
  %4665 = vmatmul.mubr.bf16.gmra.mrb[0].mxu0 %v4388
  %v4666 = vpop.f32.mrb[0].mxu0
  %v4667 = vadd.f32 %v4382, %v4666
  %v4668 = vpop.f32.mrb[0].mxu0
  %v4669 = vpop.f32.mrb[0].mxu0
  %v4670 = vadd.f32 %v4382, %v4669
  %v4671 = vpop.f32.mrb[0].mxu0
  %4672 = vmatprep.mubr.bf16.mxu0 %v4393
  %4673 = vmatmul.mubr.bf16.gmra.mrb[0].mxu0 %v4392
  %v4674 = vpop.f32.mrb[0].mxu0
  %v4675 = vadd.f32 %v4382, %v4674
  %v4676 = vpop.f32.mrb[0].mxu0
  %v4677 = vpop.f32.mrb[0].mxu0
  %v4678 = vadd.f32 %v4382, %v4677
  %v4679 = vpop.f32.mrb[0].mxu0
  %4680 = vmatprep.mubr.bf16.mxu0 %v4397
  %4681 = vmatmul.mubr.bf16.gmra.mrb[0].mxu0 %v4396
  %v4682 = vpop.f32.mrb[0].mxu0
  %v4683 = vadd.f32 %v4382, %v4682
  %v4684 = vpop.f32.mrb[0].mxu0
  %v4685 = vpop.f32.mrb[0].mxu0
  %v4686 = vadd.f32 %v4382, %v4685
  %v4687 = vpop.f32.mrb[0].mxu0
  %4688 = vmatprep.mubr.bf16.mxu0 %v4401
  %4689 = vmatmul.mubr.bf16.gmra.mrb[0].mxu0 %v4400
  %v4690 = vpop.f32.mrb[0].mxu0
  %v4691 = vadd.f32 %v4382, %v4690
  %v4692 = vpop.f32.mrb[0].mxu0
  %v4693 = vpop.f32.mrb[0].mxu0
  %v4694 = vadd.f32 %v4382, %v4693
  %v4695 = vpop.f32.mrb[0].mxu0
  %4696 = vmatprep.mubr.bf16.mxu0 %v4405
  %4697 = vmatmul.mubr.bf16.gmra.mrb[0].mxu0 %v4404
  %v4698 = vpop.f32.mrb[0].mxu0
  %v4699 = vadd.f32 %v4382, %v4698
  %v4700 = vpop.f32.mrb[0].mxu0
  %v4701 = vpop.f32.mrb[0].mxu0
  %v4702 = vadd.f32 %v4382, %v4701
  %v4703 = vpop.f32.mrb[0].mxu0
  %4704 = vdwg.mxu0
  %4705 = vmatprep.subr.bf16.mxu0 0
  %4706 = vmatpush1.bf16.msra.mxu0 %v4576
  %4707 = vmatprep.subr.bf16.mxu0 0
  %4708 = vmatpush1.bf16.msra.mxu0 %v4577
  %4709 = vmatprep.subr.bf16.mxu0 0
  %4710 = vmatpush1.bf16.msra.mxu0 %v4578
  %4711 = vmatprep.subr.bf16.mxu0 0
  %4712 = vmatpush1.bf16.msra.mxu0 %v4579
  %4713 = vmatprep.subr.bf16.mxu0 0
  %4714 = vmatpush1.bf16.msra.mxu0 %v4580
  %4715 = vmatprep.subr.bf16.mxu0 0
  %4716 = vmatpush1.bf16.msra.mxu0 %v4581
  %4717 = vmatprep.subr.bf16.mxu0 0
  %4718 = vmatpush1.bf16.msra.mxu0 %v4582
  %4719 = vmatprep.subr.bf16.mxu0 0
  %4720 = vmatpush1.bf16.msra.mxu0 %v4583
  %4721 = vmatprep.subr.bf16.mxu0 0
  %4722 = vmatpush1.bf16.msra.mxu0 %v4584
  %4723 = vmatprep.subr.bf16.mxu0 0
  %4724 = vmatpush1.bf16.msra.mxu0 %v4585
  %4725 = vmatprep.subr.bf16.mxu0 0
  %4726 = vmatpush1.bf16.msra.mxu0 %v4586
  %4727 = vmatprep.subr.bf16.mxu0 0
  %4728 = vmatpush1.bf16.msra.mxu0 %v4587
  %4729 = vmatprep.subr.bf16.mxu0 0
  %4730 = vmatpush1.bf16.msra.mxu0 %v4588
  %4731 = vmatprep.subr.bf16.mxu0 0
  %4732 = vmatpush1.bf16.msra.mxu0 %v4589
  %4733 = vmatprep.subr.bf16.mxu0 0
  %4734 = vmatpush1.bf16.msra.mxu0 %v4590
  %4735 = vmatprep.subr.bf16.mxu0 0
  %4736 = vmatpush1.bf16.msra.mxu0 %v4591
  %4737 = vmatprep.mubr.bf16.mxu0 %v4387
  %4738 = vmatmul.mubr.bf16.gmra.mrb[0].mxu0 %v4386
  %v4739 = vpop.f32.mrb[0].mxu0
  %v4740 = vadd.f32 %v4659, %v4739
  %v4741 = vpop.f32.mrb[0].mxu0
  %v4742 = vpop.f32.mrb[0].mxu0
  %v4743 = vadd.f32 %v4662, %v4742
  %v4744 = vpop.f32.mrb[0].mxu0
  %4745 = vmatprep.mubr.bf16.mxu0 %v4391
  %4746 = vmatmul.mubr.bf16.gmra.mrb[0].mxu0 %v4390
  %v4747 = vpop.f32.mrb[0].mxu0
  %v4748 = vadd.f32 %v4667, %v4747
  %v4749 = vpop.f32.mrb[0].mxu0
  %v4750 = vpop.f32.mrb[0].mxu0
  %v4751 = vadd.f32 %v4670, %v4750
  %v4752 = vpop.f32.mrb[0].mxu0
  %4753 = vmatprep.mubr.bf16.mxu0 %v4395
  %4754 = vmatmul.mubr.bf16.gmra.mrb[0].mxu0 %v4394
  %v4755 = vpop.f32.mrb[0].mxu0
  %v4756 = vadd.f32 %v4675, %v4755
  %v4757 = vpop.f32.mrb[0].mxu0
  %v4758 = vpop.f32.mrb[0].mxu0
  %v4759 = vadd.f32 %v4678, %v4758
  %v4760 = vpop.f32.mrb[0].mxu0
  %4761 = vmatprep.mubr.bf16.mxu0 %v4399
  %4762 = vmatmul.mubr.bf16.gmra.mrb[0].mxu0 %v4398
  %v4763 = vpop.f32.mrb[0].mxu0
  %v4764 = vadd.f32 %v4683, %v4763
  %v4765 = vpop.f32.mrb[0].mxu0
  %v4766 = vpop.f32.mrb[0].mxu0
  %v4767 = vadd.f32 %v4686, %v4766
  %v4768 = vpop.f32.mrb[0].mxu0
  %4769 = vmatprep.mubr.bf16.mxu0 %v4403
  %4770 = vmatmul.mubr.bf16.gmra.mrb[0].mxu0 %v4402
  %v4771 = vpop.f32.mrb[0].mxu0
  %v4772 = vadd.f32 %v4691, %v4771
  %v4773 = vpop.f32.mrb[0].mxu0
  %v4774 = vpop.f32.mrb[0].mxu0
  %v4775 = vadd.f32 %v4694, %v4774
  %v4776 = vpop.f32.mrb[0].mxu0
  %4777 = vmatprep.mubr.bf16.mxu0 %v4407
  %4778 = vmatmul.mubr.bf16.gmra.mrb[0].mxu0 %v4406
  %v4779 = vpop.f32.mrb[0].mxu0
  %v4780 = vadd.f32 %v4699, %v4779
  %v4781 = vpop.f32.mrb[0].mxu0
  %v4782 = vpop.f32.mrb[0].mxu0
  %v4783 = vadd.f32 %v4702, %v4782
  %v4784 = vpop.f32.mrb[0].mxu0
  %4785 = vdwg.mxu0
  %v4786 = vmax.f32 %v4740, 0.0
  %v4787 = vmax.f32 %v4743, 0.0
  %v4788 = vmax.f32 %v4748, 0.0
  %v4789 = vmax.f32 %v4751, 0.0
  %v4790 = vmax.f32 %v4756, 0.0
  %v4791 = vmax.f32 %v4759, 0.0
  %v4792 = vmax.f32 %v4764, 0.0
  %v4793 = vmax.f32 %v4767, 0.0
  %v4794 = vmax.f32 %v4772, 0.0
  %v4795 = vmax.f32 %v4775, 0.0
  %v4796 = vmax.f32 %v4780, 0.0
  %v4797 = vmax.f32 %v4783, 0.0
  %v4798 = vpack.c.bf16 %v4787, %v4786
  %v4799 = vpack.c.bf16 %v4789, %v4788
  %v4800 = vpack.c.bf16 %v4791, %v4790
  %v4801 = vpack.c.bf16 %v4793, %v4792
  %v4802 = vpack.c.bf16 %v4795, %v4794
  %v4803 = vpack.c.bf16 %v4797, %v4796
  %v4810 = vunpack.c.l.b16 %v4798
  %v4811 = vunpack.c.h.b16 %v4798
  %v4812 = vunpack.c.l.b16 %v4799
  %v4813 = vunpack.c.h.b16 %v4799
  %v4814 = vunpack.c.l.b16 %v4800
  %v4815 = vunpack.c.h.b16 %v4800
  %v4816 = vunpack.c.l.b16 %v4801
  %v4817 = vunpack.c.h.b16 %v4801
  %v4818 = vunpack.c.l.b16 %v4802
  %v4819 = vunpack.c.h.b16 %v4802
  %v4820 = vunpack.c.l.b16 %v4803
  %v4821 = vunpack.c.h.b16 %v4803
  %v4822 = vpack.c.b16 %v4810, %v4810
  %v4823 = vpack.c.b16 %v4811, %v4811
  %v4824 = vpack.c.b16 %v4812, %v4812
  %v4825 = vpack.c.b16 %v4813, %v4813
  %v4826 = vpack.c.b16 %v4814, %v4814
  %v4827 = vpack.c.b16 %v4815, %v4815
  %v4828 = vpack.c.b16 %v4816, %v4816
  %v4829 = vpack.c.b16 %v4817, %v4817
  %v4830 = vpack.c.b16 %v4818, %v4818
  %v4831 = vpack.c.b16 %v4819, %v4819
  %v4832 = vpack.c.b16 %v4820, %v4820
  %v4833 = vpack.c.b16 %v4821, %v4821
  %v4846 = vunpack.c.l.bf16 %v4822
  %v4847 = vunpack.c.l.bf16 %v4823
  %v4848 = vunpack.c.l.bf16 %v4824
  %v4849 = vunpack.c.l.bf16 %v4825
  %v4850 = vunpack.c.l.bf16 %v4826
  %v4851 = vunpack.c.l.bf16 %v4827
  %v4852 = vunpack.c.l.bf16 %v4828
  %v4853 = vunpack.c.l.bf16 %v4829
  %v4854 = vunpack.c.l.bf16 %v4830
  %v4855 = vunpack.c.l.bf16 %v4831
  %v4856 = vunpack.c.l.bf16 %v4832
  %v4857 = vunpack.c.l.bf16 %v4833
  %v4858 = vsel %vm3195, %v4846, -inf
  %v4859 = vsel %vm3195, %v4847, -inf
  %v4860 = vmax.f32 %v4858, %v4859
  %vm4861 = vcmask 780288
  %v4862 = vsel %vm4861, %v4848, -inf
  %v4863 = vmax.f32 %v4860, %v4862
  %v4864 = vrot.slane %v4863, 4
  %v4865 = vmax.f32 %v4863, %v4864
  %v4866 = vrot.slane %v4865, 2
  %v4867 = vmax.f32 %v4865, %v4866
  %v4868 = vrot.slane %v4867, 1
  %v4869 = vmax.f32 %v4867, %v4868
  %v4870 = vsel %vm3195, %v4849, -inf
  %v4871 = vsel %vm3195, %v4850, -inf
  %v4872 = vmax.f32 %v4870, %v4871
  %v4873 = vsel %vm4861, %v4851, -inf
  %v4874 = vmax.f32 %v4872, %v4873
  %v4875 = vrot.slane %v4874, 4
  %v4876 = vmax.f32 %v4874, %v4875
  %v4877 = vrot.slane %v4876, 2
  %v4878 = vmax.f32 %v4876, %v4877
  %v4879 = vrot.slane %v4878, 1
  %v4880 = vmax.f32 %v4878, %v4879
  %v4881 = vsel %vm3195, %v4852, -inf
  %v4882 = vsel %vm3195, %v4853, -inf
  %v4883 = vmax.f32 %v4881, %v4882
  %v4884 = vsel %vm4861, %v4854, -inf
  %v4885 = vmax.f32 %v4883, %v4884
  %v4886 = vrot.slane %v4885, 4
  %v4887 = vmax.f32 %v4885, %v4886
  %v4888 = vrot.slane %v4887, 2
  %v4889 = vmax.f32 %v4887, %v4888
  %v4890 = vrot.slane %v4889, 1
  %v4891 = vmax.f32 %v4889, %v4890
  %v4892 = vsel %vm3195, %v4855, -inf
  %v4893 = vsel %vm3195, %v4856, -inf
  %v4894 = vmax.f32 %v4892, %v4893
  %v4895 = vsel %vm4861, %v4857, -inf
  %v4896 = vmax.f32 %v4894, %v4895
  %v4897 = vrot.slane %v4896, 4
  %v4898 = vmax.f32 %v4896, %v4897
  %v4899 = vrot.slane %v4898, 2
  %v4900 = vmax.f32 %v4898, %v4899
  %v4901 = vrot.slane %v4900, 1
  %v4902 = vmax.f32 %v4900, %v4901
  %v4903 = vpack.c.bf16 %v4869, %v4869
  %v4904 = vpack.c.bf16 %v4880, %v4880
  %v4905 = vpack.c.bf16 %v4891, %v4891
  %v4906 = vpack.c.bf16 %v4902, %v4902
  %v4907 = vld [vmem:[%s7] sm:$0xff]
  %v4908 = vld [vmem:[%s7 + $0x8] sm:$0xff]
  %v4909 = vld [vmem:[%s7 + $0x10] sm:$0xff]
  %v4910 = vld [vmem:[%s7 + $0x18] sm:$0xff]
  %v4911 = vld [vmem:[%s7 + $0x20] sm:$0xff]
  %v4912 = vld [vmem:[%s7 + $0x28] sm:$0xff]
  %v4913 = vld [vmem:[%s7 + $0x30] sm:$0xff]
  %v4914 = vld [vmem:[%s7 + $0x38] sm:$0xff]
  %v4915 = vld [vmem:[%s7 + $0x40] sm:$0xff]
  %v4916 = vld [vmem:[%s7 + $0x48] sm:$0xff]
  %v4917 = vld [vmem:[%s7 + $0x50] sm:$0xff]
  %v4918 = vld [vmem:[%s7 + $0x58] sm:$0xff]
  %v4919 = vld [vmem:[%s8] sm:$0x3]
  %v4921 = vlaneseq
  %v4922 = vshrl.u32 %v4921, 7
  %v4923 = vsub.s32 0, %v4922
  %v4924 = vrot.slane %v4919, %v4923
  %v4925 = vlaneseq
  %v4926 = vshrl.u32 %v4925, 7
  %v4927 = vsub.s32 1, %v4926
  %v4928 = vrot.slane %v4919, %v4927
  %v4935 = vunpack.c.l.b16 %v4903
  %v4936 = vunpack.c.l.b16 %v4904
  %v4937 = vunpack.c.l.b16 %v4905
  %v4938 = vunpack.c.l.b16 %v4906
  %vm4939 = vcmask 1041409
  %v4940 = vsel %vm4939, %v4936, %v4935
  %vm4941 = vcmask 1042434
  %v4942 = vsel %vm4941, %v4937, %v4940
  %vm4943 = vcmask 1043459
  %v4944 = vsel %vm4943, %v4938, %v4942
  %v4945 = vpack.c.b16 %v4944, %v4944
  %v4958 = vunpack.c.l.b16 %v4907
  %v4959 = vunpack.c.h.b16 %v4907
  %v4960 = vunpack.c.l.b16 %v4908
  %v4961 = vunpack.c.h.b16 %v4908
  %v4962 = vunpack.c.l.b16 %v4909
  %v4963 = vunpack.c.h.b16 %v4909
  %v4964 = vunpack.c.l.b16 %v4910
  %v4965 = vunpack.c.h.b16 %v4910
  %v4966 = vunpack.c.l.b16 %v4911
  %v4967 = vunpack.c.h.b16 %v4911
  %v4968 = vunpack.c.l.b16 %v4912
  %v4969 = vunpack.c.h.b16 %v4912
  %v4970 = vunpack.c.l.b16 %v4913
  %v4971 = vunpack.c.h.b16 %v4913
  %v4972 = vunpack.c.l.b16 %v4914
  %v4973 = vunpack.c.h.b16 %v4914
  %v4974 = vunpack.c.l.b16 %v4915
  %v4975 = vunpack.c.h.b16 %v4915
  %v4976 = vunpack.c.l.b16 %v4916
  %v4977 = vunpack.c.h.b16 %v4916
  %v4978 = vunpack.c.l.b16 %v4917
  %v4979 = vunpack.c.h.b16 %v4917
  %v4980 = vunpack.c.l.b16 %v4918
  %v4981 = vunpack.c.h.b16 %v4918
  %v4982 = vpack.c.b16 %v4960, %v4958
  %v4983 = vpack.c.b16 %v4961, %v4959
  %v4984 = vpack.c.b16 %v4964, %v4962
  %v4985 = vpack.c.b16 %v4965, %v4963
  %v4986 = vpack.c.b16 %v4968, %v4966
  %v4987 = vpack.c.b16 %v4969, %v4967
  %v4988 = vpack.c.b16 %v4972, %v4970
  %v4989 = vpack.c.b16 %v4973, %v4971
  %v4990 = vpack.c.b16 %v4976, %v4974
  %v4991 = vpack.c.b16 %v4977, %v4975
  %v4992 = vpack.c.b16 %v4980, %v4978
  %v4993 = vpack.c.b16 %v4981, %v4979
  %v5007 = vsel %vm3195, %v4945, 0
  %5009 = vmatprep.subr.bf16.mxu0 %v4983
  %5010 = vmatpush1.bf16.msra.mxu0 %v4982
  %5011 = vmatprep.subr.bf16.mxu0 %v4985
  %5012 = vmatpush1.bf16.msra.mxu0 %v4984
  %5013 = vmatprep.subr.bf16.mxu0 %v4987
  %5014 = vmatpush1.bf16.msra.mxu0 %v4986
  %5015 = vmatprep.subr.bf16.mxu0 %v4989
  %5016 = vmatpush1.bf16.msra.mxu0 %v4988
  %5017 = vmatprep.subr.bf16.mxu0 %v4991
  %5018 = vmatpush1.bf16.msra.mxu0 %v4990
  %5019 = vmatprep.subr.bf16.mxu0 %v4993
  %5020 = vmatpush1.bf16.msra.mxu0 %v4992
  %5021 = vmatprep.subr.bf16.mxu0 0
  %5022 = vmatpush1.bf16.msra.mxu0 0
  %5023 = vmatprep.subr.bf16.mxu0 0
  %5024 = vmatpush1.bf16.msra.mxu0 0
  %5025 = vmatprep.subr.bf16.mxu0 0
  %5026 = vmatpush1.bf16.msra.mxu0 0
  %5027 = vmatprep.subr.bf16.mxu0 0
  %5028 = vmatpush1.bf16.msra.mxu0 0
  %5029 = vmatprep.subr.bf16.mxu0 0
  %5030 = vmatpush1.bf16.msra.mxu0 0
  %5031 = vmatprep.subr.bf16.mxu0 0
  %5032 = vmatpush1.bf16.msra.mxu0 0
  %5033 = vmatprep.subr.bf16.mxu0 0
  %5034 = vmatpush1.bf16.msra.mxu0 0
  %5035 = vmatprep.subr.bf16.mxu0 0
  %5036 = vmatpush1.bf16.msra.mxu0 0
  %5037 = vmatprep.subr.bf16.mxu0 0
  %5038 = vmatpush1.bf16.msra.mxu0 0
  %5039 = vmatprep.subr.bf16.mxu0 0
  %5040 = vmatpush1.bf16.msra.mxu0 0
  %5041 = vmatprep.mubr.bf16.mxu0 0
  %5042 = vmatmul.mubr.bf16.gmra.mrb[0].mxu0 %v5007
  %v5043 = vpop.f32.mrb[0].mxu0
  %v5044 = vadd.f32 %v4924, %v5043
  %v5045 = vpop.f32.mrb[0].mxu0
  %v5046 = vadd.f32 %v4928, %v5045
  %v5047 = vpop.f32.mrb[0].mxu0
  %v5048 = vpop.f32.mrb[0].mxu0
  %5049 = vdwg.mxu0
  %v5050 = vmax.f32 %v5044, 0.0
  %v5051 = vmax.f32 %v5046, 0.0
  %v5052 = vpack.c.bf16 %v5050, %v5050
  %v5053 = vpack.c.bf16 %v5051, %v5051
  %v5054 = vld [vmem:[%s9] sm:$0xf]
  %v5055 = vld [vmem:[%s9 + $0x4] sm:$0xf]
  %v5056 = vld [vmem:[%s9 + $0x8] sm:$0xf]
  %v5057 = vld [vmem:[%s9 + $0xc] sm:$0xf]
  %v5058 = vld [vmem:[%s9 + $0x10] sm:$0xf]
  %v5059 = vld [vmem:[%s9 + $0x14] sm:$0xf]
  %v5060 = vld [vmem:[%s9 + $0x18] sm:$0xf]
  %v5061 = vld [vmem:[%s9 + $0x1c] sm:$0xf]
  %v5062 = vld [vmem:[%s9 + $0x20] sm:$0xf]
  %v5063 = vld [vmem:[%s9 + $0x24] sm:$0xf]
  %v5064 = vld [vmem:[%s9 + $0x28] sm:$0xf]
  %v5065 = vld [vmem:[%s9 + $0x2c] sm:$0xf]
  %v5066 = vld [vmem:[%s9 + $0x30] sm:$0xf]
  %v5067 = vld [vmem:[%s9 + $0x34] sm:$0xf]
  %v5068 = vld [vmem:[%s9 + $0x38] sm:$0xf]
  %v5069 = vld [vmem:[%s9 + $0x3c] sm:$0xf]
  %v5070 = vld [vmem:[%s9 + $0x40] sm:$0xf]
  %v5071 = vld [vmem:[%s9 + $0x44] sm:$0xf]
  %v5072 = vld [vmem:[%s9 + $0x48] sm:$0xf]
  %v5073 = vld [vmem:[%s9 + $0x4c] sm:$0xf]
  %v5074 = vld [vmem:[%s9 + $0x50] sm:$0xf]
  %v5075 = vld [vmem:[%s9 + $0x54] sm:$0xf]
  %v5076 = vld [vmem:[%s9 + $0x58] sm:$0xf]
  %v5077 = vld [vmem:[%s9 + $0x5c] sm:$0xf]
  %v5078 = vld [vmem:[%s9 + $0x60] sm:$0xf]
  %v5079 = vld [vmem:[%s9 + $0x64] sm:$0xf]
  %v5080 = vld [vmem:[%s9 + $0x68] sm:$0xf]
  %v5081 = vld [vmem:[%s9 + $0x6c] sm:$0xf]
  %v5082 = vld [vmem:[%s9 + $0x70] sm:$0xf]
  %v5083 = vld [vmem:[%s9 + $0x74] sm:$0xf]
  %v5084 = vld [vmem:[%s9 + $0x78] sm:$0xf]
  %v5085 = vld [vmem:[%s9 + $0x7c] sm:$0xf]
  %v5086 = vld [vmem:[%s10] sm:$0x1]
  %v5088 = vlaneseq
  %v5089 = vshrl.u32 %v5088, 7
  %v5090 = vsub.s32 0, %v5089
  %v5091 = vrot.slane %v5086, %v5090
  %v5125 = vunpack.c.l.b16 %v5054
  %v5126 = vunpack.c.l.b16 %v5055
  %v5127 = vunpack.c.l.b16 %v5056
  %v5128 = vunpack.c.l.b16 %v5057
  %v5129 = vunpack.c.l.b16 %v5058
  %v5130 = vunpack.c.l.b16 %v5059
  %v5131 = vunpack.c.l.b16 %v5060
  %v5132 = vunpack.c.l.b16 %v5061
  %v5133 = vunpack.c.l.b16 %v5062
  %v5134 = vunpack.c.l.b16 %v5063
  %v5135 = vunpack.c.l.b16 %v5064
  %v5136 = vunpack.c.l.b16 %v5065
  %v5137 = vunpack.c.l.b16 %v5066
  %v5138 = vunpack.c.l.b16 %v5067
  %v5139 = vunpack.c.l.b16 %v5068
  %v5140 = vunpack.c.l.b16 %v5069
  %v5141 = vunpack.c.l.b16 %v5070
  %v5142 = vunpack.c.l.b16 %v5071
  %v5143 = vunpack.c.l.b16 %v5072
  %v5144 = vunpack.c.l.b16 %v5073
  %v5145 = vunpack.c.l.b16 %v5074
  %v5146 = vunpack.c.l.b16 %v5075
  %v5147 = vunpack.c.l.b16 %v5076
  %v5148 = vunpack.c.l.b16 %v5077
  %v5149 = vunpack.c.l.b16 %v5078
  %v5150 = vunpack.c.l.b16 %v5079
  %v5151 = vunpack.c.l.b16 %v5080
  %v5152 = vunpack.c.l.b16 %v5081
  %v5153 = vunpack.c.l.b16 %v5082
  %v5154 = vunpack.c.l.b16 %v5083
  %v5155 = vunpack.c.l.b16 %v5084
  %v5156 = vunpack.c.l.b16 %v5085
  %v5157 = vpack.c.b16 %v5126, %v5125
  %v5158 = vpack.c.b16 %v5128, %v5127
  %v5159 = vpack.c.b16 %v5130, %v5129
  %v5160 = vpack.c.b16 %v5132, %v5131
  %v5161 = vpack.c.b16 %v5134, %v5133
  %v5162 = vpack.c.b16 %v5136, %v5135
  %v5163 = vpack.c.b16 %v5138, %v5137
  %v5164 = vpack.c.b16 %v5140, %v5139
  %v5165 = vpack.c.b16 %v5142, %v5141
  %v5166 = vpack.c.b16 %v5144, %v5143
  %v5167 = vpack.c.b16 %v5146, %v5145
  %v5168 = vpack.c.b16 %v5148, %v5147
  %v5169 = vpack.c.b16 %v5150, %v5149
  %v5170 = vpack.c.b16 %v5152, %v5151
  %v5171 = vpack.c.b16 %v5154, %v5153
  %v5172 = vpack.c.b16 %v5156, %v5155
  %5189 = vmatprep.subr.bf16.mxu0 0
  %5190 = vmatpush1.bf16.msra.mxu0 %v5157
  %5191 = vmatprep.subr.bf16.mxu0 0
  %5192 = vmatpush1.bf16.msra.mxu0 %v5158
  %5193 = vmatprep.subr.bf16.mxu0 0
  %5194 = vmatpush1.bf16.msra.mxu0 %v5159
  %5195 = vmatprep.subr.bf16.mxu0 0
  %5196 = vmatpush1.bf16.msra.mxu0 %v5160
  %5197 = vmatprep.subr.bf16.mxu0 0
  %5198 = vmatpush1.bf16.msra.mxu0 %v5161
  %5199 = vmatprep.subr.bf16.mxu0 0
  %5200 = vmatpush1.bf16.msra.mxu0 %v5162
  %5201 = vmatprep.subr.bf16.mxu0 0
  %5202 = vmatpush1.bf16.msra.mxu0 %v5163
  %5203 = vmatprep.subr.bf16.mxu0 0
  %5204 = vmatpush1.bf16.msra.mxu0 %v5164
  %5205 = vmatprep.subr.bf16.mxu0 0
  %5206 = vmatpush1.bf16.msra.mxu0 %v5165
  %5207 = vmatprep.subr.bf16.mxu0 0
  %5208 = vmatpush1.bf16.msra.mxu0 %v5166
  %5209 = vmatprep.subr.bf16.mxu0 0
  %5210 = vmatpush1.bf16.msra.mxu0 %v5167
  %5211 = vmatprep.subr.bf16.mxu0 0
  %5212 = vmatpush1.bf16.msra.mxu0 %v5168
  %5213 = vmatprep.subr.bf16.mxu0 0
  %5214 = vmatpush1.bf16.msra.mxu0 %v5169
  %5215 = vmatprep.subr.bf16.mxu0 0
  %5216 = vmatpush1.bf16.msra.mxu0 %v5170
  %5217 = vmatprep.subr.bf16.mxu0 0
  %5218 = vmatpush1.bf16.msra.mxu0 %v5171
  %5219 = vmatprep.subr.bf16.mxu0 0
  %5220 = vmatpush1.bf16.msra.mxu0 %v5172
  %5221 = vmatprep.mubr.bf16.mxu0 %v5053
  %5222 = vmatmul.mubr.bf16.gmra.mrb[0].mxu0 %v5052
  %v5223 = vpop.f32.mrb[0].mxu0
  %v5224 = vadd.f32 %v5091, %v5223
  %v5225 = vpop.f32.mrb[0].mxu0
  %v5226 = vpop.f32.mrb[0].mxu0
  %v5227 = vpop.f32.mrb[0].mxu0
  %5228 = vdwg.mxu0
  %v5229 = vmax.f32 %v5224, 0.0
  %v5230 = vpack.c.bf16 %v5229, %v5229
  %v5231 = vld [vmem:[%s11] sm:$0xf]
  %v5232 = vld [vmem:[%s11 + $0x4] sm:$0xf]
  %v5233 = vld [vmem:[%s11 + $0x8] sm:$0xf]
  %v5234 = vld [vmem:[%s11 + $0xc] sm:$0xf]
  %v5235 = vld [vmem:[%s11 + $0x10] sm:$0xf]
  %v5236 = vld [vmem:[%s11 + $0x14] sm:$0xf]
  %v5237 = vld [vmem:[%s11 + $0x18] sm:$0xf]
  %v5238 = vld [vmem:[%s11 + $0x1c] sm:$0xf]
  %v5239 = vld [vmem:[%s11 + $0x20] sm:$0xf]
  %v5240 = vld [vmem:[%s11 + $0x24] sm:$0xf]
  %v5241 = vld [vmem:[%s11 + $0x28] sm:$0xf]
  %v5242 = vld [vmem:[%s11 + $0x2c] sm:$0xf]
  %v5243 = vld [vmem:[%s11 + $0x30] sm:$0xf]
  %v5244 = vld [vmem:[%s11 + $0x34] sm:$0xf]
  %v5245 = vld [vmem:[%s11 + $0x38] sm:$0xf]
  %v5246 = vld [vmem:[%s11 + $0x3c] sm:$0xf]
  %v5247 = vld [vmem:[%s12] sm:$0x1]
  %v5249 = vlaneseq
  %v5250 = vshrl.u32 %v5249, 7
  %v5251 = vsub.s32 0, %v5250
  %v5252 = vrot.slane %v5247, %v5251
  %v5270 = vunpack.c.l.b16 %v5231
  %v5271 = vunpack.c.l.b16 %v5232
  %v5272 = vunpack.c.l.b16 %v5233
  %v5273 = vunpack.c.l.b16 %v5234
  %v5274 = vunpack.c.l.b16 %v5235
  %v5275 = vunpack.c.l.b16 %v5236
  %v5276 = vunpack.c.l.b16 %v5237
  %v5277 = vunpack.c.l.b16 %v5238
  %v5278 = vunpack.c.l.b16 %v5239
  %v5279 = vunpack.c.l.b16 %v5240
  %v5280 = vunpack.c.l.b16 %v5241
  %v5281 = vunpack.c.l.b16 %v5242
  %v5282 = vunpack.c.l.b16 %v5243
  %v5283 = vunpack.c.l.b16 %v5244
  %v5284 = vunpack.c.l.b16 %v5245
  %v5285 = vunpack.c.l.b16 %v5246
  %v5286 = vpack.c.b16 %v5271, %v5270
  %v5287 = vpack.c.b16 %v5273, %v5272
  %v5288 = vpack.c.b16 %v5275, %v5274
  %v5289 = vpack.c.b16 %v5277, %v5276
  %v5290 = vpack.c.b16 %v5279, %v5278
  %v5291 = vpack.c.b16 %v5281, %v5280
  %v5292 = vpack.c.b16 %v5283, %v5282
  %v5293 = vpack.c.b16 %v5285, %v5284
  %5302 = vmatprep.subr.bf16.mxu0 0
  %5303 = vmatpush1.bf16.msra.mxu0 %v5286
  %5304 = vmatprep.subr.bf16.mxu0 0
  %5305 = vmatpush1.bf16.msra.mxu0 %v5287
  %5306 = vmatprep.subr.bf16.mxu0 0
  %5307 = vmatpush1.bf16.msra.mxu0 %v5288
  %5308 = vmatprep.subr.bf16.mxu0 0
  %5309 = vmatpush1.bf16.msra.mxu0 %v5289
  %5310 = vmatprep.subr.bf16.mxu0 0
  %5311 = vmatpush1.bf16.msra.mxu0 %v5290
  %5312 = vmatprep.subr.bf16.mxu0 0
  %5313 = vmatpush1.bf16.msra.mxu0 %v5291
  %5314 = vmatprep.subr.bf16.mxu0 0
  %5315 = vmatpush1.bf16.msra.mxu0 %v5292
  %5316 = vmatprep.subr.bf16.mxu0 0
  %5317 = vmatpush1.bf16.msra.mxu0 %v5293
  %5318 = vmatprep.subr.bf16.mxu0 0
  %5319 = vmatpush1.bf16.msra.mxu0 0
  %5320 = vmatprep.subr.bf16.mxu0 0
  %5321 = vmatpush1.bf16.msra.mxu0 0
  %5322 = vmatprep.subr.bf16.mxu0 0
  %5323 = vmatpush1.bf16.msra.mxu0 0
  %5324 = vmatprep.subr.bf16.mxu0 0
  %5325 = vmatpush1.bf16.msra.mxu0 0
  %5326 = vmatprep.subr.bf16.mxu0 0
  %5327 = vmatpush1.bf16.msra.mxu0 0
  %5328 = vmatprep.subr.bf16.mxu0 0
  %5329 = vmatpush1.bf16.msra.mxu0 0
  %5330 = vmatprep.subr.bf16.mxu0 0
  %5331 = vmatpush1.bf16.msra.mxu0 0
  %5332 = vmatprep.subr.bf16.mxu0 0
  %5333 = vmatpush1.bf16.msra.mxu0 0
  %5334 = vmatprep.mubr.bf16.mxu0 0
  %5335 = vmatmul.mubr.bf16.gmra.mrb[0].mxu0 %v5230
  %v5336 = vpop.f32.mrb[0].mxu0
  %v5337 = vadd.f32 %v5252, %v5336
  %v5338 = vpop.f32.mrb[0].mxu0
  %v5339 = vpop.f32.mrb[0].mxu0
  %v5340 = vpop.f32.mrb[0].mxu0
  %5341 = vdwg.mxu0
  %v5342 = vmul.f32 %v5337, %v5337
  %vm5343 = vcmask 404480
  %v5344 = vsel %vm5343, %v5342, 0.0
  %5345 = vadd.xlane.f32.xlu0 %v5344
  %v5346 = vpop.xlane.xlu0 %5345
  %v5347 = vmax.f32 %v5346, 1e-24
  %v5348 = vrsqrt.pop %v5347
  %v5349 = vmul.f32 %v5337, %v5348
  %vm5350 = vcmask 408576
  %v5352 = vsel %vm5350, %v5349, 0
  %5354 = vmatprep.subr.mxu0 0.0
  %5355 = vmatpush1.xpose.msra.mxu0 %v5352
  %5356 = vmatprep.subr.mxu0 0.0
  %5357 = vmatpush1.xpose.msra.mxu0 0.0
  %5358 = vmatprep.subr.mxu0 0.0
  %5359 = vmatpush1.xpose.msra.mxu0 0.0
  %5360 = vmatprep.subr.mxu0 0.0
  %5361 = vmatpush1.xpose.msra.mxu0 0.0
  %5362 = vmatprep.subr.mxu0 0.0
  %5363 = vmatpush1.xpose.msra.mxu0 0.0
  %5364 = vmatprep.subr.mxu0 0.0
  %5365 = vmatpush1.xpose.msra.mxu0 0.0
  %5366 = vmatprep.subr.mxu0 0.0
  %5367 = vmatpush1.xpose.msra.mxu0 0.0
  %5368 = vmatprep.subr.mxu0 0.0
  %5369 = vmatpush1.xpose.msra.mxu0 0.0
  %5370 = vmatprep.subr.mxu0 0.0
  %5371 = vmatpush1.xpose.msra.mxu0 0.0
  %5372 = vmatprep.subr.mxu0 0.0
  %5373 = vmatpush1.xpose.msra.mxu0 0.0
  %5374 = vmatprep.subr.mxu0 0.0
  %5375 = vmatpush1.xpose.msra.mxu0 0.0
  %5376 = vmatprep.subr.mxu0 0.0
  %5377 = vmatpush1.xpose.msra.mxu0 0.0
  %5378 = vmatprep.subr.mxu0 0.0
  %5379 = vmatpush1.xpose.msra.mxu0 0.0
  %5380 = vmatprep.subr.mxu0 0.0
  %5381 = vmatpush1.xpose.msra.mxu0 0.0
  %5382 = vmatprep.subr.mxu0 0.0
  %5383 = vmatpush1.xpose.msra.mxu0 0.0
  %5384 = vmatprep.subr.mxu0 0.0
  %5385 = vmatpush1.xpose.msra.mxu0 0.0
  %5386 = vmatprep.subr.mxu0 0.0
  %5387 = vmatpush1.xpose.msra.mxu0 0.0
  %5388 = vmatprep.subr.mxu0 0.0
  %5389 = vmatpush1.xpose.msra.mxu0 0.0
  %5390 = vmatprep.subr.mxu0 0.0
  %5391 = vmatpush1.xpose.msra.mxu0 0.0
  %5392 = vmatprep.subr.mxu0 0.0
  %5393 = vmatpush1.xpose.msra.mxu0 0.0
  %5394 = vmatprep.subr.mxu0 0.0
  %5395 = vmatpush1.xpose.msra.mxu0 0.0
  %5396 = vmatprep.subr.mxu0 0.0
  %5397 = vmatpush1.xpose.msra.mxu0 0.0
  %5398 = vmatprep.subr.mxu0 0.0
  %5399 = vmatpush1.xpose.msra.mxu0 0.0
  %5400 = vmatprep.subr.mxu0 0.0
  %5401 = vmatpush1.xpose.msra.mxu0 0.0
  %5402 = vmatprep.subr.mxu0 0.0
  %5403 = vmatpush1.xpose.msra.mxu0 0.0
  %5404 = vmatprep.subr.mxu0 0.0
  %5405 = vmatpush1.xpose.msra.mxu0 0.0
  %5406 = vmatprep.subr.mxu0 0.0
  %5407 = vmatpush1.xpose.msra.mxu0 0.0
  %5408 = vmatprep.subr.mxu0 0.0
  %5409 = vmatpush1.xpose.msra.mxu0 0.0
  %5410 = vmatprep.subr.mxu0 0.0
  %5411 = vmatpush1.xpose.msra.mxu0 0.0
  %5412 = vmatprep.subr.mxu0 0.0
  %5413 = vmatpush1.xpose.msra.mxu0 0.0
  %5414 = vmatprep.subr.mxu0 0.0
  %5415 = vmatpush1.xpose.msra.mxu0 0.0
  %5416 = vmatprep.subr.mxu0 0.0
  %5417 = vmatpush1.xpose.msra.mxu0 0.0
  %5418 = vmatprep.mubr.f32.mxu0 0.0
  %5419 = vmatmul.mubr.f32.gmra.mrb[0].mxu0 %v5352
  %v5420 = vpop.f32.mrb[0].mxu0
  %v5421 = vadd.f32 0.0, %v5420
  %v5422 = vpop.f32.mrb[0].mxu0
  %5423 = vdwg.mxu0
  %v5424 = vlaneseq
  %v5425 = vshrl.u32 %v5424, 7
  %v5426 = vlaneseq
  %v5427 = vand.u32 %v5426, 127
  %vm5428 = vcmp.eq.s32.totalorder %v5425, %v5427
  %v5429 = vsel %vm5428, 1e+09, 0.0
  %v5430 = vmul.f32 %v5421, 10.0
  %5432 = vrot.lane.b32.xlu0 %v5430, 126
  %v5433 = vpop.permute.xlu0 %5432
  %vm5435 = vcmask 9216
  %5436 = vst.msk [vmem:[%s13] sm:$0x3] %vm5435, %v5433
  %v5437 = vsub.f32 %v5421, %v5429
  %v5438 = vmul.f32 %v5437, 10.0
  %s5439 = scalar_lea.vmem %s13, 2
  %5440 = vst.msk [vmem:[%s5439] sm:$0x3] %vm5435, %v5438
  %v5442 = vrot.slane %v5429, 6
  %5443 = vrot.lane.b32.xlu0 %v5442, 2
  %v5444 = vpop.permute.xlu0 %5443
  %v5446 = vsub.f32 %v5421, %v5444
  %v5447 = vmul.f32 %v5446, 10.0
  %5449 = vrot.lane.b32.xlu0 %v5447, 126
  %v5450 = vpop.permute.xlu0 %5449
  %s5452 = scalar_lea.vmem %s13, 4
  %vm5453 = vcmask 11266
  %5454 = vst.msk [vmem:[%s5452 - $0x2] sm:$0xc] %vm5453, %v5450
  // Predicated region
  $region54: #{simclr_forward.1} parent=0 // pred_check
    _
  $region55: #{simclr_forward.1} parent=0 // pred_check_branch
    %5456 = sbr.rel (0) target = $region57
  $region56: #{simclr_forward.1} parent=0 // pred_region
    _
  $region57: #{simclr_forward.1} parent=0 // pred_fallthru
    _
  // Predicated region
  $region58: #{simclr_forward.1} parent=0 // pred_check
    _
  $region59: #{simclr_forward.1} parent=0 // pred_check_branch
    %5458 = sbr.rel (0) target = $region61
  $region60: #{simclr_forward.1} parent=0 // pred_region
    _
  $region61: #{simclr_forward.1} parent=0 // pred_fallthru
    _

</llo_original>
